<compile_context>
chip_gen: v6e
topology: v6e:2x2x1
jax: 0.10.0
libtpu: 0.0.40
codegen_flags: <defaults>
</compile_context>

<pallas_src>
import functools

import jax
import jax.numpy as jnp
from jax import lax
from jax.experimental import pallas as pl
from jax.experimental.pallas import tpu as pltpu


def _dot_nt(a, b):
    """(M, K) x (N, K) -> (M, N) f32 MXU matmul (contract last dims of both)."""
    return lax.dot_general(a, b, (((1,), (1,)), ((), ())),
                           preferred_element_type=jnp.float32)


# ----------------------------------------------------------------------------
# Fused Inception1 kernel (one image per grid step)
# ----------------------------------------------------------------------------
def _inception1_kernel(x_ref,                          # (1, H*W, Cin) pixel-major
                       wred_ref, sred_ref, bred_ref,   # merged b2a|b3a 1x1
                       w1_ref, s1_ref, b1_ref,         # branch1 1x1
                       w2_ref, s2_ref, b2_ref,         # branch2 3x3
                       w3_ref, s3_ref, b3_ref,         # branch3 3x3
                       w4_ref, s4_ref, b4_ref,         # branch4 1x1 (post pool)
                       o_ref,                          # (1, Ctot, H*W)
                       pad2_ref, pad3_ref, padx_ref,   # VMEM halo scratch
                       *, H, W):
    HW = H * W
    x = x_ref[0]                        # (HW, Cin)
    cin = x.shape[-1]
    ch1x1 = w1_ref.shape[0]
    ch3x3 = w2_ref.shape[1]
    ch5x5 = w3_ref.shape[1]
    c2r = pad2_ref.shape[-1]
    c3r = pad3_ref.shape[-1]

    # ---- branch1: 1x1 conv + BN + ReLU, channel-major (lane-dense) result ----
    y1 = jnp.maximum(_dot_nt(w1_ref[...], x) * s1_ref[...] + b1_ref[...], 0.0)
    o_ref[0, 0:ch1x1, :] = y1

    # ---- merged 1x1 "reduce" convs of branch2 / branch3 (pixel-major) ----
    yred = jnp.dot(x, wred_ref[...], preferred_element_type=jnp.float32)
    yred = jnp.maximum(yred * sred_ref[...] + bred_ref[...], 0.0)  # (HW, c2r+c3r)

    def conv3x3_bn_relu(y_pm, pad_ref, w_ref, s_ref, b_ref):
        # y_pm: (HW, c) pixel-major; returns (Cout, HW) channel-major.
        c = pad_ref.shape[-1]
        cout = w_ref.shape[1]
        pad_ref[...] = jnp.zeros_like(pad_ref)               # zero halo in VMEM
        pad_ref[1:H + 1, 1:W + 1, :] = y_pm.reshape(H, W, c)
        acc = jnp.zeros((cout, HW), jnp.float32)
        for dy in range(3):
            for dx in range(3):
                tap = pad_ref[dy:dy + H, dx:dx + W, :].reshape(HW, c)
                acc = acc + _dot_nt(w_ref[dy * 3 + dx], tap)
        return jnp.maximum(acc * s_ref[...] + b_ref[...], 0.0)

    y2 = conv3x3_bn_relu(yred[:, 0:c2r], pad2_ref, w2_ref, s2_ref, b2_ref)
    o_ref[0, ch1x1:ch1x1 + ch3x3, :] = y2

    y3 = conv3x3_bn_relu(yred[:, c2r:c2r + c3r], pad3_ref, w3_ref, s3_ref,
                         b3_ref)
    o_ref[0, ch1x1 + ch3x3:ch1x1 + ch3x3 + ch5x5, :] = y3

    # ---- branch4: 3x3 maxpool (stride 1, pad 1) fused with its 1x1 conv ----
    padx_ref[...] = jnp.full(padx_ref.shape, -jnp.inf, padx_ref.dtype)
    x3d = x.reshape(H, W, cin)
    padx_ref[1:H + 1, 1:W + 1, :] = x3d
    m = x3d
    for dy in range(3):
        for dx in range(3):
            if dy == 1 and dx == 1:
                continue
            m = jnp.maximum(m, padx_ref[dy:dy + H, dx:dx + W, :])
    y4 = _dot_nt(w4_ref[...], m.reshape(HW, cin))
    y4 = jnp.maximum(y4 * s4_ref[...] + b4_ref[...], 0.0)
    o_ref[0, ch1x1 + ch3x3 + ch5x5:, :] = y4


# ----------------------------------------------------------------------------
# Wrapper: NCHW in -> NCHW out, single pallas_call
# ----------------------------------------------------------------------------
def _const_spec(shape):
    nd = len(shape)

    def idx(n):
        return (0,) * nd

    return pl.BlockSpec(shape, idx)


@jax.jit
def inception1_forward(params, x_nchw):
    n, cin, h, w = x_nchw.shape
    hw = h * w
    # pixel-major input: (N, H*W, Cin)
    x_pm = jnp.transpose(x_nchw, (0, 2, 3, 1)).reshape(n, hw, cin)

    def w1x1(p):        # HWIO (1,1,ci,co) -> (ci, co)
        return p["w"].reshape(p["w"].shape[2], p["w"].shape[3])

    # branch1 / branch4: channel-major weights (co, ci), scale/bias (co, 1)
    w1 = w1x1(params["b1"]).T
    s1 = params["b1"]["scale"][:, None]
    b1 = params["b1"]["bias"][:, None]
    w4 = w1x1(params["b4"]).T
    s4 = params["b4"]["scale"][:, None]
    b4 = params["b4"]["bias"][:, None]

    # merged branch2/branch3 reduce convs: (ci, c2r+c3r), scale/bias (1, .)
    wred = jnp.concatenate([w1x1(params["b2a"]), w1x1(params["b3a"])], axis=1)
    sred = jnp.concatenate([params["b2a"]["scale"],
                            params["b3a"]["scale"]])[None, :]
    bred = jnp.concatenate([params["b2a"]["bias"],
                            params["b3a"]["bias"]])[None, :]

    def w3x3(p):        # HWIO (3,3,ci,co) -> (9, co, ci)
        kh, kw, ci, co = p["w"].shape
        return jnp.transpose(p["w"], (0, 1, 3, 2)).reshape(kh * kw, co, ci)

    w2 = w3x3(params["b2b"])
    s2 = params["b2b"]["scale"][:, None]
    b2 = params["b2b"]["bias"][:, None]
    w3 = w3x3(params["b3b"])
    s3 = params["b3b"]["scale"][:, None]
    b3 = params["b3b"]["bias"][:, None]

    ch1x1, ch3x3, ch5x5 = w1.shape[0], w2.shape[1], w3.shape[1]
    pool_proj = w4.shape[0]
    c2r, c3r = w2.shape[2], w3.shape[2]
    ctot = ch1x1 + ch3x3 + ch5x5 + pool_proj

    kernel = functools.partial(_inception1_kernel, H=h, W=w)
    args = (x_pm, wred, sred, bred, w1, s1, b1, w2, s2, b2, w3, s3, b3,
            w4, s4, b4)
    in_specs = ([pl.BlockSpec((1, hw, cin), lambda i: (i, 0, 0))] +
                [_const_spec(a.shape) for a in args[1:]])

    out = pl.pallas_call(
        kernel,
        out_shape=jax.ShapeDtypeStruct((n, ctot, hw), jnp.float32),
        grid=(n,),
        in_specs=in_specs,
        out_specs=pl.BlockSpec((1, ctot, hw), lambda i: (i, 0, 0)),
        scratch_shapes=[
            pltpu.VMEM((h + 2, w + 2, c2r), jnp.float32),
            pltpu.VMEM((h + 2, w + 2, c3r), jnp.float32),
            pltpu.VMEM((h + 2, w + 2, cin), jnp.float32),
        ],
        compiler_params=pltpu.CompilerParams(
            dimension_semantics=("parallel",)),
    )(*args)

    # (N, Ctot, H*W) -> (N, Ctot, H, W): pure reshape, already NCHW order.
    return out.reshape(n, ctot, h, w)


# ----------------------------------------------------------------------------
# Parameter construction (deterministic, synthetic)
# ----------------------------------------------------------------------------
def make_basic_conv_params(key, cin, cout, ksize):
    k1, k2, k3, k4, k5 = jax.random.split(key, 5)
    w = 0.1 * jax.random.normal(k1, (ksize, ksize, cin, cout), jnp.float32)  # HWIO
    gamma = 1.0 + 0.1 * jax.random.normal(k2, (cout,), jnp.float32)
    beta = 0.1 * jax.random.normal(k3, (cout,), jnp.float32)
    mean = 0.1 * jax.random.normal(k4, (cout,), jnp.float32)
    var = jnp.abs(jax.random.normal(k5, (cout,), jnp.float32)) + 0.5
    eps = 0.001
    scale = gamma / jnp.sqrt(var + eps)
    bias = beta - mean * scale
    return dict(w=w, scale=scale, bias=bias)


def init_inception1(key, in_channels, ch1x1, ch3x3red, ch3x3,
                    ch5x5red, ch5x5, pool_proj):
    keys = jax.random.split(key, 6)
    return dict(
        b1=make_basic_conv_params(keys[0], in_channels, ch1x1, 1),
        b2a=make_basic_conv_params(keys[1], in_channels, ch3x3red, 1),
        b2b=make_basic_conv_params(keys[2], ch3x3red, ch3x3, 3),
        b3a=make_basic_conv_params(keys[3], in_channels, ch5x5red, 1),
        # NOTE: this GoogLeNet variant uses a 3x3 conv (padding=1) in branch3.
        b3b=make_basic_conv_params(keys[4], ch5x5red, ch5x5, 3),
        b4=make_basic_conv_params(keys[5], in_channels, pool_proj, 1),
    )


# ----------------------------------------------------------------------------
# Pure-JAX reference (for correctness check)
# ----------------------------------------------------------------------------
def _ref_basic_conv(p, x_nhwc, pad):
    y = lax.conv_general_dilated(
        x_nhwc, p["w"], window_strides=(1, 1),
        padding=[(pad, pad), (pad, pad)],
        dimension_numbers=("NHWC", "HWIO", "NHWC"))
    y = y * p["scale"].reshape(1, 1, 1, -1) + p["bias"].reshape(1, 1, 1, -1)
    return jnp.maximum(y, 0.0)


def inception1_reference(params, x_nchw):
    x = jnp.transpose(x_nchw, (0, 2, 3, 1))
    b1 = _ref_basic_conv(params["b1"], x, 0)
    b2 = _ref_basic_conv(params["b2b"], _ref_basic_conv(params["b2a"], x, 0), 1)
    b3 = _ref_basic_conv(params["b3b"], _ref_basic_conv(params["b3a"], x, 0), 1)
    pooled = lax.reduce_window(x, -jnp.inf, lax.max, (1, 3, 3, 1), (1, 1, 1, 1),
                               [(0, 0), (1, 1), (1, 1), (0, 0)])
    b4 = _ref_basic_conv(params["b4"], pooled, 0)
    out = jnp.concatenate([b1, b2, b3, b4], axis=-1)
    return jnp.transpose(out, (0, 3, 1, 2))


if __name__ == "__main__":
    key = jax.random.PRNGKey(0)
    k_param, k_x = jax.random.split(key)

    # Small Inception1(in_channels=4, ch1x1=8, ch3x3red=4, ch3x3=8,
    #                  ch5x5red=4, ch5x5=8, pool_proj=8)
    params = init_inception1(k_param, in_channels=4, ch1x1=8, ch3x3red=4,
                             ch3x3=8, ch5x5red=4, ch5x5=8, pool_proj=8)

    x = jax.random.normal(k_x, (2, 4, 16, 16), jnp.float32)  # NCHW

    out = inception1_forward(params, x)
    out = jax.block_until_ready(out)

    ref = inception1_reference(params, x)
    assert out.shape == (2, 32, 16, 16), out.shape
    assert jnp.allclose(out, ref, rtol=1e-4, atol=1e-4), \
        float(jnp.max(jnp.abs(out - ref)))

    print("KERNEL_OK")
</pallas_src>

<mosaic_0001>
module attributes {stable_mosaic.version = 11 : i64} {
  func.func @_inception1_kernel(%arg0: i32, %arg1: memref<1x256x4xf32, #tpu.memory_space<vmem>>, %arg2: memref<4x8xf32, #tpu.memory_space<vmem>>, %arg3: memref<1x8xf32, #tpu.memory_space<vmem>>, %arg4: memref<1x8xf32, #tpu.memory_space<vmem>>, %arg5: memref<8x4xf32, #tpu.memory_space<vmem>>, %arg6: memref<8x1xf32, #tpu.memory_space<vmem>>, %arg7: memref<8x1xf32, #tpu.memory_space<vmem>>, %arg8: memref<9x8x4xf32, #tpu.memory_space<vmem>>, %arg9: memref<8x1xf32, #tpu.memory_space<vmem>>, %arg10: memref<8x1xf32, #tpu.memory_space<vmem>>, %arg11: memref<9x8x4xf32, #tpu.memory_space<vmem>>, %arg12: memref<8x1xf32, #tpu.memory_space<vmem>>, %arg13: memref<8x1xf32, #tpu.memory_space<vmem>>, %arg14: memref<8x4xf32, #tpu.memory_space<vmem>>, %arg15: memref<8x1xf32, #tpu.memory_space<vmem>>, %arg16: memref<8x1xf32, #tpu.memory_space<vmem>>, %arg17: memref<1x32x256xf32, #tpu.memory_space<vmem>>, %arg18: memref<18x18x4xf32, #tpu.memory_space<vmem>>, %arg19: memref<18x18x4xf32, #tpu.memory_space<vmem>>, %arg20: memref<18x18x4xf32, #tpu.memory_space<vmem>>) attributes {dimension_semantics = [#tpu.dimension_semantics<parallel>], iteration_bounds = array<i64: 2>, scalar_prefetch = 0 : i64, scratch_operands = 3 : i64, tpu.core_type = #tpu.core_type<tc>, window_params = [{transform_indices = @transform_0, window_bounds = array<i64: 1, 256, 4>}, {pipeline_mode = #tpu.pipeline_mode<synchronous>, transform_indices = @transform_1, window_bounds = array<i64: 4, 8>}, {pipeline_mode = #tpu.pipeline_mode<synchronous>, transform_indices = @transform_2, window_bounds = array<i64: 1, 8>}, {pipeline_mode = #tpu.pipeline_mode<synchronous>, transform_indices = @transform_3, window_bounds = array<i64: 1, 8>}, {pipeline_mode = #tpu.pipeline_mode<synchronous>, transform_indices = @transform_4, window_bounds = array<i64: 8, 4>}, {pipeline_mode = #tpu.pipeline_mode<synchronous>, transform_indices = @transform_5, window_bounds = array<i64: 8, 1>}, {pipeline_mode = #tpu.pipeline_mode<synchronous>, transform_indices = @transform_6, window_bounds = array<i64: 8, 1>}, {pipeline_mode = #tpu.pipeline_mode<synchronous>, transform_indices = @transform_7, window_bounds = array<i64: 9, 8, 4>}, {pipeline_mode = #tpu.pipeline_mode<synchronous>, transform_indices = @transform_8, window_bounds = array<i64: 8, 1>}, {pipeline_mode = #tpu.pipeline_mode<synchronous>, transform_indices = @transform_9, window_bounds = array<i64: 8, 1>}, {pipeline_mode = #tpu.pipeline_mode<synchronous>, transform_indices = @transform_10, window_bounds = array<i64: 9, 8, 4>}, {pipeline_mode = #tpu.pipeline_mode<synchronous>, transform_indices = @transform_11, window_bounds = array<i64: 8, 1>}, {pipeline_mode = #tpu.pipeline_mode<synchronous>, transform_indices = @transform_12, window_bounds = array<i64: 8, 1>}, {pipeline_mode = #tpu.pipeline_mode<synchronous>, transform_indices = @transform_13, window_bounds = array<i64: 8, 4>}, {pipeline_mode = #tpu.pipeline_mode<synchronous>, transform_indices = @transform_14, window_bounds = array<i64: 8, 1>}, {pipeline_mode = #tpu.pipeline_mode<synchronous>, transform_indices = @transform_15, window_bounds = array<i64: 8, 1>}, {transform_indices = @transform_16, window_bounds = array<i64: 1, 32, 256>}]} {
    %c0 = arith.constant 0 : index
    %c0_0 = arith.constant 0 : index
    %c0_1 = arith.constant 0 : index
    %0 = vector.load %arg1[%c0, %c0_0, %c0_1] : memref<1x256x4xf32, #tpu.memory_space<vmem>>, vector<1x256x4xf32>
    %1 = vector.shape_cast %0 : vector<1x256x4xf32> to vector<256x4xf32>
    %c0_2 = arith.constant 0 : index
    %c0_3 = arith.constant 0 : index
    %2 = vector.load %arg5[%c0_2, %c0_3] : memref<8x4xf32, #tpu.memory_space<vmem>>, vector<8x4xf32>
    %cst = arith.constant dense<0.000000e+00> : vector<8x256xf32>
    %3 = tpu.matmul %2, %1, %cst {dimension_numbers = #tpu.dot_dimension_numbers<[1], [1], [0], [0], [0, 0, 1, 0], [], []>} : vector<8x4xf32>, vector<256x4xf32>, vector<8x256xf32> -> vector<8x256xf32>
    %c0_4 = arith.constant 0 : index
    %c0_5 = arith.constant 0 : index
    %4 = vector.load %arg6[%c0_4, %c0_5] : memref<8x1xf32, #tpu.memory_space<vmem>>, vector<8x1xf32>
    %5 = vector.broadcast %4 : vector<8x1xf32> to vector<8x256xf32>
    %6 = arith.mulf %3, %5 : vector<8x256xf32>
    %c0_6 = arith.constant 0 : index
    %c0_7 = arith.constant 0 : index
    %7 = vector.load %arg7[%c0_6, %c0_7] : memref<8x1xf32, #tpu.memory_space<vmem>>, vector<8x1xf32>
    %8 = vector.broadcast %7 : vector<8x1xf32> to vector<8x256xf32>
    %9 = arith.addf %6, %8 : vector<8x256xf32>
    %cst_8 = arith.constant 0.000000e+00 : f32
    %10 = vector.broadcast %cst_8 : f32 to vector<8x256xf32>
    %11 = arith.maximumf %9, %10 : vector<8x256xf32>
    %c0_9 = arith.constant 0 : index
    %c0_10 = arith.constant 0 : index
    %c0_11 = arith.constant 0 : index
    %12 = vector.load %arg17[%c0_9, %c0_10, %c0_11] : memref<1x32x256xf32, #tpu.memory_space<vmem>>, vector<1x8x256xf32>
    %13 = vector.shape_cast %12 : vector<1x8x256xf32> to vector<8x256xf32>
    %14 = vector.shape_cast %11 : vector<8x256xf32> to vector<1x8x256xf32>
    tpu.vector_store %arg17[%c0_9, %c0_10, %c0_11], %14 {strides = array<i32>} : memref<1x32x256xf32, #tpu.memory_space<vmem>>, vector<1x8x256xf32>,
    %c0_12 = arith.constant 0 : index
    %c0_13 = arith.constant 0 : index
    %15 = vector.load %arg2[%c0_12, %c0_13] : memref<4x8xf32, #tpu.memory_space<vmem>>, vector<4x8xf32>
    %cst_14 = arith.constant dense<0.000000e+00> : vector<256x8xf32>
    %16 = tpu.matmul %1, %15, %cst_14 {dimension_numbers = #tpu.dot_dimension_numbers<[1], [0], [0], [1], [0, 0, 1, 1], [], []>} : vector<256x4xf32>, vector<4x8xf32>, vector<256x8xf32> -> vector<256x8xf32>
    %c0_15 = arith.constant 0 : index
    %c0_16 = arith.constant 0 : index
    %17 = vector.load %arg3[%c0_15, %c0_16] : memref<1x8xf32, #tpu.memory_space<vmem>>, vector<1x8xf32>
    %18 = vector.broadcast %17 : vector<1x8xf32> to vector<256x8xf32>
    %19 = arith.mulf %16, %18 : vector<256x8xf32>
    %c0_17 = arith.constant 0 : index
    %c0_18 = arith.constant 0 : index
    %20 = vector.load %arg4[%c0_17, %c0_18] : memref<1x8xf32, #tpu.memory_space<vmem>>, vector<1x8xf32>
    %21 = vector.broadcast %20 : vector<1x8xf32> to vector<256x8xf32>
    %22 = arith.addf %19, %21 : vector<256x8xf32>
    %cst_19 = arith.constant 0.000000e+00 : f32
    %23 = vector.broadcast %cst_19 : f32 to vector<256x8xf32>
    %24 = arith.maximumf %22, %23 : vector<256x8xf32>
    %25 = vector.extract_strided_slice %24 {offsets = [0, 0], sizes = [256, 4], strides = [1, 1]} : vector<256x8xf32> to vector<256x4xf32>
    %cst_20 = arith.constant 0.000000e+00 : f32
    %26 = vector.broadcast %cst_20 : f32 to vector<18x18x4xf32>
    %c0_21 = arith.constant 0 : index
    %c0_22 = arith.constant 0 : index
    %c0_23 = arith.constant 0 : index
    %27 = vector.load %arg18[%c0_21, %c0_22, %c0_23] : memref<18x18x4xf32, #tpu.memory_space<vmem>>, vector<18x18x4xf32>
    tpu.vector_store %arg18[%c0_21, %c0_22, %c0_23], %26 {strides = array<i32>} : memref<18x18x4xf32, #tpu.memory_space<vmem>>, vector<18x18x4xf32>,
    %28 = vector.shape_cast %25 : vector<256x4xf32> to vector<16x16x4xf32>
    %c1 = arith.constant 1 : index
    %c1_24 = arith.constant 1 : index
    %c0_25 = arith.constant 0 : index
    %29 = vector.load %arg18[%c1, %c1_24, %c0_25] : memref<18x18x4xf32, #tpu.memory_space<vmem>>, vector<16x16x4xf32>
    tpu.vector_store %arg18[%c1, %c1_24, %c0_25], %28 {strides = array<i32>} : memref<18x18x4xf32, #tpu.memory_space<vmem>>, vector<16x16x4xf32>,
    %cst_26 = arith.constant 0.000000e+00 : f32
    %30 = vector.broadcast %cst_26 : f32 to vector<8x256xf32>
    %c0_27 = arith.constant 0 : index
    %c0_28 = arith.constant 0 : index
    %c0_29 = arith.constant 0 : index
    %31 = vector.load %arg18[%c0_27, %c0_28, %c0_29] : memref<18x18x4xf32, #tpu.memory_space<vmem>>, vector<16x16x4xf32>
    %32 = vector.shape_cast %31 : vector<16x16x4xf32> to vector<256x4xf32>
    %c0_30 = arith.constant 0 : index
    %c0_31 = arith.constant 0 : index
    %c0_32 = arith.constant 0 : index
    %33 = vector.load %arg8[%c0_30, %c0_31, %c0_32] : memref<9x8x4xf32, #tpu.memory_space<vmem>>, vector<1x8x4xf32>
    %34 = vector.shape_cast %33 : vector<1x8x4xf32> to vector<8x4xf32>
    %cst_33 = arith.constant dense<0.000000e+00> : vector<8x256xf32>
    %35 = tpu.matmul %34, %32, %cst_33 {dimension_numbers = #tpu.dot_dimension_numbers<[1], [1], [0], [0], [0, 0, 1, 0], [], []>} : vector<8x4xf32>, vector<256x4xf32>, vector<8x256xf32> -> vector<8x256xf32>
    %36 = arith.addf %30, %35 : vector<8x256xf32>
    %c0_34 = arith.constant 0 : index
    %c1_35 = arith.constant 1 : index
    %c0_36 = arith.constant 0 : index
    %37 = vector.load %arg18[%c0_34, %c1_35, %c0_36] : memref<18x18x4xf32, #tpu.memory_space<vmem>>, vector<16x16x4xf32>
    %38 = vector.shape_cast %37 : vector<16x16x4xf32> to vector<256x4xf32>
    %c1_37 = arith.constant 1 : index
    %c0_38 = arith.constant 0 : index
    %c0_39 = arith.constant 0 : index
    %39 = vector.load %arg8[%c1_37, %c0_38, %c0_39] : memref<9x8x4xf32, #tpu.memory_space<vmem>>, vector<1x8x4xf32>
    %40 = vector.shape_cast %39 : vector<1x8x4xf32> to vector<8x4xf32>
    %cst_40 = arith.constant dense<0.000000e+00> : vector<8x256xf32>
    %41 = tpu.matmul %40, %38, %cst_40 {dimension_numbers = #tpu.dot_dimension_numbers<[1], [1], [0], [0], [0, 0, 1, 0], [], []>} : vector<8x4xf32>, vector<256x4xf32>, vector<8x256xf32> -> vector<8x256xf32>
    %42 = arith.addf %36, %41 : vector<8x256xf32>
    %c0_41 = arith.constant 0 : index
    %c2 = arith.constant 2 : index
    %c0_42 = arith.constant 0 : index
    %43 = vector.load %arg18[%c0_41, %c2, %c0_42] : memref<18x18x4xf32, #tpu.memory_space<vmem>>, vector<16x16x4xf32>
    %44 = vector.shape_cast %43 : vector<16x16x4xf32> to vector<256x4xf32>
    %c2_43 = arith.constant 2 : index
    %c0_44 = arith.constant 0 : index
    %c0_45 = arith.constant 0 : index
    %45 = vector.load %arg8[%c2_43, %c0_44, %c0_45] : memref<9x8x4xf32, #tpu.memory_space<vmem>>, vector<1x8x4xf32>
    %46 = vector.shape_cast %45 : vector<1x8x4xf32> to vector<8x4xf32>
    %cst_46 = arith.constant dense<0.000000e+00> : vector<8x256xf32>
    %47 = tpu.matmul %46, %44, %cst_46 {dimension_numbers = #tpu.dot_dimension_numbers<[1], [1], [0], [0], [0, 0, 1, 0], [], []>} : vector<8x4xf32>, vector<256x4xf32>, vector<8x256xf32> -> vector<8x256xf32>
    %48 = arith.addf %42, %47 : vector<8x256xf32>
    %c1_47 = arith.constant 1 : index
    %c0_48 = arith.constant 0 : index
    %c0_49 = arith.constant 0 : index
    %49 = vector.load %arg18[%c1_47, %c0_48, %c0_49] : memref<18x18x4xf32, #tpu.memory_space<vmem>>, vector<16x16x4xf32>
    %50 = vector.shape_cast %49 : vector<16x16x4xf32> to vector<256x4xf32>
    %c3 = arith.constant 3 : index
    %c0_50 = arith.constant 0 : index
    %c0_51 = arith.constant 0 : index
    %51 = vector.load %arg8[%c3, %c0_50, %c0_51] : memref<9x8x4xf32, #tpu.memory_space<vmem>>, vector<1x8x4xf32>
    %52 = vector.shape_cast %51 : vector<1x8x4xf32> to vector<8x4xf32>
    %cst_52 = arith.constant dense<0.000000e+00> : vector<8x256xf32>
    %53 = tpu.matmul %52, %50, %cst_52 {dimension_numbers = #tpu.dot_dimension_numbers<[1], [1], [0], [0], [0, 0, 1, 0], [], []>} : vector<8x4xf32>, vector<256x4xf32>, vector<8x256xf32> -> vector<8x256xf32>
    %54 = arith.addf %48, %53 : vector<8x256xf32>
    %c1_53 = arith.constant 1 : index
    %c1_54 = arith.constant 1 : index
    %c0_55 = arith.constant 0 : index
    %55 = vector.load %arg18[%c1_53, %c1_54, %c0_55] : memref<18x18x4xf32, #tpu.memory_space<vmem>>, vector<16x16x4xf32>
    %56 = vector.shape_cast %55 : vector<16x16x4xf32> to vector<256x4xf32>
    %c4 = arith.constant 4 : index
    %c0_56 = arith.constant 0 : index
    %c0_57 = arith.constant 0 : index
    %57 = vector.load %arg8[%c4, %c0_56, %c0_57] : memref<9x8x4xf32, #tpu.memory_space<vmem>>, vector<1x8x4xf32>
    %58 = vector.shape_cast %57 : vector<1x8x4xf32> to vector<8x4xf32>
    %cst_58 = arith.constant dense<0.000000e+00> : vector<8x256xf32>
    %59 = tpu.matmul %58, %56, %cst_58 {dimension_numbers = #tpu.dot_dimension_numbers<[1], [1], [0], [0], [0, 0, 1, 0], [], []>} : vector<8x4xf32>, vector<256x4xf32>, vector<8x256xf32> -> vector<8x256xf32>
    %60 = arith.addf %54, %59 : vector<8x256xf32>
    %c1_59 = arith.constant 1 : index
    %c2_60 = arith.constant 2 : index
    %c0_61 = arith.constant 0 : index
    %61 = vector.load %arg18[%c1_59, %c2_60, %c0_61] : memref<18x18x4xf32, #tpu.memory_space<vmem>>, vector<16x16x4xf32>
    %62 = vector.shape_cast %61 : vector<16x16x4xf32> to vector<256x4xf32>
    %c5 = arith.constant 5 : index
    %c0_62 = arith.constant 0 : index
    %c0_63 = arith.constant 0 : index
    %63 = vector.load %arg8[%c5, %c0_62, %c0_63] : memref<9x8x4xf32, #tpu.memory_space<vmem>>, vector<1x8x4xf32>
    %64 = vector.shape_cast %63 : vector<1x8x4xf32> to vector<8x4xf32>
    %cst_64 = arith.constant dense<0.000000e+00> : vector<8x256xf32>
    %65 = tpu.matmul %64, %62, %cst_64 {dimension_numbers = #tpu.dot_dimension_numbers<[1], [1], [0], [0], [0, 0, 1, 0], [], []>} : vector<8x4xf32>, vector<256x4xf32>, vector<8x256xf32> -> vector<8x256xf32>
    %66 = arith.addf %60, %65 : vector<8x256xf32>
    %c2_65 = arith.constant 2 : index
    %c0_66 = arith.constant 0 : index
    %c0_67 = arith.constant 0 : index
    %67 = vector.load %arg18[%c2_65, %c0_66, %c0_67] : memref<18x18x4xf32, #tpu.memory_space<vmem>>, vector<16x16x4xf32>
    %68 = vector.shape_cast %67 : vector<16x16x4xf32> to vector<256x4xf32>
    %c6 = arith.constant 6 : index
    %c0_68 = arith.constant 0 : index
    %c0_69 = arith.constant 0 : index
    %69 = vector.load %arg8[%c6, %c0_68, %c0_69] : memref<9x8x4xf32, #tpu.memory_space<vmem>>, vector<1x8x4xf32>
    %70 = vector.shape_cast %69 : vector<1x8x4xf32> to vector<8x4xf32>
    %cst_70 = arith.constant dense<0.000000e+00> : vector<8x256xf32>
    %71 = tpu.matmul %70, %68, %cst_70 {dimension_numbers = #tpu.dot_dimension_numbers<[1], [1], [0], [0], [0, 0, 1, 0], [], []>} : vector<8x4xf32>, vector<256x4xf32>, vector<8x256xf32> -> vector<8x256xf32>
    %72 = arith.addf %66, %71 : vector<8x256xf32>
    %c2_71 = arith.constant 2 : index
    %c1_72 = arith.constant 1 : index
    %c0_73 = arith.constant 0 : index
    %73 = vector.load %arg18[%c2_71, %c1_72, %c0_73] : memref<18x18x4xf32, #tpu.memory_space<vmem>>, vector<16x16x4xf32>
    %74 = vector.shape_cast %73 : vector<16x16x4xf32> to vector<256x4xf32>
    %c7 = arith.constant 7 : index
    %c0_74 = arith.constant 0 : index
    %c0_75 = arith.constant 0 : index
    %75 = vector.load %arg8[%c7, %c0_74, %c0_75] : memref<9x8x4xf32, #tpu.memory_space<vmem>>, vector<1x8x4xf32>
    %76 = vector.shape_cast %75 : vector<1x8x4xf32> to vector<8x4xf32>
    %cst_76 = arith.constant dense<0.000000e+00> : vector<8x256xf32>
    %77 = tpu.matmul %76, %74, %cst_76 {dimension_numbers = #tpu.dot_dimension_numbers<[1], [1], [0], [0], [0, 0, 1, 0], [], []>} : vector<8x4xf32>, vector<256x4xf32>, vector<8x256xf32> -> vector<8x256xf32>
    %78 = arith.addf %72, %77 : vector<8x256xf32>
    %c2_77 = arith.constant 2 : index
    %c2_78 = arith.constant 2 : index
    %c0_79 = arith.constant 0 : index
    %79 = vector.load %arg18[%c2_77, %c2_78, %c0_79] : memref<18x18x4xf32, #tpu.memory_space<vmem>>, vector<16x16x4xf32>
    %80 = vector.shape_cast %79 : vector<16x16x4xf32> to vector<256x4xf32>
    %c8 = arith.constant 8 : index
    %c0_80 = arith.constant 0 : index
    %c0_81 = arith.constant 0 : index
    %81 = vector.load %arg8[%c8, %c0_80, %c0_81] : memref<9x8x4xf32, #tpu.memory_space<vmem>>, vector<1x8x4xf32>
    %82 = vector.shape_cast %81 : vector<1x8x4xf32> to vector<8x4xf32>
    %cst_82 = arith.constant dense<0.000000e+00> : vector<8x256xf32>
    %83 = tpu.matmul %82, %80, %cst_82 {dimension_numbers = #tpu.dot_dimension_numbers<[1], [1], [0], [0], [0, 0, 1, 0], [], []>} : vector<8x4xf32>, vector<256x4xf32>, vector<8x256xf32> -> vector<8x256xf32>
    %84 = arith.addf %78, %83 : vector<8x256xf32>
    %c0_83 = arith.constant 0 : index
    %c0_84 = arith.constant 0 : index
    %85 = vector.load %arg9[%c0_83, %c0_84] : memref<8x1xf32, #tpu.memory_space<vmem>>, vector<8x1xf32>
    %86 = vector.broadcast %85 : vector<8x1xf32> to vector<8x256xf32>
    %87 = arith.mulf %84, %86 : vector<8x256xf32>
    %c0_85 = arith.constant 0 : index
    %c0_86 = arith.constant 0 : index
    %88 = vector.load %arg10[%c0_85, %c0_86] : memref<8x1xf32, #tpu.memory_space<vmem>>, vector<8x1xf32>
    %89 = vector.broadcast %88 : vector<8x1xf32> to vector<8x256xf32>
    %90 = arith.addf %87, %89 : vector<8x256xf32>
    %cst_87 = arith.constant 0.000000e+00 : f32
    %91 = vector.broadcast %cst_87 : f32 to vector<8x256xf32>
    %92 = arith.maximumf %90, %91 : vector<8x256xf32>
    %c0_88 = arith.constant 0 : index
    %c8_89 = arith.constant 8 : index
    %c0_90 = arith.constant 0 : index
    %93 = vector.load %arg17[%c0_88, %c8_89, %c0_90] : memref<1x32x256xf32, #tpu.memory_space<vmem>>, vector<1x8x256xf32>
    %94 = vector.shape_cast %93 : vector<1x8x256xf32> to vector<8x256xf32>
    %95 = vector.shape_cast %92 : vector<8x256xf32> to vector<1x8x256xf32>
    tpu.vector_store %arg17[%c0_88, %c8_89, %c0_90], %95 {strides = array<i32>} : memref<1x32x256xf32, #tpu.memory_space<vmem>>, vector<1x8x256xf32>,
    %96 = vector.extract_strided_slice %24 {offsets = [0, 4], sizes = [256, 4], strides = [1, 1]} : vector<256x8xf32> to vector<256x4xf32>
    %cst_91 = arith.constant 0.000000e+00 : f32
    %97 = vector.broadcast %cst_91 : f32 to vector<18x18x4xf32>
    %c0_92 = arith.constant 0 : index
    %c0_93 = arith.constant 0 : index
    %c0_94 = arith.constant 0 : index
    %98 = vector.load %arg19[%c0_92, %c0_93, %c0_94] : memref<18x18x4xf32, #tpu.memory_space<vmem>>, vector<18x18x4xf32>
    tpu.vector_store %arg19[%c0_92, %c0_93, %c0_94], %97 {strides = array<i32>} : memref<18x18x4xf32, #tpu.memory_space<vmem>>, vector<18x18x4xf32>,
    %99 = vector.shape_cast %96 : vector<256x4xf32> to vector<16x16x4xf32>
    %c1_95 = arith.constant 1 : index
    %c1_96 = arith.constant 1 : index
    %c0_97 = arith.constant 0 : index
    %100 = vector.load %arg19[%c1_95, %c1_96, %c0_97] : memref<18x18x4xf32, #tpu.memory_space<vmem>>, vector<16x16x4xf32>
    tpu.vector_store %arg19[%c1_95, %c1_96, %c0_97], %99 {strides = array<i32>} : memref<18x18x4xf32, #tpu.memory_space<vmem>>, vector<16x16x4xf32>,
    %cst_98 = arith.constant 0.000000e+00 : f32
    %101 = vector.broadcast %cst_98 : f32 to vector<8x256xf32>
    %c0_99 = arith.constant 0 : index
    %c0_100 = arith.constant 0 : index
    %c0_101 = arith.constant 0 : index
    %102 = vector.load %arg19[%c0_99, %c0_100, %c0_101] : memref<18x18x4xf32, #tpu.memory_space<vmem>>, vector<16x16x4xf32>
    %103 = vector.shape_cast %102 : vector<16x16x4xf32> to vector<256x4xf32>
    %c0_102 = arith.constant 0 : index
    %c0_103 = arith.constant 0 : index
    %c0_104 = arith.constant 0 : index
    %104 = vector.load %arg11[%c0_102, %c0_103, %c0_104] : memref<9x8x4xf32, #tpu.memory_space<vmem>>, vector<1x8x4xf32>
    %105 = vector.shape_cast %104 : vector<1x8x4xf32> to vector<8x4xf32>
    %cst_105 = arith.constant dense<0.000000e+00> : vector<8x256xf32>
    %106 = tpu.matmul %105, %103, %cst_105 {dimension_numbers = #tpu.dot_dimension_numbers<[1], [1], [0], [0], [0, 0, 1, 0], [], []>} : vector<8x4xf32>, vector<256x4xf32>, vector<8x256xf32> -> vector<8x256xf32>
    %107 = arith.addf %101, %106 : vector<8x256xf32>
    %c0_106 = arith.constant 0 : index
    %c1_107 = arith.constant 1 : index
    %c0_108 = arith.constant 0 : index
    %108 = vector.load %arg19[%c0_106, %c1_107, %c0_108] : memref<18x18x4xf32, #tpu.memory_space<vmem>>, vector<16x16x4xf32>
    %109 = vector.shape_cast %108 : vector<16x16x4xf32> to vector<256x4xf32>
    %c1_109 = arith.constant 1 : index
    %c0_110 = arith.constant 0 : index
    %c0_111 = arith.constant 0 : index
    %110 = vector.load %arg11[%c1_109, %c0_110, %c0_111] : memref<9x8x4xf32, #tpu.memory_space<vmem>>, vector<1x8x4xf32>
    %111 = vector.shape_cast %110 : vector<1x8x4xf32> to vector<8x4xf32>
    %cst_112 = arith.constant dense<0.000000e+00> : vector<8x256xf32>
    %112 = tpu.matmul %111, %109, %cst_112 {dimension_numbers = #tpu.dot_dimension_numbers<[1], [1], [0], [0], [0, 0, 1, 0], [], []>} : vector<8x4xf32>, vector<256x4xf32>, vector<8x256xf32> -> vector<8x256xf32>
    %113 = arith.addf %107, %112 : vector<8x256xf32>
    %c0_113 = arith.constant 0 : index
    %c2_114 = arith.constant 2 : index
    %c0_115 = arith.constant 0 : index
    %114 = vector.load %arg19[%c0_113, %c2_114, %c0_115] : memref<18x18x4xf32, #tpu.memory_space<vmem>>, vector<16x16x4xf32>
    %115 = vector.shape_cast %114 : vector<16x16x4xf32> to vector<256x4xf32>
    %c2_116 = arith.constant 2 : index
    %c0_117 = arith.constant 0 : index
    %c0_118 = arith.constant 0 : index
    %116 = vector.load %arg11[%c2_116, %c0_117, %c0_118] : memref<9x8x4xf32, #tpu.memory_space<vmem>>, vector<1x8x4xf32>
    %117 = vector.shape_cast %116 : vector<1x8x4xf32> to vector<8x4xf32>
    %cst_119 = arith.constant dense<0.000000e+00> : vector<8x256xf32>
    %118 = tpu.matmul %117, %115, %cst_119 {dimension_numbers = #tpu.dot_dimension_numbers<[1], [1], [0], [0], [0, 0, 1, 0], [], []>} : vector<8x4xf32>, vector<256x4xf32>, vector<8x256xf32> -> vector<8x256xf32>
    %119 = arith.addf %113, %118 : vector<8x256xf32>
    %c1_120 = arith.constant 1 : index
    %c0_121 = arith.constant 0 : index
    %c0_122 = arith.constant 0 : index
    %120 = vector.load %arg19[%c1_120, %c0_121, %c0_122] : memref<18x18x4xf32, #tpu.memory_space<vmem>>, vector<16x16x4xf32>
    %121 = vector.shape_cast %120 : vector<16x16x4xf32> to vector<256x4xf32>
    %c3_123 = arith.constant 3 : index
    %c0_124 = arith.constant 0 : index
    %c0_125 = arith.constant 0 : index
    %122 = vector.load %arg11[%c3_123, %c0_124, %c0_125] : memref<9x8x4xf32, #tpu.memory_space<vmem>>, vector<1x8x4xf32>
    %123 = vector.shape_cast %122 : vector<1x8x4xf32> to vector<8x4xf32>
    %cst_126 = arith.constant dense<0.000000e+00> : vector<8x256xf32>
    %124 = tpu.matmul %123, %121, %cst_126 {dimension_numbers = #tpu.dot_dimension_numbers<[1], [1], [0], [0], [0, 0, 1, 0], [], []>} : vector<8x4xf32>, vector<256x4xf32>, vector<8x256xf32> -> vector<8x256xf32>
    %125 = arith.addf %119, %124 : vector<8x256xf32>
    %c1_127 = arith.constant 1 : index
    %c1_128 = arith.constant 1 : index
    %c0_129 = arith.constant 0 : index
    %126 = vector.load %arg19[%c1_127, %c1_128, %c0_129] : memref<18x18x4xf32, #tpu.memory_space<vmem>>, vector<16x16x4xf32>
    %127 = vector.shape_cast %126 : vector<16x16x4xf32> to vector<256x4xf32>
    %c4_130 = arith.constant 4 : index
    %c0_131 = arith.constant 0 : index
    %c0_132 = arith.constant 0 : index
    %128 = vector.load %arg11[%c4_130, %c0_131, %c0_132] : memref<9x8x4xf32, #tpu.memory_space<vmem>>, vector<1x8x4xf32>
    %129 = vector.shape_cast %128 : vector<1x8x4xf32> to vector<8x4xf32>
    %cst_133 = arith.constant dense<0.000000e+00> : vector<8x256xf32>
    %130 = tpu.matmul %129, %127, %cst_133 {dimension_numbers = #tpu.dot_dimension_numbers<[1], [1], [0], [0], [0, 0, 1, 0], [], []>} : vector<8x4xf32>, vector<256x4xf32>, vector<8x256xf32> -> vector<8x256xf32>
    %131 = arith.addf %125, %130 : vector<8x256xf32>
    %c1_134 = arith.constant 1 : index
    %c2_135 = arith.constant 2 : index
    %c0_136 = arith.constant 0 : index
    %132 = vector.load %arg19[%c1_134, %c2_135, %c0_136] : memref<18x18x4xf32, #tpu.memory_space<vmem>>, vector<16x16x4xf32>
    %133 = vector.shape_cast %132 : vector<16x16x4xf32> to vector<256x4xf32>
    %c5_137 = arith.constant 5 : index
    %c0_138 = arith.constant 0 : index
    %c0_139 = arith.constant 0 : index
    %134 = vector.load %arg11[%c5_137, %c0_138, %c0_139] : memref<9x8x4xf32, #tpu.memory_space<vmem>>, vector<1x8x4xf32>
    %135 = vector.shape_cast %134 : vector<1x8x4xf32> to vector<8x4xf32>
    %cst_140 = arith.constant dense<0.000000e+00> : vector<8x256xf32>
    %136 = tpu.matmul %135, %133, %cst_140 {dimension_numbers = #tpu.dot_dimension_numbers<[1], [1], [0], [0], [0, 0, 1, 0], [], []>} : vector<8x4xf32>, vector<256x4xf32>, vector<8x256xf32> -> vector<8x256xf32>
    %137 = arith.addf %131, %136 : vector<8x256xf32>
    %c2_141 = arith.constant 2 : index
    %c0_142 = arith.constant 0 : index
    %c0_143 = arith.constant 0 : index
    %138 = vector.load %arg19[%c2_141, %c0_142, %c0_143] : memref<18x18x4xf32, #tpu.memory_space<vmem>>, vector<16x16x4xf32>
    %139 = vector.shape_cast %138 : vector<16x16x4xf32> to vector<256x4xf32>
    %c6_144 = arith.constant 6 : index
    %c0_145 = arith.constant 0 : index
    %c0_146 = arith.constant 0 : index
    %140 = vector.load %arg11[%c6_144, %c0_145, %c0_146] : memref<9x8x4xf32, #tpu.memory_space<vmem>>, vector<1x8x4xf32>
    %141 = vector.shape_cast %140 : vector<1x8x4xf32> to vector<8x4xf32>
    %cst_147 = arith.constant dense<0.000000e+00> : vector<8x256xf32>
    %142 = tpu.matmul %141, %139, %cst_147 {dimension_numbers = #tpu.dot_dimension_numbers<[1], [1], [0], [0], [0, 0, 1, 0], [], []>} : vector<8x4xf32>, vector<256x4xf32>, vector<8x256xf32> -> vector<8x256xf32>
    %143 = arith.addf %137, %142 : vector<8x256xf32>
    %c2_148 = arith.constant 2 : index
    %c1_149 = arith.constant 1 : index
    %c0_150 = arith.constant 0 : index
    %144 = vector.load %arg19[%c2_148, %c1_149, %c0_150] : memref<18x18x4xf32, #tpu.memory_space<vmem>>, vector<16x16x4xf32>
    %145 = vector.shape_cast %144 : vector<16x16x4xf32> to vector<256x4xf32>
    %c7_151 = arith.constant 7 : index
    %c0_152 = arith.constant 0 : index
    %c0_153 = arith.constant 0 : index
    %146 = vector.load %arg11[%c7_151, %c0_152, %c0_153] : memref<9x8x4xf32, #tpu.memory_space<vmem>>, vector<1x8x4xf32>
    %147 = vector.shape_cast %146 : vector<1x8x4xf32> to vector<8x4xf32>
    %cst_154 = arith.constant dense<0.000000e+00> : vector<8x256xf32>
    %148 = tpu.matmul %147, %145, %cst_154 {dimension_numbers = #tpu.dot_dimension_numbers<[1], [1], [0], [0], [0, 0, 1, 0], [], []>} : vector<8x4xf32>, vector<256x4xf32>, vector<8x256xf32> -> vector<8x256xf32>
    %149 = arith.addf %143, %148 : vector<8x256xf32>
    %c2_155 = arith.constant 2 : index
    %c2_156 = arith.constant 2 : index
    %c0_157 = arith.constant 0 : index
    %150 = vector.load %arg19[%c2_155, %c2_156, %c0_157] : memref<18x18x4xf32, #tpu.memory_space<vmem>>, vector<16x16x4xf32>
    %151 = vector.shape_cast %150 : vector<16x16x4xf32> to vector<256x4xf32>
    %c8_158 = arith.constant 8 : index
    %c0_159 = arith.constant 0 : index
    %c0_160 = arith.constant 0 : index
    %152 = vector.load %arg11[%c8_158, %c0_159, %c0_160] : memref<9x8x4xf32, #tpu.memory_space<vmem>>, vector<1x8x4xf32>
    %153 = vector.shape_cast %152 : vector<1x8x4xf32> to vector<8x4xf32>
    %cst_161 = arith.constant dense<0.000000e+00> : vector<8x256xf32>
    %154 = tpu.matmul %153, %151, %cst_161 {dimension_numbers = #tpu.dot_dimension_numbers<[1], [1], [0], [0], [0, 0, 1, 0], [], []>} : vector<8x4xf32>, vector<256x4xf32>, vector<8x256xf32> -> vector<8x256xf32>
    %155 = arith.addf %149, %154 : vector<8x256xf32>
    %c0_162 = arith.constant 0 : index
    %c0_163 = arith.constant 0 : index
    %156 = vector.load %arg12[%c0_162, %c0_163] : memref<8x1xf32, #tpu.memory_space<vmem>>, vector<8x1xf32>
    %157 = vector.broadcast %156 : vector<8x1xf32> to vector<8x256xf32>
    %158 = arith.mulf %155, %157 : vector<8x256xf32>
    %c0_164 = arith.constant 0 : index
    %c0_165 = arith.constant 0 : index
    %159 = vector.load %arg13[%c0_164, %c0_165] : memref<8x1xf32, #tpu.memory_space<vmem>>, vector<8x1xf32>
    %160 = vector.broadcast %159 : vector<8x1xf32> to vector<8x256xf32>
    %161 = arith.addf %158, %160 : vector<8x256xf32>
    %cst_166 = arith.constant 0.000000e+00 : f32
    %162 = vector.broadcast %cst_166 : f32 to vector<8x256xf32>
    %163 = arith.maximumf %161, %162 : vector<8x256xf32>
    %c0_167 = arith.constant 0 : index
    %c16 = arith.constant 16 : index
    %c0_168 = arith.constant 0 : index
    %164 = vector.load %arg17[%c0_167, %c16, %c0_168] : memref<1x32x256xf32, #tpu.memory_space<vmem>>, vector<1x8x256xf32>
    %165 = vector.shape_cast %164 : vector<1x8x256xf32> to vector<8x256xf32>
    %166 = vector.shape_cast %163 : vector<8x256xf32> to vector<1x8x256xf32>
    tpu.vector_store %arg17[%c0_167, %c16, %c0_168], %166 {strides = array<i32>} : memref<1x32x256xf32, #tpu.memory_space<vmem>>, vector<1x8x256xf32>,
    %cst_169 = arith.constant 0xFF800000 : f32
    %167 = vector.broadcast %cst_169 : f32 to vector<18x18x4xf32>
    %c0_170 = arith.constant 0 : index
    %c0_171 = arith.constant 0 : index
    %c0_172 = arith.constant 0 : index
    %168 = vector.load %arg20[%c0_170, %c0_171, %c0_172] : memref<18x18x4xf32, #tpu.memory_space<vmem>>, vector<18x18x4xf32>
    tpu.vector_store %arg20[%c0_170, %c0_171, %c0_172], %167 {strides = array<i32>} : memref<18x18x4xf32, #tpu.memory_space<vmem>>, vector<18x18x4xf32>,
    %169 = vector.shape_cast %1 : vector<256x4xf32> to vector<16x16x4xf32>
    %c1_173 = arith.constant 1 : index
    %c1_174 = arith.constant 1 : index
    %c0_175 = arith.constant 0 : index
    %170 = vector.load %arg20[%c1_173, %c1_174, %c0_175] : memref<18x18x4xf32, #tpu.memory_space<vmem>>, vector<16x16x4xf32>
    tpu.vector_store %arg20[%c1_173, %c1_174, %c0_175], %169 {strides = array<i32>} : memref<18x18x4xf32, #tpu.memory_space<vmem>>, vector<16x16x4xf32>,
    %c0_176 = arith.constant 0 : index
    %c0_177 = arith.constant 0 : index
    %c0_178 = arith.constant 0 : index
    %171 = vector.load %arg20[%c0_176, %c0_177, %c0_178] : memref<18x18x4xf32, #tpu.memory_space<vmem>>, vector<16x16x4xf32>
    %172 = arith.maximumf %169, %171 : vector<16x16x4xf32>
    %c0_179 = arith.constant 0 : index
    %c1_180 = arith.constant 1 : index
    %c0_181 = arith.constant 0 : index
    %173 = vector.load %arg20[%c0_179, %c1_180, %c0_181] : memref<18x18x4xf32, #tpu.memory_space<vmem>>, vector<16x16x4xf32>
    %174 = arith.maximumf %172, %173 : vector<16x16x4xf32>
    %c0_182 = arith.constant 0 : index
    %c2_183 = arith.constant 2 : index
    %c0_184 = arith.constant 0 : index
    %175 = vector.load %arg20[%c0_182, %c2_183, %c0_184] : memref<18x18x4xf32, #tpu.memory_space<vmem>>, vector<16x16x4xf32>
    %176 = arith.maximumf %174, %175 : vector<16x16x4xf32>
    %c1_185 = arith.constant 1 : index
    %c0_186 = arith.constant 0 : index
    %c0_187 = arith.constant 0 : index
    %177 = vector.load %arg20[%c1_185, %c0_186, %c0_187] : memref<18x18x4xf32, #tpu.memory_space<vmem>>, vector<16x16x4xf32>
    %178 = arith.maximumf %176, %177 : vector<16x16x4xf32>
    %c1_188 = arith.constant 1 : index
    %c2_189 = arith.constant 2 : index
    %c0_190 = arith.constant 0 : index
    %179 = vector.load %arg20[%c1_188, %c2_189, %c0_190] : memref<18x18x4xf32, #tpu.memory_space<vmem>>, vector<16x16x4xf32>
    %180 = arith.maximumf %178, %179 : vector<16x16x4xf32>
    %c2_191 = arith.constant 2 : index
    %c0_192 = arith.constant 0 : index
    %c0_193 = arith.constant 0 : index
    %181 = vector.load %arg20[%c2_191, %c0_192, %c0_193] : memref<18x18x4xf32, #tpu.memory_space<vmem>>, vector<16x16x4xf32>
    %182 = arith.maximumf %180, %181 : vector<16x16x4xf32>
    %c2_194 = arith.constant 2 : index
    %c1_195 = arith.constant 1 : index
    %c0_196 = arith.constant 0 : index
    %183 = vector.load %arg20[%c2_194, %c1_195, %c0_196] : memref<18x18x4xf32, #tpu.memory_space<vmem>>, vector<16x16x4xf32>
    %184 = arith.maximumf %182, %183 : vector<16x16x4xf32>
    %c2_197 = arith.constant 2 : index
    %c2_198 = arith.constant 2 : index
    %c0_199 = arith.constant 0 : index
    %185 = vector.load %arg20[%c2_197, %c2_198, %c0_199] : memref<18x18x4xf32, #tpu.memory_space<vmem>>, vector<16x16x4xf32>
    %186 = arith.maximumf %184, %185 : vector<16x16x4xf32>
    %c0_200 = arith.constant 0 : index
    %c0_201 = arith.constant 0 : index
    %187 = vector.load %arg14[%c0_200, %c0_201] : memref<8x4xf32, #tpu.memory_space<vmem>>, vector<8x4xf32>
    %188 = vector.shape_cast %186 : vector<16x16x4xf32> to vector<256x4xf32>
    %cst_202 = arith.constant dense<0.000000e+00> : vector<8x256xf32>
    %189 = tpu.matmul %187, %188, %cst_202 {dimension_numbers = #tpu.dot_dimension_numbers<[1], [1], [0], [0], [0, 0, 1, 0], [], []>} : vector<8x4xf32>, vector<256x4xf32>, vector<8x256xf32> -> vector<8x256xf32>
    %c0_203 = arith.constant 0 : index
    %c0_204 = arith.constant 0 : index
    %190 = vector.load %arg15[%c0_203, %c0_204] : memref<8x1xf32, #tpu.memory_space<vmem>>, vector<8x1xf32>
    %191 = vector.broadcast %190 : vector<8x1xf32> to vector<8x256xf32>
    %192 = arith.mulf %189, %191 : vector<8x256xf32>
    %c0_205 = arith.constant 0 : index
    %c0_206 = arith.constant 0 : index
    %193 = vector.load %arg16[%c0_205, %c0_206] : memref<8x1xf32, #tpu.memory_space<vmem>>, vector<8x1xf32>
    %194 = vector.broadcast %193 : vector<8x1xf32> to vector<8x256xf32>
    %195 = arith.addf %192, %194 : vector<8x256xf32>
    %cst_207 = arith.constant 0.000000e+00 : f32
    %196 = vector.broadcast %cst_207 : f32 to vector<8x256xf32>
    %197 = arith.maximumf %195, %196 : vector<8x256xf32>
    %c0_208 = arith.constant 0 : index
    %c24 = arith.constant 24 : index
    %c0_209 = arith.constant 0 : index
    %198 = vector.load %arg17[%c0_208, %c24, %c0_209] : memref<1x32x256xf32, #tpu.memory_space<vmem>>, vector<1x8x256xf32>
    %199 = vector.shape_cast %198 : vector<1x8x256xf32> to vector<8x256xf32>
    %200 = vector.shape_cast %197 : vector<8x256xf32> to vector<1x8x256xf32>
    tpu.vector_store %arg17[%c0_208, %c24, %c0_209], %200 {strides = array<i32>} : memref<1x32x256xf32, #tpu.memory_space<vmem>>, vector<1x8x256xf32>,
    return
  }
  func.func @transform_0(%arg0: i32) -> (i32, i32, i32) {
    %c0_i32 = arith.constant 0 : i32
    %c0_i32_0 = arith.constant 0 : i32
    %c0_i32_1 = arith.constant 0 : i32
    return %arg0, %c0_i32, %c0_i32_0 : i32, i32, i32
  }
  func.func @transform_1(%arg0: i32) -> (i32, i32) {
    %c0_i32 = arith.constant 0 : i32
    %c0_i32_0 = arith.constant 0 : i32
    %c0_i32_1 = arith.constant 0 : i32
    return %c0_i32, %c0_i32_0 : i32, i32
  }
  func.func @transform_2(%arg0: i32) -> (i32, i32) {
    %c0_i32 = arith.constant 0 : i32
    %c0_i32_0 = arith.constant 0 : i32
    %c0_i32_1 = arith.constant 0 : i32
    return %c0_i32, %c0_i32_0 : i32, i32
  }
  func.func @transform_3(%arg0: i32) -> (i32, i32) {
    %c0_i32 = arith.constant 0 : i32
    %c0_i32_0 = arith.constant 0 : i32
    %c0_i32_1 = arith.constant 0 : i32
    return %c0_i32, %c0_i32_0 : i32, i32
  }
  func.func @transform_4(%arg0: i32) -> (i32, i32) {
    %c0_i32 = arith.constant 0 : i32
    %c0_i32_0 = arith.constant 0 : i32
    %c0_i32_1 = arith.constant 0 : i32
    return %c0_i32, %c0_i32_0 : i32, i32
  }
  func.func @transform_5(%arg0: i32) -> (i32, i32) {
    %c0_i32 = arith.constant 0 : i32
    %c0_i32_0 = arith.constant 0 : i32
    %c0_i32_1 = arith.constant 0 : i32
    return %c0_i32, %c0_i32_0 : i32, i32
  }
  func.func @transform_6(%arg0: i32) -> (i32, i32) {
    %c0_i32 = arith.constant 0 : i32
    %c0_i32_0 = arith.constant 0 : i32
    %c0_i32_1 = arith.constant 0 : i32
    return %c0_i32, %c0_i32_0 : i32, i32
  }
  func.func @transform_7(%arg0: i32) -> (i32, i32, i32) {
    %c0_i32 = arith.constant 0 : i32
    %c0_i32_0 = arith.constant 0 : i32
    %c0_i32_1 = arith.constant 0 : i32
    %c0_i32_2 = arith.constant 0 : i32
    return %c0_i32, %c0_i32_0, %c0_i32_1 : i32, i32, i32
  }
  func.func @transform_8(%arg0: i32) -> (i32, i32) {
    %c0_i32 = arith.constant 0 : i32
    %c0_i32_0 = arith.constant 0 : i32
    %c0_i32_1 = arith.constant 0 : i32
    return %c0_i32, %c0_i32_0 : i32, i32
  }
  func.func @transform_9(%arg0: i32) -> (i32, i32) {
    %c0_i32 = arith.constant 0 : i32
    %c0_i32_0 = arith.constant 0 : i32
    %c0_i32_1 = arith.constant 0 : i32
    return %c0_i32, %c0_i32_0 : i32, i32
  }
  func.func @transform_10(%arg0: i32) -> (i32, i32, i32) {
    %c0_i32 = arith.constant 0 : i32
    %c0_i32_0 = arith.constant 0 : i32
    %c0_i32_1 = arith.constant 0 : i32
    %c0_i32_2 = arith.constant 0 : i32
    return %c0_i32, %c0_i32_0, %c0_i32_1 : i32, i32, i32
  }
  func.func @transform_11(%arg0: i32) -> (i32, i32) {
    %c0_i32 = arith.constant 0 : i32
    %c0_i32_0 = arith.constant 0 : i32
    %c0_i32_1 = arith.constant 0 : i32
    return %c0_i32, %c0_i32_0 : i32, i32
  }
  func.func @transform_12(%arg0: i32) -> (i32, i32) {
    %c0_i32 = arith.constant 0 : i32
    %c0_i32_0 = arith.constant 0 : i32
    %c0_i32_1 = arith.constant 0 : i32
    return %c0_i32, %c0_i32_0 : i32, i32
  }
  func.func @transform_13(%arg0: i32) -> (i32, i32) {
    %c0_i32 = arith.constant 0 : i32
    %c0_i32_0 = arith.constant 0 : i32
    %c0_i32_1 = arith.constant 0 : i32
    return %c0_i32, %c0_i32_0 : i32, i32
  }
  func.func @transform_14(%arg0: i32) -> (i32, i32) {
    %c0_i32 = arith.constant 0 : i32
    %c0_i32_0 = arith.constant 0 : i32
    %c0_i32_1 = arith.constant 0 : i32
    return %c0_i32, %c0_i32_0 : i32, i32
  }
  func.func @transform_15(%arg0: i32) -> (i32, i32) {
    %c0_i32 = arith.constant 0 : i32
    %c0_i32_0 = arith.constant 0 : i32
    %c0_i32_1 = arith.constant 0 : i32
    return %c0_i32, %c0_i32_0 : i32, i32
  }
  func.func @transform_16(%arg0: i32) -> (i32, i32, i32) {
    %c0_i32 = arith.constant 0 : i32
    %c0_i32_0 = arith.constant 0 : i32
    %c0_i32_1 = arith.constant 0 : i32
    return %arg0, %c0_i32, %c0_i32_0 : i32, i32, i32
  }
}

</mosaic_0001>

<llo_original>
// kernel: inception1_forward.1
$region0: #{inception1_forward.1}
  #allocation0 [shape = 'u32[]', space=smem, size = 0x4, offset = 0x4, fixed_abs, tag = 'smem constant byte address 0x4 - core index']
  #allocation1 [shape = 'u32[144,128]{1,0:T(1,128)}', space=vmem, size = 0x12000, scoped, tag = 'internal scratch']
  #allocation2 [shape = 'f32[18,18,4]{2,1,0:T(8,128)}', space=vmem, size = 0x36000, scoped, tag = 'scratch operand']
  #allocation3 [shape = 'f32[18,18,4]{2,1,0:T(8,128)}', space=vmem, size = 0x36000, scoped, tag = 'scratch operand']
  #allocation4 [shape = 'f32[18,18,4]{2,1,0:T(8,128)}', space=vmem, size = 0x36000, scoped, tag = 'scratch operand']
  %s0 = inlined_call_operand.vmem [shape: f32[2,256,4], index: 0, kind: input, shape index: {}]
  %s1 = inlined_call_operand.vmem [shape: f32[4,8], index: 1, kind: input, shape index: {}]
  %s2 = inlined_call_operand.vmem [shape: f32[1,8], index: 2, kind: input, shape index: {}]
  %s3 = inlined_call_operand.vmem [shape: f32[1,8], index: 3, kind: input, shape index: {}]
  %s4 = inlined_call_operand.vmem [shape: f32[8,4], index: 4, kind: input, shape index: {}]
  %s5 = inlined_call_operand.vmem [shape: f32[8,1], index: 5, kind: input, shape index: {}]
  %s6 = inlined_call_operand.vmem [shape: f32[8,1], index: 6, kind: input, shape index: {}]
  %s7 = inlined_call_operand.vmem [shape: f32[9,8,4], index: 7, kind: input, shape index: {}]
  %s8 = inlined_call_operand.vmem [shape: f32[8,1], index: 8, kind: input, shape index: {}]
  %s9 = inlined_call_operand.vmem [shape: f32[8,1], index: 9, kind: input, shape index: {}]
  %s10 = inlined_call_operand.vmem [shape: f32[9,8,4], index: 10, kind: input, shape index: {}]
  %s11 = inlined_call_operand.vmem [shape: f32[8,1], index: 11, kind: input, shape index: {}]
  %s12 = inlined_call_operand.vmem [shape: f32[8,1], index: 12, kind: input, shape index: {}]
  %s13 = inlined_call_operand.vmem [shape: f32[8,4], index: 13, kind: input, shape index: {}]
  %s14 = inlined_call_operand.vmem [shape: f32[8,1], index: 14, kind: input, shape index: {}]
  %s15 = inlined_call_operand.vmem [shape: f32[8,1], index: 15, kind: input, shape index: {}]
  %s16 = inlined_call_operand.vmem [shape: f32[2,32,256], index: 16, kind: output, shape index: {}]
  %s17 = sld [smem:[#allocation0]]
  $region97: #{inception1_forward.1} parent=0
    _
  %s19 = ssub.s32 1, %s17
  %s20 = scalar_select 0, %s19, %s17
  loop: start=0, step=1, limit=4
  $region2: #{inception1_forward.1} parent=0 // loop_pre_header
    _
  $region3: #{inception1_forward.1} parent=0 // loop_header
    %s22 = sphi 0, %s26
    %p23 = scmp.ge.s32.totalorder %s22, 4
    %s32 = sphi 0, %s34
    %s35 = sphi 0, %s32
    %s36 = sphi 0, %s35
    %s52 = sphi 0, %s36
    %s56 = sphi 0, %s56
    %s58 = sphi 0, %s56
    %s59 = sphi 0, %s58
    %s73 = sphi 0, %s59
    %s77 = sphi 0, %s77
    %s79 = sphi 0, %s77
    %s80 = sphi 0, %s79
    %s94 = sphi 0, %s80
    %s98 = sphi 0, %s98
    %s100 = sphi 0, %s98
    %s101 = sphi 0, %s100
    %s115 = sphi 0, %s101
    %s119 = sphi 0, %s119
    %s121 = sphi 0, %s119
    %s122 = sphi 0, %s121
    %s136 = sphi 0, %s122
    %s140 = sphi 0, %s140
    %s142 = sphi 0, %s140
    %s143 = sphi 0, %s142
    %s157 = sphi 0, %s143
    %s161 = sphi 0, %s161
    %s163 = sphi 0, %s161
    %s164 = sphi 0, %s163
    %s178 = sphi 0, %s164
    %s182 = sphi 0, %s182
    %s184 = sphi 0, %s182
    %s185 = sphi 0, %s184
    %s199 = sphi 0, %s185
    %s203 = sphi 0, %s203
    %s205 = sphi 0, %s203
    %s206 = sphi 0, %s205
    %s220 = sphi 0, %s206
    %s224 = sphi 0, %s224
    %s226 = sphi 0, %s224
    %s227 = sphi 0, %s226
    %s241 = sphi 0, %s227
    %s245 = sphi 0, %s245
    %s247 = sphi 0, %s245
    %s248 = sphi 0, %s247
    %s262 = sphi 0, %s248
    %s266 = sphi 0, %s266
    %s268 = sphi 0, %s266
    %s269 = sphi 0, %s268
    %s283 = sphi 0, %s269
    %s287 = sphi 0, %s287
    %s289 = sphi 0, %s287
    %s290 = sphi 0, %s289
    %s304 = sphi 0, %s290
    %s308 = sphi 0, %s308
    %s310 = sphi 0, %s308
    %s311 = sphi 0, %s310
    %s325 = sphi 0, %s311
    %s329 = sphi 0, %s329
    %s331 = sphi 0, %s329
    %s332 = sphi 0, %s331
    %s346 = sphi 0, %s332
    %s350 = sphi 0, %s350
    %s352 = sphi 0, %s350
    %s353 = sphi 0, %s352
    %s367 = sphi 0, %s353
    %s373 = sphi 0, %s375
    %s376 = sphi 0, %s373
    %s377 = sphi 0, %s376
    %s393 = sphi 0, %s377
  $region4: #{inception1_forward.1} parent=0 // loop_header_branch
    %25 = sbr.rel (%p23) target = $region8
  $region5: #{inception1_forward.1} parent=0 // loop_body
    %s27 = ssub.s32 %s22, 1
    %s28 = ssub.s32 %s22, 2
    %s29 = sadd.s32 %s22, 1
    %s30 = ssub.s32 %s22, %s29
    %p31 = scmp.eq.s32.totalorder %s30, 0
    %s33 = sadd.s32 %s32, 1
    %s34 = scalar_select %p31, %s32, %s33
    %p37 = pneg %p31
    %p38 = scmp.eq.s32.totalorder %s22, 1
    %p39 = por %p37, %p38
    %p40 = scmp.ne.s32.totalorder %s32, %s35
    %p41 = scmp.eq.s32.totalorder %s22, 0
    %p42 = por %p40, %p41
    %p43 = scmp.ne.s32.totalorder %s32, %s35
    %p44 = scmp.eq.s32.totalorder %s27, 1
    %p45 = por %p43, %p44
    %p46 = scmp.ne.s32.totalorder %s35, %s36
    %p47 = scmp.eq.s32.totalorder %s27, 0
    %p48 = por %p46, %p47
    %p49 = scmp.ne.s32.totalorder %s35, %s36
    %p50 = scmp.eq.s32.totalorder %s28, 1
    %p51 = por %p49, %p50
    %p53 = scmp.ne.s32.totalorder %s36, %s52
    %p54 = scmp.eq.s32.totalorder %s28, 0
    %p55 = por %p53, %p54
    %s57 = sadd.s32 %s56, 1
    %p60 = scmp.eq.s32.totalorder %s22, 1
    %p61 = scmp.ne.s32.totalorder %s56, %s58
    %p62 = scmp.eq.s32.totalorder %s22, 0
    %p63 = por %p61, %p62
    %p64 = scmp.ne.s32.totalorder %s56, %s58
    %p65 = scmp.eq.s32.totalorder %s27, 1
    %p66 = por %p64, %p65
    %p67 = scmp.ne.s32.totalorder %s58, %s59
    %p68 = scmp.eq.s32.totalorder %s27, 0
    %p69 = por %p67, %p68
    %p70 = scmp.ne.s32.totalorder %s58, %s59
    %p71 = scmp.eq.s32.totalorder %s28, 1
    %p72 = por %p70, %p71
    %p74 = scmp.ne.s32.totalorder %s59, %s73
    %p75 = scmp.eq.s32.totalorder %s28, 0
    %p76 = por %p74, %p75
    %s78 = sadd.s32 %s77, 1
    %p81 = scmp.eq.s32.totalorder %s22, 1
    %p82 = scmp.ne.s32.totalorder %s77, %s79
    %p83 = scmp.eq.s32.totalorder %s22, 0
    %p84 = por %p82, %p83
    %p85 = scmp.ne.s32.totalorder %s77, %s79
    %p86 = scmp.eq.s32.totalorder %s27, 1
    %p87 = por %p85, %p86
    %p88 = scmp.ne.s32.totalorder %s79, %s80
    %p89 = scmp.eq.s32.totalorder %s27, 0
    %p90 = por %p88, %p89
    %p91 = scmp.ne.s32.totalorder %s79, %s80
    %p92 = scmp.eq.s32.totalorder %s28, 1
    %p93 = por %p91, %p92
    %p95 = scmp.ne.s32.totalorder %s80, %s94
    %p96 = scmp.eq.s32.totalorder %s28, 0
    %p97 = por %p95, %p96
    %s99 = sadd.s32 %s98, 1
    %p102 = scmp.eq.s32.totalorder %s22, 1
    %p103 = scmp.ne.s32.totalorder %s98, %s100
    %p104 = scmp.eq.s32.totalorder %s22, 0
    %p105 = por %p103, %p104
    %p106 = scmp.ne.s32.totalorder %s98, %s100
    %p107 = scmp.eq.s32.totalorder %s27, 1
    %p108 = por %p106, %p107
    %p109 = scmp.ne.s32.totalorder %s100, %s101
    %p110 = scmp.eq.s32.totalorder %s27, 0
    %p111 = por %p109, %p110
    %p112 = scmp.ne.s32.totalorder %s100, %s101
    %p113 = scmp.eq.s32.totalorder %s28, 1
    %p114 = por %p112, %p113
    %p116 = scmp.ne.s32.totalorder %s101, %s115
    %p117 = scmp.eq.s32.totalorder %s28, 0
    %p118 = por %p116, %p117
    %s120 = sadd.s32 %s119, 1
    %p123 = scmp.eq.s32.totalorder %s22, 1
    %p124 = scmp.ne.s32.totalorder %s119, %s121
    %p125 = scmp.eq.s32.totalorder %s22, 0
    %p126 = por %p124, %p125
    %p127 = scmp.ne.s32.totalorder %s119, %s121
    %p128 = scmp.eq.s32.totalorder %s27, 1
    %p129 = por %p127, %p128
    %p130 = scmp.ne.s32.totalorder %s121, %s122
    %p131 = scmp.eq.s32.totalorder %s27, 0
    %p132 = por %p130, %p131
    %p133 = scmp.ne.s32.totalorder %s121, %s122
    %p134 = scmp.eq.s32.totalorder %s28, 1
    %p135 = por %p133, %p134
    %p137 = scmp.ne.s32.totalorder %s122, %s136
    %p138 = scmp.eq.s32.totalorder %s28, 0
    %p139 = por %p137, %p138
    %s141 = sadd.s32 %s140, 1
    %p144 = scmp.eq.s32.totalorder %s22, 1
    %p145 = scmp.ne.s32.totalorder %s140, %s142
    %p146 = scmp.eq.s32.totalorder %s22, 0
    %p147 = por %p145, %p146
    %p148 = scmp.ne.s32.totalorder %s140, %s142
    %p149 = scmp.eq.s32.totalorder %s27, 1
    %p150 = por %p148, %p149
    %p151 = scmp.ne.s32.totalorder %s142, %s143
    %p152 = scmp.eq.s32.totalorder %s27, 0
    %p153 = por %p151, %p152
    %p154 = scmp.ne.s32.totalorder %s142, %s143
    %p155 = scmp.eq.s32.totalorder %s28, 1
    %p156 = por %p154, %p155
    %p158 = scmp.ne.s32.totalorder %s143, %s157
    %p159 = scmp.eq.s32.totalorder %s28, 0
    %p160 = por %p158, %p159
    %s162 = sadd.s32 %s161, 1
    %p165 = scmp.eq.s32.totalorder %s22, 1
    %p166 = scmp.ne.s32.totalorder %s161, %s163
    %p167 = scmp.eq.s32.totalorder %s22, 0
    %p168 = por %p166, %p167
    %p169 = scmp.ne.s32.totalorder %s161, %s163
    %p170 = scmp.eq.s32.totalorder %s27, 1
    %p171 = por %p169, %p170
    %p172 = scmp.ne.s32.totalorder %s163, %s164
    %p173 = scmp.eq.s32.totalorder %s27, 0
    %p174 = por %p172, %p173
    %p175 = scmp.ne.s32.totalorder %s163, %s164
    %p176 = scmp.eq.s32.totalorder %s28, 1
    %p177 = por %p175, %p176
    %p179 = scmp.ne.s32.totalorder %s164, %s178
    %p180 = scmp.eq.s32.totalorder %s28, 0
    %p181 = por %p179, %p180
    %s183 = sadd.s32 %s182, 1
    %p186 = scmp.eq.s32.totalorder %s22, 1
    %p187 = scmp.ne.s32.totalorder %s182, %s184
    %p188 = scmp.eq.s32.totalorder %s22, 0
    %p189 = por %p187, %p188
    %p190 = scmp.ne.s32.totalorder %s182, %s184
    %p191 = scmp.eq.s32.totalorder %s27, 1
    %p192 = por %p190, %p191
    %p193 = scmp.ne.s32.totalorder %s184, %s185
    %p194 = scmp.eq.s32.totalorder %s27, 0
    %p195 = por %p193, %p194
    %p196 = scmp.ne.s32.totalorder %s184, %s185
    %p197 = scmp.eq.s32.totalorder %s28, 1
    %p198 = por %p196, %p197
    %p200 = scmp.ne.s32.totalorder %s185, %s199
    %p201 = scmp.eq.s32.totalorder %s28, 0
    %p202 = por %p200, %p201
    %s204 = sadd.s32 %s203, 1
    %p207 = scmp.eq.s32.totalorder %s22, 1
    %p208 = scmp.ne.s32.totalorder %s203, %s205
    %p209 = scmp.eq.s32.totalorder %s22, 0
    %p210 = por %p208, %p209
    %p211 = scmp.ne.s32.totalorder %s203, %s205
    %p212 = scmp.eq.s32.totalorder %s27, 1
    %p213 = por %p211, %p212
    %p214 = scmp.ne.s32.totalorder %s205, %s206
    %p215 = scmp.eq.s32.totalorder %s27, 0
    %p216 = por %p214, %p215
    %p217 = scmp.ne.s32.totalorder %s205, %s206
    %p218 = scmp.eq.s32.totalorder %s28, 1
    %p219 = por %p217, %p218
    %p221 = scmp.ne.s32.totalorder %s206, %s220
    %p222 = scmp.eq.s32.totalorder %s28, 0
    %p223 = por %p221, %p222
    %s225 = sadd.s32 %s224, 1
    %p228 = scmp.eq.s32.totalorder %s22, 1
    %p229 = scmp.ne.s32.totalorder %s224, %s226
    %p230 = scmp.eq.s32.totalorder %s22, 0
    %p231 = por %p229, %p230
    %p232 = scmp.ne.s32.totalorder %s224, %s226
    %p233 = scmp.eq.s32.totalorder %s27, 1
    %p234 = por %p232, %p233
    %p235 = scmp.ne.s32.totalorder %s226, %s227
    %p236 = scmp.eq.s32.totalorder %s27, 0
    %p237 = por %p235, %p236
    %p238 = scmp.ne.s32.totalorder %s226, %s227
    %p239 = scmp.eq.s32.totalorder %s28, 1
    %p240 = por %p238, %p239
    %p242 = scmp.ne.s32.totalorder %s227, %s241
    %p243 = scmp.eq.s32.totalorder %s28, 0
    %p244 = por %p242, %p243
    %s246 = sadd.s32 %s245, 1
    %p249 = scmp.eq.s32.totalorder %s22, 1
    %p250 = scmp.ne.s32.totalorder %s245, %s247
    %p251 = scmp.eq.s32.totalorder %s22, 0
    %p252 = por %p250, %p251
    %p253 = scmp.ne.s32.totalorder %s245, %s247
    %p254 = scmp.eq.s32.totalorder %s27, 1
    %p255 = por %p253, %p254
    %p256 = scmp.ne.s32.totalorder %s247, %s248
    %p257 = scmp.eq.s32.totalorder %s27, 0
    %p258 = por %p256, %p257
    %p259 = scmp.ne.s32.totalorder %s247, %s248
    %p260 = scmp.eq.s32.totalorder %s28, 1
    %p261 = por %p259, %p260
    %p263 = scmp.ne.s32.totalorder %s248, %s262
    %p264 = scmp.eq.s32.totalorder %s28, 0
    %p265 = por %p263, %p264
    %s267 = sadd.s32 %s266, 1
    %p270 = scmp.eq.s32.totalorder %s22, 1
    %p271 = scmp.ne.s32.totalorder %s266, %s268
    %p272 = scmp.eq.s32.totalorder %s22, 0
    %p273 = por %p271, %p272
    %p274 = scmp.ne.s32.totalorder %s266, %s268
    %p275 = scmp.eq.s32.totalorder %s27, 1
    %p276 = por %p274, %p275
    %p277 = scmp.ne.s32.totalorder %s268, %s269
    %p278 = scmp.eq.s32.totalorder %s27, 0
    %p279 = por %p277, %p278
    %p280 = scmp.ne.s32.totalorder %s268, %s269
    %p281 = scmp.eq.s32.totalorder %s28, 1
    %p282 = por %p280, %p281
    %p284 = scmp.ne.s32.totalorder %s269, %s283
    %p285 = scmp.eq.s32.totalorder %s28, 0
    %p286 = por %p284, %p285
    %s288 = sadd.s32 %s287, 1
    %p291 = scmp.eq.s32.totalorder %s22, 1
    %p292 = scmp.ne.s32.totalorder %s287, %s289
    %p293 = scmp.eq.s32.totalorder %s22, 0
    %p294 = por %p292, %p293
    %p295 = scmp.ne.s32.totalorder %s287, %s289
    %p296 = scmp.eq.s32.totalorder %s27, 1
    %p297 = por %p295, %p296
    %p298 = scmp.ne.s32.totalorder %s289, %s290
    %p299 = scmp.eq.s32.totalorder %s27, 0
    %p300 = por %p298, %p299
    %p301 = scmp.ne.s32.totalorder %s289, %s290
    %p302 = scmp.eq.s32.totalorder %s28, 1
    %p303 = por %p301, %p302
    %p305 = scmp.ne.s32.totalorder %s290, %s304
    %p306 = scmp.eq.s32.totalorder %s28, 0
    %p307 = por %p305, %p306
    %s309 = sadd.s32 %s308, 1
    %p312 = scmp.eq.s32.totalorder %s22, 1
    %p313 = scmp.ne.s32.totalorder %s308, %s310
    %p314 = scmp.eq.s32.totalorder %s22, 0
    %p315 = por %p313, %p314
    %p316 = scmp.ne.s32.totalorder %s308, %s310
    %p317 = scmp.eq.s32.totalorder %s27, 1
    %p318 = por %p316, %p317
    %p319 = scmp.ne.s32.totalorder %s310, %s311
    %p320 = scmp.eq.s32.totalorder %s27, 0
    %p321 = por %p319, %p320
    %p322 = scmp.ne.s32.totalorder %s310, %s311
    %p323 = scmp.eq.s32.totalorder %s28, 1
    %p324 = por %p322, %p323
    %p326 = scmp.ne.s32.totalorder %s311, %s325
    %p327 = scmp.eq.s32.totalorder %s28, 0
    %p328 = por %p326, %p327
    %s330 = sadd.s32 %s329, 1
    %p333 = scmp.eq.s32.totalorder %s22, 1
    %p334 = scmp.ne.s32.totalorder %s329, %s331
    %p335 = scmp.eq.s32.totalorder %s22, 0
    %p336 = por %p334, %p335
    %p337 = scmp.ne.s32.totalorder %s329, %s331
    %p338 = scmp.eq.s32.totalorder %s27, 1
    %p339 = por %p337, %p338
    %p340 = scmp.ne.s32.totalorder %s331, %s332
    %p341 = scmp.eq.s32.totalorder %s27, 0
    %p342 = por %p340, %p341
    %p343 = scmp.ne.s32.totalorder %s331, %s332
    %p344 = scmp.eq.s32.totalorder %s28, 1
    %p345 = por %p343, %p344
    %p347 = scmp.ne.s32.totalorder %s332, %s346
    %p348 = scmp.eq.s32.totalorder %s28, 0
    %p349 = por %p347, %p348
    %s351 = sadd.s32 %s350, 1
    %p354 = scmp.eq.s32.totalorder %s22, 1
    %p355 = scmp.ne.s32.totalorder %s350, %s352
    %p356 = scmp.eq.s32.totalorder %s22, 0
    %p357 = por %p355, %p356
    %p358 = scmp.ne.s32.totalorder %s350, %s352
    %p359 = scmp.eq.s32.totalorder %s27, 1
    %p360 = por %p358, %p359
    %p361 = scmp.ne.s32.totalorder %s352, %s353
    %p362 = scmp.eq.s32.totalorder %s27, 0
    %p363 = por %p361, %p362
    %p364 = scmp.ne.s32.totalorder %s352, %s353
    %p365 = scmp.eq.s32.totalorder %s28, 1
    %p366 = por %p364, %p365
    %p368 = scmp.ne.s32.totalorder %s353, %s367
    %p369 = scmp.eq.s32.totalorder %s28, 0
    %p370 = por %p368, %p369
    %s371 = ssub.s32 %s22, %s29
    %p372 = scmp.eq.s32.totalorder %s371, 0
    %s374 = sadd.s32 %s373, 1
    %s375 = scalar_select %p372, %s373, %s374
    %p378 = pneg %p372
    %p379 = scmp.eq.s32.totalorder %s22, 1
    %p380 = por %p378, %p379
    %p381 = scmp.ne.s32.totalorder %s373, %s376
    %p382 = scmp.eq.s32.totalorder %s22, 0
    %p383 = por %p381, %p382
    %p384 = scmp.ne.s32.totalorder %s373, %s376
    %p385 = scmp.eq.s32.totalorder %s27, 1
    %p386 = por %p384, %p385
    %p387 = scmp.ne.s32.totalorder %s376, %s377
    %p388 = scmp.eq.s32.totalorder %s27, 0
    %p389 = por %p387, %p388
    %p390 = scmp.ne.s32.totalorder %s376, %s377
    %p391 = scmp.eq.s32.totalorder %s28, 1
    %p392 = por %p390, %p391
    %p394 = scmp.ne.s32.totalorder %s377, %s393
    %p395 = scmp.eq.s32.totalorder %s28, 0
    %p396 = por %p394, %p395
    %p397 = scmp.le.s32.totalorder 1, %s22
    %p398 = scmp.lt.s32.totalorder %s22, 3
    %p399 = pnand %p397, %p398
    %p400 = pneg %p399
    // Predicated region
    $region9: #{inception1_forward.1} parent=5 // pred_check
      _
    $region10: #{inception1_forward.1} parent=5 // pred_check_branch
      %402 = sbr.rel (%p399) target = $region12
    $region11: #{inception1_forward.1} parent=5 // pred_region
      %s403 = ssub.s32 %s22, 1
      // Predicated region
      $region13: #{inception1_forward.1} parent=11 // pred_check
        %p404 = pneg %p69
      $region14: #{inception1_forward.1} parent=11 // pred_check_branch
        %406 = sbr.rel (%p404) target = $region16
      $region15: #{inception1_forward.1} parent=11 // pred_region
        _
      $region16: #{inception1_forward.1} parent=11 // pred_fallthru
        _
      // Predicated region
      $region17: #{inception1_forward.1} parent=11 // pred_check
        %p407 = pneg %p90
      $region18: #{inception1_forward.1} parent=11 // pred_check_branch
        %409 = sbr.rel (%p407) target = $region20
      $region19: #{inception1_forward.1} parent=11 // pred_region
        _
      $region20: #{inception1_forward.1} parent=11 // pred_fallthru
        _
      // Predicated region
      $region21: #{inception1_forward.1} parent=11 // pred_check
        %p410 = pneg %p111
      $region22: #{inception1_forward.1} parent=11 // pred_check_branch
        %412 = sbr.rel (%p410) target = $region24
      $region23: #{inception1_forward.1} parent=11 // pred_region
        _
      $region24: #{inception1_forward.1} parent=11 // pred_fallthru
        _
      // Predicated region
      $region25: #{inception1_forward.1} parent=11 // pred_check
        %p413 = pneg %p132
      $region26: #{inception1_forward.1} parent=11 // pred_check_branch
        %415 = sbr.rel (%p413) target = $region28
      $region27: #{inception1_forward.1} parent=11 // pred_region
        _
      $region28: #{inception1_forward.1} parent=11 // pred_fallthru
        _
      // Predicated region
      $region29: #{inception1_forward.1} parent=11 // pred_check
        %p416 = pneg %p153
      $region30: #{inception1_forward.1} parent=11 // pred_check_branch
        %418 = sbr.rel (%p416) target = $region32
      $region31: #{inception1_forward.1} parent=11 // pred_region
        _
      $region32: #{inception1_forward.1} parent=11 // pred_fallthru
        _
      // Predicated region
      $region33: #{inception1_forward.1} parent=11 // pred_check
        %p419 = pneg %p174
      $region34: #{inception1_forward.1} parent=11 // pred_check_branch
        %421 = sbr.rel (%p419) target = $region36
      $region35: #{inception1_forward.1} parent=11 // pred_region
        _
      $region36: #{inception1_forward.1} parent=11 // pred_fallthru
        _
      // Predicated region
      $region37: #{inception1_forward.1} parent=11 // pred_check
        %p422 = pneg %p195
      $region38: #{inception1_forward.1} parent=11 // pred_check_branch
        %424 = sbr.rel (%p422) target = $region40
      $region39: #{inception1_forward.1} parent=11 // pred_region
        _
      $region40: #{inception1_forward.1} parent=11 // pred_fallthru
        _
      // Predicated region
      $region41: #{inception1_forward.1} parent=11 // pred_check
        %p425 = pneg %p216
      $region42: #{inception1_forward.1} parent=11 // pred_check_branch
        %427 = sbr.rel (%p425) target = $region44
      $region43: #{inception1_forward.1} parent=11 // pred_region
        _
      $region44: #{inception1_forward.1} parent=11 // pred_fallthru
        _
      // Predicated region
      $region45: #{inception1_forward.1} parent=11 // pred_check
        %p428 = pneg %p237
      $region46: #{inception1_forward.1} parent=11 // pred_check_branch
        %430 = sbr.rel (%p428) target = $region48
      $region47: #{inception1_forward.1} parent=11 // pred_region
        _
      $region48: #{inception1_forward.1} parent=11 // pred_fallthru
        _
      // Predicated region
      $region49: #{inception1_forward.1} parent=11 // pred_check
        %p431 = pneg %p258
      $region50: #{inception1_forward.1} parent=11 // pred_check_branch
        %433 = sbr.rel (%p431) target = $region52
      $region51: #{inception1_forward.1} parent=11 // pred_region
        _
      $region52: #{inception1_forward.1} parent=11 // pred_fallthru
        _
      // Predicated region
      $region53: #{inception1_forward.1} parent=11 // pred_check
        %p434 = pneg %p279
      $region54: #{inception1_forward.1} parent=11 // pred_check_branch
        %436 = sbr.rel (%p434) target = $region56
      $region55: #{inception1_forward.1} parent=11 // pred_region
        _
      $region56: #{inception1_forward.1} parent=11 // pred_fallthru
        _
      // Predicated region
      $region57: #{inception1_forward.1} parent=11 // pred_check
        %p437 = pneg %p300
      $region58: #{inception1_forward.1} parent=11 // pred_check_branch
        %439 = sbr.rel (%p437) target = $region60
      $region59: #{inception1_forward.1} parent=11 // pred_region
        _
      $region60: #{inception1_forward.1} parent=11 // pred_fallthru
        _
      // Predicated region
      $region61: #{inception1_forward.1} parent=11 // pred_check
        %p440 = pneg %p321
      $region62: #{inception1_forward.1} parent=11 // pred_check_branch
        %442 = sbr.rel (%p440) target = $region64
      $region63: #{inception1_forward.1} parent=11 // pred_region
        _
      $region64: #{inception1_forward.1} parent=11 // pred_fallthru
        _
      // Predicated region
      $region65: #{inception1_forward.1} parent=11 // pred_check
        %p443 = pneg %p342
      $region66: #{inception1_forward.1} parent=11 // pred_check_branch
        %445 = sbr.rel (%p443) target = $region68
      $region67: #{inception1_forward.1} parent=11 // pred_region
        _
      $region68: #{inception1_forward.1} parent=11 // pred_fallthru
        _
      // Predicated region
      $region69: #{inception1_forward.1} parent=11 // pred_check
        %p446 = pneg %p363
      $region70: #{inception1_forward.1} parent=11 // pred_check_branch
        %448 = sbr.rel (%p446) target = $region72
      $region71: #{inception1_forward.1} parent=11 // pred_region
        _
      $region72: #{inception1_forward.1} parent=11 // pred_fallthru
        _
    $region12: #{inception1_forward.1} parent=5 // pred_fallthru
      _
    %p449 = scmp.lt.s32.totalorder %s22, 2
    // Predicated region
    $region73: #{inception1_forward.1} parent=5 // pred_check
      %p450 = pneg %p449
    $region74: #{inception1_forward.1} parent=5 // pred_check_branch
      %452 = sbr.rel (%p450) target = $region76
    $region75: #{inception1_forward.1} parent=5 // pred_region
      // Predicated region
      $region77: #{inception1_forward.1} parent=75 // pred_check
        %p453 = pneg %p42
      $region78: #{inception1_forward.1} parent=75 // pred_check_branch
        %455 = sbr.rel (%p453) target = $region80
      $region79: #{inception1_forward.1} parent=75 // pred_region
        %p456 = scmp.lt.s32.totalorder %s22, 1
        %s457 = scalar_select %p456, %s22, 1
        %s458 = smul.addr %s457, 32
        %s459 = smul.addr %s458, 8
        %s460 = scalar_lea.vmem %s0, %s459
      $region80: #{inception1_forward.1} parent=75 // pred_fallthru
        _
    $region76: #{inception1_forward.1} parent=5 // pred_fallthru
      _
    %p461 = scmp.le.s32.totalorder 1, %s22
    %p462 = scmp.lt.s32.totalorder %s22, 3
    %p463 = pnand %p461, %p462
    %p464 = pneg %p463
    // Predicated region
    $region81: #{inception1_forward.1} parent=5 // pred_check
      _
    $region82: #{inception1_forward.1} parent=5 // pred_check_branch
      %466 = sbr.rel (%p463) target = $region84
    $region83: #{inception1_forward.1} parent=5 // pred_region
      %s467 = ssub.s32 %s22, 1
      %p468 = scmp.lt.s32.totalorder %s27, 1
      %s469 = scalar_select %p468, %s27, 1
      %s470 = smul.addr %s469, 32
      %s471 = smul.addr %s470, 8
      %s472 = scalar_lea.vmem %s0, %s471
      %p473 = pneg %p48
      %p474 = pneg %p45
      %p475 = pneg %p69
      %p476 = pneg %p66
      %p477 = pneg %p90
      %p478 = pneg %p87
      %p479 = pneg %p111
      %p480 = pneg %p108
      %p481 = pneg %p132
      %p482 = pneg %p129
      %p483 = pneg %p153
      %p484 = pneg %p150
      %p485 = pneg %p174
      %p486 = pneg %p171
      %p487 = pneg %p195
      %p488 = pneg %p192
      %p489 = pneg %p216
      %p490 = pneg %p213
      %p491 = pneg %p237
      %p492 = pneg %p234
      %p493 = pneg %p258
      %p494 = pneg %p255
      %p495 = pneg %p279
      %p496 = pneg %p276
      %p497 = pneg %p300
      %p498 = pneg %p297
      %p499 = pneg %p321
      %p500 = pneg %p318
      %p501 = pneg %p342
      %p502 = pneg %p339
      %p503 = pneg %p363
      %p504 = pneg %p360
      %p505 = pneg %p389
      %p506 = pneg %p386
      %p507 = scmp.lt.s32.totalorder %s27, 1
      %s508 = scalar_select %p507, %s27, 1
      %s509 = smul.addr %s508, 8
      %s510 = smul.addr %s509, 8
      %s511 = scalar_lea.vmem %s16, %s510
      %p512 = scmp.lt.s32.totalorder %s27, 1
      %s513 = scalar_select %p512, %s27, 1
      %s514 = smul.addr %s513, 32
      %s515 = smul.addr %s514, 8
      %s516 = scalar_lea.vmem %s0, %s515
      %p517 = scmp.lt.s32.totalorder %s27, 1
      %s518 = scalar_select %p517, %s27, 1
      %s519 = smul.addr %s518, 8
      %s520 = smul.addr %s519, 8
      %s521 = scalar_lea.vmem %s16, %s520
      %v522 = vld [vmem:[%s516] sm:$0xff]
      %v523 = vld [vmem:[%s516 + $0x8] sm:$0xff]
      %v524 = vld [vmem:[%s516 + $0x10] sm:$0xff]
      %v525 = vld [vmem:[%s516 + $0x18] sm:$0xff]
      %v526 = vld [vmem:[%s516 + $0x20] sm:$0xff]
      %v527 = vld [vmem:[%s516 + $0x28] sm:$0xff]
      %v528 = vld [vmem:[%s516 + $0x30] sm:$0xff]
      %v529 = vld [vmem:[%s516 + $0x38] sm:$0xff]
      %v530 = vld [vmem:[%s516 + $0x40] sm:$0xff]
      %v531 = vld [vmem:[%s516 + $0x48] sm:$0xff]
      %v532 = vld [vmem:[%s516 + $0x50] sm:$0xff]
      %v533 = vld [vmem:[%s516 + $0x58] sm:$0xff]
      %v534 = vld [vmem:[%s516 + $0x60] sm:$0xff]
      %v535 = vld [vmem:[%s516 + $0x68] sm:$0xff]
      %v536 = vld [vmem:[%s516 + $0x70] sm:$0xff]
      %v537 = vld [vmem:[%s516 + $0x78] sm:$0xff]
      %v538 = vld [vmem:[%s516 + $0x80] sm:$0xff]
      %v539 = vld [vmem:[%s516 + $0x88] sm:$0xff]
      %v540 = vld [vmem:[%s516 + $0x90] sm:$0xff]
      %v541 = vld [vmem:[%s516 + $0x98] sm:$0xff]
      %v542 = vld [vmem:[%s516 + $0xa0] sm:$0xff]
      %v543 = vld [vmem:[%s516 + $0xa8] sm:$0xff]
      %v544 = vld [vmem:[%s516 + $0xb0] sm:$0xff]
      %v545 = vld [vmem:[%s516 + $0xb8] sm:$0xff]
      %v546 = vld [vmem:[%s516 + $0xc0] sm:$0xff]
      %v547 = vld [vmem:[%s516 + $0xc8] sm:$0xff]
      %v548 = vld [vmem:[%s516 + $0xd0] sm:$0xff]
      %v549 = vld [vmem:[%s516 + $0xd8] sm:$0xff]
      %v550 = vld [vmem:[%s516 + $0xe0] sm:$0xff]
      %v551 = vld [vmem:[%s516 + $0xe8] sm:$0xff]
      %v552 = vld [vmem:[%s516 + $0xf0] sm:$0xff]
      %v553 = vld [vmem:[%s516 + $0xf8] sm:$0xff]
      %v554 = vld [vmem:[%s4] sm:$0xff]
      %vm555 = vcmask 31744
      %v557 = vsel %vm555, %v554, 0
      %v560 = vsel %vm555, %v522, 0
      %v563 = vsel %vm555, %v523, 0
      %v566 = vsel %vm555, %v524, 0
      %v569 = vsel %vm555, %v525, 0
      %v572 = vsel %vm555, %v526, 0
      %v575 = vsel %vm555, %v527, 0
      %v578 = vsel %vm555, %v528, 0
      %v581 = vsel %vm555, %v529, 0
      %v584 = vsel %vm555, %v530, 0
      %v587 = vsel %vm555, %v531, 0
      %v590 = vsel %vm555, %v532, 0
      %v593 = vsel %vm555, %v533, 0
      %v596 = vsel %vm555, %v534, 0
      %v599 = vsel %vm555, %v535, 0
      %v602 = vsel %vm555, %v536, 0
      %v605 = vsel %vm555, %v537, 0
      %v608 = vsel %vm555, %v538, 0
      %v611 = vsel %vm555, %v539, 0
      %v614 = vsel %vm555, %v540, 0
      %v617 = vsel %vm555, %v541, 0
      %v620 = vsel %vm555, %v542, 0
      %v623 = vsel %vm555, %v543, 0
      %v626 = vsel %vm555, %v544, 0
      %v629 = vsel %vm555, %v545, 0
      %v632 = vsel %vm555, %v546, 0
      %v635 = vsel %vm555, %v547, 0
      %v638 = vsel %vm555, %v548, 0
      %v641 = vsel %vm555, %v549, 0
      %v644 = vsel %vm555, %v550, 0
      %v647 = vsel %vm555, %v551, 0
      %v650 = vsel %vm555, %v552, 0
      %v653 = vsel %vm555, %v553, 0
      %655 = vmatprep.subr.mxu0 0.0
      %656 = vmatpush1.xpose.msra.mxu0 %v605
      %657 = vmatprep.subr.mxu0 0.0
      %658 = vmatpush1.xpose.msra.mxu0 %v602
      %659 = vmatprep.subr.mxu0 0.0
      %660 = vmatpush1.xpose.msra.mxu0 %v599
      %661 = vmatprep.subr.mxu0 0.0
      %662 = vmatpush1.xpose.msra.mxu0 %v596
      %663 = vmatprep.subr.mxu0 0.0
      %664 = vmatpush1.xpose.msra.mxu0 %v593
      %665 = vmatprep.subr.mxu0 0.0
      %666 = vmatpush1.xpose.msra.mxu0 %v590
      %667 = vmatprep.subr.mxu0 0.0
      %668 = vmatpush1.xpose.msra.mxu0 %v587
      %669 = vmatprep.subr.mxu0 0.0
      %670 = vmatpush1.xpose.msra.mxu0 %v584
      %671 = vmatprep.subr.mxu0 0.0
      %672 = vmatpush1.xpose.msra.mxu0 %v581
      %673 = vmatprep.subr.mxu0 0.0
      %674 = vmatpush1.xpose.msra.mxu0 %v578
      %675 = vmatprep.subr.mxu0 0.0
      %676 = vmatpush1.xpose.msra.mxu0 %v575
      %677 = vmatprep.subr.mxu0 0.0
      %678 = vmatpush1.xpose.msra.mxu0 %v572
      %679 = vmatprep.subr.mxu0 0.0
      %680 = vmatpush1.xpose.msra.mxu0 %v569
      %681 = vmatprep.subr.mxu0 0.0
      %682 = vmatpush1.xpose.msra.mxu0 %v566
      %683 = vmatprep.subr.mxu0 0.0
      %684 = vmatpush1.xpose.msra.mxu0 %v563
      %685 = vmatprep.subr.mxu0 0.0
      %686 = vmatpush1.xpose.msra.mxu0 %v560
      %687 = vmatprep.subr.mxu0 0.0
      %688 = vmatpush2.xpose.msra.mxu0 %v653
      %689 = vmatprep.subr.mxu0 0.0
      %690 = vmatpush2.xpose.msra.mxu0 %v650
      %691 = vmatprep.subr.mxu0 0.0
      %692 = vmatpush2.xpose.msra.mxu0 %v647
      %693 = vmatprep.subr.mxu0 0.0
      %694 = vmatpush2.xpose.msra.mxu0 %v644
      %695 = vmatprep.subr.mxu0 0.0
      %696 = vmatpush2.xpose.msra.mxu0 %v641
      %697 = vmatprep.subr.mxu0 0.0
      %698 = vmatpush2.xpose.msra.mxu0 %v638
      %699 = vmatprep.subr.mxu0 0.0
      %700 = vmatpush2.xpose.msra.mxu0 %v635
      %701 = vmatprep.subr.mxu0 0.0
      %702 = vmatpush2.xpose.msra.mxu0 %v632
      %703 = vmatprep.subr.mxu0 0.0
      %704 = vmatpush2.xpose.msra.mxu0 %v629
      %705 = vmatprep.subr.mxu0 0.0
      %706 = vmatpush2.xpose.msra.mxu0 %v626
      %707 = vmatprep.subr.mxu0 0.0
      %708 = vmatpush2.xpose.msra.mxu0 %v623
      %709 = vmatprep.subr.mxu0 0.0
      %710 = vmatpush2.xpose.msra.mxu0 %v620
      %711 = vmatprep.subr.mxu0 0.0
      %712 = vmatpush2.xpose.msra.mxu0 %v617
      %713 = vmatprep.subr.mxu0 0.0
      %714 = vmatpush2.xpose.msra.mxu0 %v614
      %715 = vmatprep.subr.mxu0 0.0
      %716 = vmatpush2.xpose.msra.mxu0 %v611
      %717 = vmatprep.subr.mxu0 0.0
      %718 = vmatpush2.xpose.msra.mxu0 %v608
      %719 = vmatprep.mubr.f32.mxu0 0.0
      %720 = vmatmul.mubr.f32.gmra.mxu0 %v557
      %v721 = vpop.f32.mrf.mxu0
      %v722 = vadd.f32 0.0, %v721
      %v723 = vpop.f32.mrf.mxu0
      %v724 = vadd.f32 0.0, %v723
      %725 = vdwg.mxu0
      %v726 = vld [vmem:[%s5] sm:$0xff]
      %728 = vset.pattern.permute.xlu0 0
      %729 = vperm.xlu0 %728, %v726
      %v730 = vpop.permute.xlu0 %729
      %v732 = vmul.f32 %v722, %v730
      %v733 = vmul.f32 %v724, %v730
      %v734 = vld [vmem:[%s6] sm:$0xff]
      %736 = vset.pattern.permute.xlu0 0
      %737 = vperm.xlu0 %736, %v734
      %v738 = vpop.permute.xlu0 %737
      %v740 = vadd.f32 %v732, %v738
      %v741 = vadd.f32 %v733, %v738
      %v742 = vmax.f32 %v740, 0.0
      %v743 = vmax.f32 %v741, 0.0
      %744 = vst [vmem:[%s521] sm:$0xff] %v742
      %745 = vst [vmem:[%s521 + $0x8] sm:$0xff] %v743
      %v746 = vld [vmem:[%s1] sm:$0xf]
      %vm747 = vcmask 1043456
      %v749 = vsel %vm747, %v746, 0
      %751 = vmatprep.subr.mxu0 0.0
      %752 = vmatpush1.msra.mxu0 0.0
      %753 = vmatprep.subr.mxu0 0.0
      %754 = vmatpush1.msra.mxu0 0.0
      %755 = vmatprep.subr.mxu0 0.0
      %756 = vmatpush1.msra.mxu0 0.0
      %757 = vmatprep.subr.mxu0 0.0
      %758 = vmatpush1.msra.mxu0 0.0
      %759 = vmatprep.subr.mxu0 0.0
      %760 = vmatpush1.msra.mxu0 0.0
      %761 = vmatprep.subr.mxu0 0.0
      %762 = vmatpush1.msra.mxu0 0.0
      %763 = vmatprep.subr.mxu0 0.0
      %764 = vmatpush1.msra.mxu0 0.0
      %765 = vmatprep.subr.mxu0 0.0
      %766 = vmatpush1.msra.mxu0 0.0
      %767 = vmatprep.subr.mxu0 0.0
      %768 = vmatpush1.msra.mxu0 0.0
      %769 = vmatprep.subr.mxu0 0.0
      %770 = vmatpush1.msra.mxu0 0.0
      %771 = vmatprep.subr.mxu0 0.0
      %772 = vmatpush1.msra.mxu0 0.0
      %773 = vmatprep.subr.mxu0 0.0
      %774 = vmatpush1.msra.mxu0 0.0
      %775 = vmatprep.subr.mxu0 0.0
      %776 = vmatpush1.msra.mxu0 0.0
      %777 = vmatprep.subr.mxu0 0.0
      %778 = vmatpush1.msra.mxu0 0.0
      %779 = vmatprep.subr.mxu0 0.0
      %780 = vmatpush1.msra.mxu0 0.0
      %781 = vmatprep.subr.mxu0 0.0
      %782 = vmatpush1.msra.mxu0 %v749
      %783 = vmatprep.subr.mxu0 0.0
      %784 = vmatpush2.msra.mxu0 0.0
      %785 = vmatprep.subr.mxu0 0.0
      %786 = vmatpush2.msra.mxu0 0.0
      %787 = vmatprep.subr.mxu0 0.0
      %788 = vmatpush2.msra.mxu0 0.0
      %789 = vmatprep.subr.mxu0 0.0
      %790 = vmatpush2.msra.mxu0 0.0
      %791 = vmatprep.subr.mxu0 0.0
      %792 = vmatpush2.msra.mxu0 0.0
      %793 = vmatprep.subr.mxu0 0.0
      %794 = vmatpush2.msra.mxu0 0.0
      %795 = vmatprep.subr.mxu0 0.0
      %796 = vmatpush2.msra.mxu0 0.0
      %797 = vmatprep.subr.mxu0 0.0
      %798 = vmatpush2.msra.mxu0 0.0
      %799 = vmatprep.subr.mxu0 0.0
      %800 = vmatpush2.msra.mxu0 0.0
      %801 = vmatprep.subr.mxu0 0.0
      %802 = vmatpush2.msra.mxu0 0.0
      %803 = vmatprep.subr.mxu0 0.0
      %804 = vmatpush2.msra.mxu0 0.0
      %805 = vmatprep.subr.mxu0 0.0
      %806 = vmatpush2.msra.mxu0 0.0
      %807 = vmatprep.subr.mxu0 0.0
      %808 = vmatpush2.msra.mxu0 0.0
      %809 = vmatprep.subr.mxu0 0.0
      %810 = vmatpush2.msra.mxu0 0.0
      %811 = vmatprep.subr.mxu0 0.0
      %812 = vmatpush2.msra.mxu0 0.0
      %813 = vmatprep.subr.mxu0 0.0
      %814 = vmatpush2.msra.mxu0 0.0
      %815 = vmatprep.mubr.f32.mxu0 0.0
      %816 = vmatmul.mubr.f32.gmra.mxu0 %v560
      %v817 = vpop.f32.mrf.mxu0
      %v818 = vadd.f32 0.0, %v817
      %v819 = vpop.f32.mrf.mxu0
      %820 = vmatprep.mubr.f32.mxu0 0.0
      %821 = vmatmul.mubr.f32.gmra.mxu0 %v563
      %v822 = vpop.f32.mrf.mxu0
      %v823 = vadd.f32 0.0, %v822
      %v824 = vpop.f32.mrf.mxu0
      %825 = vmatprep.mubr.f32.mxu0 0.0
      %826 = vmatmul.mubr.f32.gmra.mxu0 %v566
      %v827 = vpop.f32.mrf.mxu0
      %v828 = vadd.f32 0.0, %v827
      %v829 = vpop.f32.mrf.mxu0
      %830 = vmatprep.mubr.f32.mxu0 0.0
      %831 = vmatmul.mubr.f32.gmra.mxu0 %v569
      %v832 = vpop.f32.mrf.mxu0
      %v833 = vadd.f32 0.0, %v832
      %v834 = vpop.f32.mrf.mxu0
      %835 = vmatprep.mubr.f32.mxu0 0.0
      %836 = vmatmul.mubr.f32.gmra.mxu0 %v572
      %v837 = vpop.f32.mrf.mxu0
      %v838 = vadd.f32 0.0, %v837
      %v839 = vpop.f32.mrf.mxu0
      %840 = vmatprep.mubr.f32.mxu0 0.0
      %841 = vmatmul.mubr.f32.gmra.mxu0 %v575
      %v842 = vpop.f32.mrf.mxu0
      %v843 = vadd.f32 0.0, %v842
      %v844 = vpop.f32.mrf.mxu0
      %845 = vmatprep.mubr.f32.mxu0 0.0
      %846 = vmatmul.mubr.f32.gmra.mxu0 %v578
      %v847 = vpop.f32.mrf.mxu0
      %v848 = vadd.f32 0.0, %v847
      %v849 = vpop.f32.mrf.mxu0
      %850 = vmatprep.mubr.f32.mxu0 0.0
      %851 = vmatmul.mubr.f32.gmra.mxu0 %v581
      %v852 = vpop.f32.mrf.mxu0
      %v853 = vadd.f32 0.0, %v852
      %v854 = vpop.f32.mrf.mxu0
      %855 = vmatprep.mubr.f32.mxu0 0.0
      %856 = vmatmul.mubr.f32.gmra.mxu0 %v584
      %v857 = vpop.f32.mrf.mxu0
      %v858 = vadd.f32 0.0, %v857
      %v859 = vpop.f32.mrf.mxu0
      %860 = vmatprep.mubr.f32.mxu0 0.0
      %861 = vmatmul.mubr.f32.gmra.mxu0 %v587
      %v862 = vpop.f32.mrf.mxu0
      %v863 = vadd.f32 0.0, %v862
      %v864 = vpop.f32.mrf.mxu0
      %865 = vmatprep.mubr.f32.mxu0 0.0
      %866 = vmatmul.mubr.f32.gmra.mxu0 %v590
      %v867 = vpop.f32.mrf.mxu0
      %v868 = vadd.f32 0.0, %v867
      %v869 = vpop.f32.mrf.mxu0
      %870 = vmatprep.mubr.f32.mxu0 0.0
      %871 = vmatmul.mubr.f32.gmra.mxu0 %v593
      %v872 = vpop.f32.mrf.mxu0
      %v873 = vadd.f32 0.0, %v872
      %v874 = vpop.f32.mrf.mxu0
      %875 = vmatprep.mubr.f32.mxu0 0.0
      %876 = vmatmul.mubr.f32.gmra.mxu0 %v596
      %v877 = vpop.f32.mrf.mxu0
      %v878 = vadd.f32 0.0, %v877
      %v879 = vpop.f32.mrf.mxu0
      %880 = vmatprep.mubr.f32.mxu0 0.0
      %881 = vmatmul.mubr.f32.gmra.mxu0 %v599
      %v882 = vpop.f32.mrf.mxu0
      %v883 = vadd.f32 0.0, %v882
      %v884 = vpop.f32.mrf.mxu0
      %885 = vmatprep.mubr.f32.mxu0 0.0
      %886 = vmatmul.mubr.f32.gmra.mxu0 %v602
      %v887 = vpop.f32.mrf.mxu0
      %v888 = vadd.f32 0.0, %v887
      %v889 = vpop.f32.mrf.mxu0
      %890 = vmatprep.mubr.f32.mxu0 0.0
      %891 = vmatmul.mubr.f32.gmra.mxu0 %v605
      %v892 = vpop.f32.mrf.mxu0
      %v893 = vadd.f32 0.0, %v892
      %v894 = vpop.f32.mrf.mxu0
      %895 = vmatprep.mubr.f32.mxu0 0.0
      %896 = vmatmul.mubr.f32.gmra.mxu0 %v608
      %v897 = vpop.f32.mrf.mxu0
      %v898 = vadd.f32 0.0, %v897
      %v899 = vpop.f32.mrf.mxu0
      %900 = vmatprep.mubr.f32.mxu0 0.0
      %901 = vmatmul.mubr.f32.gmra.mxu0 %v611
      %v902 = vpop.f32.mrf.mxu0
      %v903 = vadd.f32 0.0, %v902
      %v904 = vpop.f32.mrf.mxu0
      %905 = vmatprep.mubr.f32.mxu0 0.0
      %906 = vmatmul.mubr.f32.gmra.mxu0 %v614
      %v907 = vpop.f32.mrf.mxu0
      %v908 = vadd.f32 0.0, %v907
      %v909 = vpop.f32.mrf.mxu0
      %910 = vmatprep.mubr.f32.mxu0 0.0
      %911 = vmatmul.mubr.f32.gmra.mxu0 %v617
      %v912 = vpop.f32.mrf.mxu0
      %v913 = vadd.f32 0.0, %v912
      %v914 = vpop.f32.mrf.mxu0
      %915 = vmatprep.mubr.f32.mxu0 0.0
      %916 = vmatmul.mubr.f32.gmra.mxu0 %v620
      %v917 = vpop.f32.mrf.mxu0
      %v918 = vadd.f32 0.0, %v917
      %v919 = vpop.f32.mrf.mxu0
      %920 = vmatprep.mubr.f32.mxu0 0.0
      %921 = vmatmul.mubr.f32.gmra.mxu0 %v623
      %v922 = vpop.f32.mrf.mxu0
      %v923 = vadd.f32 0.0, %v922
      %v924 = vpop.f32.mrf.mxu0
      %925 = vmatprep.mubr.f32.mxu0 0.0
      %926 = vmatmul.mubr.f32.gmra.mxu0 %v626
      %v927 = vpop.f32.mrf.mxu0
      %v928 = vadd.f32 0.0, %v927
      %v929 = vpop.f32.mrf.mxu0
      %930 = vmatprep.mubr.f32.mxu0 0.0
      %931 = vmatmul.mubr.f32.gmra.mxu0 %v629
      %v932 = vpop.f32.mrf.mxu0
      %v933 = vadd.f32 0.0, %v932
      %v934 = vpop.f32.mrf.mxu0
      %935 = vmatprep.mubr.f32.mxu0 0.0
      %936 = vmatmul.mubr.f32.gmra.mxu0 %v632
      %v937 = vpop.f32.mrf.mxu0
      %v938 = vadd.f32 0.0, %v937
      %v939 = vpop.f32.mrf.mxu0
      %940 = vmatprep.mubr.f32.mxu0 0.0
      %941 = vmatmul.mubr.f32.gmra.mxu0 %v635
      %v942 = vpop.f32.mrf.mxu0
      %v943 = vadd.f32 0.0, %v942
      %v944 = vpop.f32.mrf.mxu0
      %945 = vmatprep.mubr.f32.mxu0 0.0
      %946 = vmatmul.mubr.f32.gmra.mxu0 %v638
      %v947 = vpop.f32.mrf.mxu0
      %v948 = vadd.f32 0.0, %v947
      %v949 = vpop.f32.mrf.mxu0
      %950 = vmatprep.mubr.f32.mxu0 0.0
      %951 = vmatmul.mubr.f32.gmra.mxu0 %v641
      %v952 = vpop.f32.mrf.mxu0
      %v953 = vadd.f32 0.0, %v952
      %v954 = vpop.f32.mrf.mxu0
      %955 = vmatprep.mubr.f32.mxu0 0.0
      %956 = vmatmul.mubr.f32.gmra.mxu0 %v644
      %v957 = vpop.f32.mrf.mxu0
      %v958 = vadd.f32 0.0, %v957
      %v959 = vpop.f32.mrf.mxu0
      %960 = vmatprep.mubr.f32.mxu0 0.0
      %961 = vmatmul.mubr.f32.gmra.mxu0 %v647
      %v962 = vpop.f32.mrf.mxu0
      %v963 = vadd.f32 0.0, %v962
      %v964 = vpop.f32.mrf.mxu0
      %965 = vmatprep.mubr.f32.mxu0 0.0
      %966 = vmatmul.mubr.f32.gmra.mxu0 %v650
      %v967 = vpop.f32.mrf.mxu0
      %v968 = vadd.f32 0.0, %v967
      %v969 = vpop.f32.mrf.mxu0
      %970 = vmatprep.mubr.f32.mxu0 0.0
      %971 = vmatmul.mubr.f32.gmra.mxu0 %v653
      %v972 = vpop.f32.mrf.mxu0
      %v973 = vadd.f32 0.0, %v972
      %v974 = vpop.f32.mrf.mxu0
      %975 = vdwg.mxu0
      %v976 = vld [vmem:[%s2] sm:$0x1]
      %v978 = vlaneseq
      %v979 = vshrl.u32 %v978, 7
      %v980 = vsub.s32 0, %v979
      %v981 = vrot.slane %v976, %v980
      %v983 = vmul.f32 %v818, %v981
      %v984 = vmul.f32 %v823, %v981
      %v985 = vmul.f32 %v828, %v981
      %v986 = vmul.f32 %v833, %v981
      %v987 = vmul.f32 %v838, %v981
      %v988 = vmul.f32 %v843, %v981
      %v989 = vmul.f32 %v848, %v981
      %v990 = vmul.f32 %v853, %v981
      %v991 = vmul.f32 %v858, %v981
      %v992 = vmul.f32 %v863, %v981
      %v993 = vmul.f32 %v868, %v981
      %v994 = vmul.f32 %v873, %v981
      %v995 = vmul.f32 %v878, %v981
      %v996 = vmul.f32 %v883, %v981
      %v997 = vmul.f32 %v888, %v981
      %v998 = vmul.f32 %v893, %v981
      %v999 = vmul.f32 %v898, %v981
      %v1000 = vmul.f32 %v903, %v981
      %v1001 = vmul.f32 %v908, %v981
      %v1002 = vmul.f32 %v913, %v981
      %v1003 = vmul.f32 %v918, %v981
      %v1004 = vmul.f32 %v923, %v981
      %v1005 = vmul.f32 %v928, %v981
      %v1006 = vmul.f32 %v933, %v981
      %v1007 = vmul.f32 %v938, %v981
      %v1008 = vmul.f32 %v943, %v981
      %v1009 = vmul.f32 %v948, %v981
      %v1010 = vmul.f32 %v953, %v981
      %v1011 = vmul.f32 %v958, %v981
      %v1012 = vmul.f32 %v963, %v981
      %v1013 = vmul.f32 %v968, %v981
      %v1014 = vmul.f32 %v973, %v981
      %v1015 = vld [vmem:[%s3] sm:$0x1]
      %v1017 = vlaneseq
      %v1018 = vshrl.u32 %v1017, 7
      %v1019 = vsub.s32 0, %v1018
      %v1020 = vrot.slane %v1015, %v1019
      %v1022 = vadd.f32 %v983, %v1020
      %v1023 = vadd.f32 %v984, %v1020
      %v1024 = vadd.f32 %v985, %v1020
      %v1025 = vadd.f32 %v986, %v1020
      %v1026 = vadd.f32 %v987, %v1020
      %v1027 = vadd.f32 %v988, %v1020
      %v1028 = vadd.f32 %v989, %v1020
      %v1029 = vadd.f32 %v990, %v1020
      %v1030 = vadd.f32 %v991, %v1020
      %v1031 = vadd.f32 %v992, %v1020
      %v1032 = vadd.f32 %v993, %v1020
      %v1033 = vadd.f32 %v994, %v1020
      %v1034 = vadd.f32 %v995, %v1020
      %v1035 = vadd.f32 %v996, %v1020
      %v1036 = vadd.f32 %v997, %v1020
      %v1037 = vadd.f32 %v998, %v1020
      %v1038 = vadd.f32 %v999, %v1020
      %v1039 = vadd.f32 %v1000, %v1020
      %v1040 = vadd.f32 %v1001, %v1020
      %v1041 = vadd.f32 %v1002, %v1020
      %v1042 = vadd.f32 %v1003, %v1020
      %v1043 = vadd.f32 %v1004, %v1020
      %v1044 = vadd.f32 %v1005, %v1020
      %v1045 = vadd.f32 %v1006, %v1020
      %v1046 = vadd.f32 %v1007, %v1020
      %v1047 = vadd.f32 %v1008, %v1020
      %v1048 = vadd.f32 %v1009, %v1020
      %v1049 = vadd.f32 %v1010, %v1020
      %v1050 = vadd.f32 %v1011, %v1020
      %v1051 = vadd.f32 %v1012, %v1020
      %v1052 = vadd.f32 %v1013, %v1020
      %v1053 = vadd.f32 %v1014, %v1020
      %v1054 = vmax.f32 %v1022, 0.0
      %v1055 = vmax.f32 %v1023, 0.0
      %v1056 = vmax.f32 %v1024, 0.0
      %v1057 = vmax.f32 %v1025, 0.0
      %v1058 = vmax.f32 %v1026, 0.0
      %v1059 = vmax.f32 %v1027, 0.0
      %v1060 = vmax.f32 %v1028, 0.0
      %v1061 = vmax.f32 %v1029, 0.0
      %v1062 = vmax.f32 %v1030, 0.0
      %v1063 = vmax.f32 %v1031, 0.0
      %v1064 = vmax.f32 %v1032, 0.0
      %v1065 = vmax.f32 %v1033, 0.0
      %v1066 = vmax.f32 %v1034, 0.0
      %v1067 = vmax.f32 %v1035, 0.0
      %v1068 = vmax.f32 %v1036, 0.0
      %v1069 = vmax.f32 %v1037, 0.0
      %v1070 = vmax.f32 %v1038, 0.0
      %v1071 = vmax.f32 %v1039, 0.0
      %v1072 = vmax.f32 %v1040, 0.0
      %v1073 = vmax.f32 %v1041, 0.0
      %v1074 = vmax.f32 %v1042, 0.0
      %v1075 = vmax.f32 %v1043, 0.0
      %v1076 = vmax.f32 %v1044, 0.0
      %v1077 = vmax.f32 %v1045, 0.0
      %v1078 = vmax.f32 %v1046, 0.0
      %v1079 = vmax.f32 %v1047, 0.0
      %v1080 = vmax.f32 %v1048, 0.0
      %v1081 = vmax.f32 %v1049, 0.0
      %v1082 = vmax.f32 %v1050, 0.0
      %v1083 = vmax.f32 %v1051, 0.0
      %v1084 = vmax.f32 %v1052, 0.0
      %v1085 = vmax.f32 %v1053, 0.0
      %1086 = vst.msk [vmem:[#allocation2] sm:$0xff] %vm555, 0.0
      %1087 = vst.msk [vmem:[#allocation2 + $0x8] sm:$0xff] %vm555, 0.0
      %vm1088 = vcmask 25600
      %1089 = vst.msk [vmem:[#allocation2 + $0x10] sm:$0x3] %vm1088, 0.0
      %1090 = vst.msk [vmem:[#allocation2 + $0x18] sm:$0xff] %vm555, 0.0
      %1091 = vst.msk [vmem:[#allocation2 + $0x20] sm:$0xff] %vm555, 0.0
      %1092 = vst.msk [vmem:[#allocation2 + $0x28] sm:$0x3] %vm1088, 0.0
      %1093 = vst.msk [vmem:[#allocation2 + $0x30] sm:$0xff] %vm555, 0.0
      %1094 = vst.msk [vmem:[#allocation2 + $0x38] sm:$0xff] %vm555, 0.0
      %1095 = vst.msk [vmem:[#allocation2 + $0x40] sm:$0x3] %vm1088, 0.0
      %1096 = vst.msk [vmem:[#allocation2 + $0x48] sm:$0xff] %vm555, 0.0
      %1097 = vst.msk [vmem:[#allocation2 + $0x50] sm:$0xff] %vm555, 0.0
      %1098 = vst.msk [vmem:[#allocation2 + $0x58] sm:$0x3] %vm1088, 0.0
      %1099 = vst.msk [vmem:[#allocation2 + $0x60] sm:$0xff] %vm555, 0.0
      %1100 = vst.msk [vmem:[#allocation2 + $0x68] sm:$0xff] %vm555, 0.0
      %1101 = vst.msk [vmem:[#allocation2 + $0x70] sm:$0x3] %vm1088, 0.0
      %1102 = vst.msk [vmem:[#allocation2 + $0x78] sm:$0xff] %vm555, 0.0
      %1103 = vst.msk [vmem:[#allocation2 + $0x80] sm:$0xff] %vm555, 0.0
      %1104 = vst.msk [vmem:[#allocation2 + $0x88] sm:$0x3] %vm1088, 0.0
      %1105 = vst.msk [vmem:[#allocation2 + $0x90] sm:$0xff] %vm555, 0.0
      %1106 = vst.msk [vmem:[#allocation2 + $0x98] sm:$0xff] %vm555, 0.0
      %1107 = vst.msk [vmem:[#allocation2 + $0xa0] sm:$0x3] %vm1088, 0.0
      %1108 = vst.msk [vmem:[#allocation2 + $0xa8] sm:$0xff] %vm555, 0.0
      %1109 = vst.msk [vmem:[#allocation2 + $0xb0] sm:$0xff] %vm555, 0.0
      %1110 = vst.msk [vmem:[#allocation2 + $0xb8] sm:$0x3] %vm1088, 0.0
      %1111 = vst.msk [vmem:[#allocation2 + $0xc0] sm:$0xff] %vm555, 0.0
      %1112 = vst.msk [vmem:[#allocation2 + $0xc8] sm:$0xff] %vm555, 0.0
      %1113 = vst.msk [vmem:[#allocation2 + $0xd0] sm:$0x3] %vm1088, 0.0
      %1114 = vst.msk [vmem:[#allocation2 + $0xd8] sm:$0xff] %vm555, 0.0
      %1115 = vst.msk [vmem:[#allocation2 + $0xe0] sm:$0xff] %vm555, 0.0
      %1116 = vst.msk [vmem:[#allocation2 + $0xe8] sm:$0x3] %vm1088, 0.0
      %1117 = vst.msk [vmem:[#allocation2 + $0xf0] sm:$0xff] %vm555, 0.0
      %1118 = vst.msk [vmem:[#allocation2 + $0xf8] sm:$0xff] %vm555, 0.0
      %1119 = vst.msk [vmem:[#allocation2 + $0x100] sm:$0x3] %vm1088, 0.0
      %1120 = vst.msk [vmem:[#allocation2 + $0x108] sm:$0xff] %vm555, 0.0
      %1121 = vst.msk [vmem:[#allocation2 + $0x110] sm:$0xff] %vm555, 0.0
      %1122 = vst.msk [vmem:[#allocation2 + $0x118] sm:$0x3] %vm1088, 0.0
      %1123 = vst.msk [vmem:[#allocation2 + $0x120] sm:$0xff] %vm555, 0.0
      %1124 = vst.msk [vmem:[#allocation2 + $0x128] sm:$0xff] %vm555, 0.0
      %1125 = vst.msk [vmem:[#allocation2 + $0x130] sm:$0x3] %vm1088, 0.0
      %1126 = vst.msk [vmem:[#allocation2 + $0x138] sm:$0xff] %vm555, 0.0
      %1127 = vst.msk [vmem:[#allocation2 + $0x140] sm:$0xff] %vm555, 0.0
      %1128 = vst.msk [vmem:[#allocation2 + $0x148] sm:$0x3] %vm1088, 0.0
      %1129 = vst.msk [vmem:[#allocation2 + $0x150] sm:$0xff] %vm555, 0.0
      %1130 = vst.msk [vmem:[#allocation2 + $0x158] sm:$0xff] %vm555, 0.0
      %1131 = vst.msk [vmem:[#allocation2 + $0x160] sm:$0x3] %vm1088, 0.0
      %1132 = vst.msk [vmem:[#allocation2 + $0x168] sm:$0xff] %vm555, 0.0
      %1133 = vst.msk [vmem:[#allocation2 + $0x170] sm:$0xff] %vm555, 0.0
      %1134 = vst.msk [vmem:[#allocation2 + $0x178] sm:$0x3] %vm1088, 0.0
      %1135 = vst.msk [vmem:[#allocation2 + $0x180] sm:$0xff] %vm555, 0.0
      %1136 = vst.msk [vmem:[#allocation2 + $0x188] sm:$0xff] %vm555, 0.0
      %1137 = vst.msk [vmem:[#allocation2 + $0x190] sm:$0x3] %vm1088, 0.0
      %1138 = vst.msk [vmem:[#allocation2 + $0x198] sm:$0xff] %vm555, 0.0
      %1139 = vst.msk [vmem:[#allocation2 + $0x1a0] sm:$0xff] %vm555, 0.0
      %1140 = vst.msk [vmem:[#allocation2 + $0x1a8] sm:$0x3] %vm1088, 0.0
      %s1141 = scalar_lea.vmem [#allocation2], 24
      %1142 = vst.msk [vmem:[%s1141 + $0x1] sm:$0xff] %vm555, %v1054
      %1143 = vst.msk [vmem:[%s1141 + $0x9] sm:$0xff] %vm555, %v1055
      %1144 = vst.msk [vmem:[%s1141 + $0x19] sm:$0xff] %vm555, %v1056
      %1145 = vst.msk [vmem:[%s1141 + $0x21] sm:$0xff] %vm555, %v1057
      %1146 = vst.msk [vmem:[%s1141 + $0x31] sm:$0xff] %vm555, %v1058
      %1147 = vst.msk [vmem:[%s1141 + $0x39] sm:$0xff] %vm555, %v1059
      %1148 = vst.msk [vmem:[%s1141 + $0x49] sm:$0xff] %vm555, %v1060
      %1149 = vst.msk [vmem:[%s1141 + $0x51] sm:$0xff] %vm555, %v1061
      %1150 = vst.msk [vmem:[%s1141 + $0x61] sm:$0xff] %vm555, %v1062
      %1151 = vst.msk [vmem:[%s1141 + $0x69] sm:$0xff] %vm555, %v1063
      %1152 = vst.msk [vmem:[%s1141 + $0x79] sm:$0xff] %vm555, %v1064
      %1153 = vst.msk [vmem:[%s1141 + $0x81] sm:$0xff] %vm555, %v1065
      %1154 = vst.msk [vmem:[%s1141 + $0x91] sm:$0xff] %vm555, %v1066
      %1155 = vst.msk [vmem:[%s1141 + $0x99] sm:$0xff] %vm555, %v1067
      %1156 = vst.msk [vmem:[%s1141 + $0xa9] sm:$0xff] %vm555, %v1068
      %1157 = vst.msk [vmem:[%s1141 + $0xb1] sm:$0xff] %vm555, %v1069
      %1158 = vst.msk [vmem:[%s1141 + $0xc1] sm:$0xff] %vm555, %v1070
      %1159 = vst.msk [vmem:[%s1141 + $0xc9] sm:$0xff] %vm555, %v1071
      %1160 = vst.msk [vmem:[%s1141 + $0xd9] sm:$0xff] %vm555, %v1072
      %1161 = vst.msk [vmem:[%s1141 + $0xe1] sm:$0xff] %vm555, %v1073
      %1162 = vst.msk [vmem:[%s1141 + $0xf1] sm:$0xff] %vm555, %v1074
      %1163 = vst.msk [vmem:[%s1141 + $0xf9] sm:$0xff] %vm555, %v1075
      %1164 = vst.msk [vmem:[%s1141 + $0x109] sm:$0xff] %vm555, %v1076
      %1165 = vst.msk [vmem:[%s1141 + $0x111] sm:$0xff] %vm555, %v1077
      %1166 = vst.msk [vmem:[%s1141 + $0x121] sm:$0xff] %vm555, %v1078
      %1167 = vst.msk [vmem:[%s1141 + $0x129] sm:$0xff] %vm555, %v1079
      %1168 = vst.msk [vmem:[%s1141 + $0x139] sm:$0xff] %vm555, %v1080
      %1169 = vst.msk [vmem:[%s1141 + $0x141] sm:$0xff] %vm555, %v1081
      %1170 = vst.msk [vmem:[%s1141 + $0x151] sm:$0xff] %vm555, %v1082
      %1171 = vst.msk [vmem:[%s1141 + $0x159] sm:$0xff] %vm555, %v1083
      %1172 = vst.msk [vmem:[%s1141 + $0x169] sm:$0xff] %vm555, %v1084
      %1173 = vst.msk [vmem:[%s1141 + $0x171] sm:$0xff] %vm555, %v1085
      %v1174 = vld [vmem:[#allocation2] sm:$0xff]
      %v1175 = vld [vmem:[#allocation2 + $0x8] sm:$0xff]
      %v1176 = vld [vmem:[#allocation2 + $0x18] sm:$0xff]
      %v1177 = vld [vmem:[#allocation2 + $0x20] sm:$0xff]
      %v1178 = vld [vmem:[#allocation2 + $0x30] sm:$0xff]
      %v1179 = vld [vmem:[#allocation2 + $0x38] sm:$0xff]
      %v1180 = vld [vmem:[#allocation2 + $0x48] sm:$0xff]
      %v1181 = vld [vmem:[#allocation2 + $0x50] sm:$0xff]
      %v1182 = vld [vmem:[#allocation2 + $0x60] sm:$0xff]
      %v1183 = vld [vmem:[#allocation2 + $0x68] sm:$0xff]
      %v1184 = vld [vmem:[#allocation2 + $0x78] sm:$0xff]
      %v1185 = vld [vmem:[#allocation2 + $0x80] sm:$0xff]
      %v1186 = vld [vmem:[#allocation2 + $0x90] sm:$0xff]
      %v1187 = vld [vmem:[#allocation2 + $0x98] sm:$0xff]
      %v1188 = vld [vmem:[#allocation2 + $0xa8] sm:$0xff]
      %v1189 = vld [vmem:[#allocation2 + $0xb0] sm:$0xff]
      %v1190 = vld [vmem:[#allocation2 + $0xc0] sm:$0xff]
      %v1191 = vld [vmem:[#allocation2 + $0xc8] sm:$0xff]
      %v1192 = vld [vmem:[#allocation2 + $0xd8] sm:$0xff]
      %v1193 = vld [vmem:[#allocation2 + $0xe0] sm:$0xff]
      %v1194 = vld [vmem:[#allocation2 + $0xf0] sm:$0xff]
      %v1195 = vld [vmem:[#allocation2 + $0xf8] sm:$0xff]
      %v1196 = vld [vmem:[#allocation2 + $0x108] sm:$0xff]
      %v1197 = vld [vmem:[#allocation2 + $0x110] sm:$0xff]
      %v1198 = vld [vmem:[#allocation2 + $0x120] sm:$0xff]
      %v1199 = vld [vmem:[#allocation2 + $0x128] sm:$0xff]
      %v1200 = vld [vmem:[#allocation2 + $0x138] sm:$0xff]
      %v1201 = vld [vmem:[#allocation2 + $0x140] sm:$0xff]
      %v1202 = vld [vmem:[#allocation2 + $0x150] sm:$0xff]
      %v1203 = vld [vmem:[#allocation2 + $0x158] sm:$0xff]
      %v1204 = vld [vmem:[#allocation2 + $0x168] sm:$0xff]
      %v1205 = vld [vmem:[#allocation2 + $0x170] sm:$0xff]
      %v1206 = vld [vmem:[%s7] sm:$0xff]
      %v1207 = vld [vmem:[#allocation2 + $0x1] sm:$0xff]
      %v1208 = vld [vmem:[#allocation2 + $0x9] sm:$0xff]
      %v1209 = vld [vmem:[#allocation2 + $0x19] sm:$0xff]
      %v1210 = vld [vmem:[#allocation2 + $0x21] sm:$0xff]
      %v1211 = vld [vmem:[#allocation2 + $0x31] sm:$0xff]
      %v1212 = vld [vmem:[#allocation2 + $0x39] sm:$0xff]
      %v1213 = vld [vmem:[#allocation2 + $0x49] sm:$0xff]
      %v1214 = vld [vmem:[#allocation2 + $0x51] sm:$0xff]
      %v1215 = vld [vmem:[#allocation2 + $0x61] sm:$0xff]
      %v1216 = vld [vmem:[#allocation2 + $0x69] sm:$0xff]
      %v1217 = vld [vmem:[#allocation2 + $0x79] sm:$0xff]
      %v1218 = vld [vmem:[#allocation2 + $0x81] sm:$0xff]
      %v1219 = vld [vmem:[#allocation2 + $0x91] sm:$0xff]
      %v1220 = vld [vmem:[#allocation2 + $0x99] sm:$0xff]
      %v1221 = vld [vmem:[#allocation2 + $0xa9] sm:$0xff]
      %v1222 = vld [vmem:[#allocation2 + $0xb1] sm:$0xff]
      %v1223 = vld [vmem:[#allocation2 + $0xc1] sm:$0xff]
      %v1224 = vld [vmem:[#allocation2 + $0xc9] sm:$0xff]
      %v1225 = vld [vmem:[#allocation2 + $0xd9] sm:$0xff]
      %v1226 = vld [vmem:[#allocation2 + $0xe1] sm:$0xff]
      %v1227 = vld [vmem:[#allocation2 + $0xf1] sm:$0xff]
      %v1228 = vld [vmem:[#allocation2 + $0xf9] sm:$0xff]
      %v1229 = vld [vmem:[#allocation2 + $0x109] sm:$0xff]
      %v1230 = vld [vmem:[#allocation2 + $0x111] sm:$0xff]
      %v1231 = vld [vmem:[#allocation2 + $0x121] sm:$0xff]
      %v1232 = vld [vmem:[#allocation2 + $0x129] sm:$0xff]
      %v1233 = vld [vmem:[#allocation2 + $0x139] sm:$0xff]
      %v1234 = vld [vmem:[#allocation2 + $0x141] sm:$0xff]
      %v1235 = vld [vmem:[#allocation2 + $0x151] sm:$0xff]
      %v1236 = vld [vmem:[#allocation2 + $0x159] sm:$0xff]
      %v1237 = vld [vmem:[#allocation2 + $0x169] sm:$0xff]
      %v1238 = vld [vmem:[#allocation2 + $0x171] sm:$0xff]
      %s1239 = scalar_lea.vmem %s7, 8
      %v1240 = vld [vmem:[%s1239] sm:$0xff]
      %v1242 = vsel %vm555, %v1240, 0
      %v1245 = vsel %vm555, %v1207, 0
      %v1248 = vsel %vm555, %v1208, 0
      %v1251 = vsel %vm555, %v1209, 0
      %v1254 = vsel %vm555, %v1210, 0
      %v1257 = vsel %vm555, %v1211, 0
      %v1260 = vsel %vm555, %v1212, 0
      %v1263 = vsel %vm555, %v1213, 0
      %v1266 = vsel %vm555, %v1214, 0
      %v1269 = vsel %vm555, %v1215, 0
      %v1272 = vsel %vm555, %v1216, 0
      %v1275 = vsel %vm555, %v1217, 0
      %v1278 = vsel %vm555, %v1218, 0
      %v1281 = vsel %vm555, %v1219, 0
      %v1284 = vsel %vm555, %v1220, 0
      %v1287 = vsel %vm555, %v1221, 0
      %v1290 = vsel %vm555, %v1222, 0
      %v1293 = vsel %vm555, %v1223, 0
      %v1296 = vsel %vm555, %v1224, 0
      %v1299 = vsel %vm555, %v1225, 0
      %v1302 = vsel %vm555, %v1226, 0
      %v1305 = vsel %vm555, %v1227, 0
      %v1308 = vsel %vm555, %v1228, 0
      %v1311 = vsel %vm555, %v1229, 0
      %v1314 = vsel %vm555, %v1230, 0
      %v1317 = vsel %vm555, %v1231, 0
      %v1320 = vsel %vm555, %v1232, 0
      %v1323 = vsel %vm555, %v1233, 0
      %v1326 = vsel %vm555, %v1234, 0
      %v1329 = vsel %vm555, %v1235, 0
      %v1332 = vsel %vm555, %v1236, 0
      %v1335 = vsel %vm555, %v1237, 0
      %v1338 = vsel %vm555, %v1238, 0
      %1340 = vmatprep.subr.mxu0 0.0
      %1341 = vmatpush1.xpose.msra.mxu0 %v1290
      %1342 = vmatprep.subr.mxu0 0.0
      %1343 = vmatpush1.xpose.msra.mxu0 %v1287
      %1344 = vmatprep.subr.mxu0 0.0
      %1345 = vmatpush1.xpose.msra.mxu0 %v1284
      %1346 = vmatprep.subr.mxu0 0.0
      %1347 = vmatpush1.xpose.msra.mxu0 %v1281
      %1348 = vmatprep.subr.mxu0 0.0
      %1349 = vmatpush1.xpose.msra.mxu0 %v1278
      %1350 = vmatprep.subr.mxu0 0.0
      %1351 = vmatpush1.xpose.msra.mxu0 %v1275
      %1352 = vmatprep.subr.mxu0 0.0
      %1353 = vmatpush1.xpose.msra.mxu0 %v1272
      %1354 = vmatprep.subr.mxu0 0.0
      %1355 = vmatpush1.xpose.msra.mxu0 %v1269
      %1356 = vmatprep.subr.mxu0 0.0
      %1357 = vmatpush1.xpose.msra.mxu0 %v1266
      %1358 = vmatprep.subr.mxu0 0.0
      %1359 = vmatpush1.xpose.msra.mxu0 %v1263
      %1360 = vmatprep.subr.mxu0 0.0
      %1361 = vmatpush1.xpose.msra.mxu0 %v1260
      %1362 = vmatprep.subr.mxu0 0.0
      %1363 = vmatpush1.xpose.msra.mxu0 %v1257
      %1364 = vmatprep.subr.mxu0 0.0
      %1365 = vmatpush1.xpose.msra.mxu0 %v1254
      %1366 = vmatprep.subr.mxu0 0.0
      %1367 = vmatpush1.xpose.msra.mxu0 %v1251
      %1368 = vmatprep.subr.mxu0 0.0
      %1369 = vmatpush1.xpose.msra.mxu0 %v1248
      %1370 = vmatprep.subr.mxu0 0.0
      %1371 = vmatpush1.xpose.msra.mxu0 %v1245
      %1372 = vmatprep.subr.mxu0 0.0
      %1373 = vmatpush2.xpose.msra.mxu0 %v1338
      %1374 = vmatprep.subr.mxu0 0.0
      %1375 = vmatpush2.xpose.msra.mxu0 %v1335
      %1376 = vmatprep.subr.mxu0 0.0
      %1377 = vmatpush2.xpose.msra.mxu0 %v1332
      %1378 = vmatprep.subr.mxu0 0.0
      %1379 = vmatpush2.xpose.msra.mxu0 %v1329
      %1380 = vmatprep.subr.mxu0 0.0
      %1381 = vmatpush2.xpose.msra.mxu0 %v1326
      %1382 = vmatprep.subr.mxu0 0.0
      %1383 = vmatpush2.xpose.msra.mxu0 %v1323
      %1384 = vmatprep.subr.mxu0 0.0
      %1385 = vmatpush2.xpose.msra.mxu0 %v1320
      %1386 = vmatprep.subr.mxu0 0.0
      %1387 = vmatpush2.xpose.msra.mxu0 %v1317
      %1388 = vmatprep.subr.mxu0 0.0
      %1389 = vmatpush2.xpose.msra.mxu0 %v1314
      %1390 = vmatprep.subr.mxu0 0.0
      %1391 = vmatpush2.xpose.msra.mxu0 %v1311
      %1392 = vmatprep.subr.mxu0 0.0
      %1393 = vmatpush2.xpose.msra.mxu0 %v1308
      %1394 = vmatprep.subr.mxu0 0.0
      %1395 = vmatpush2.xpose.msra.mxu0 %v1305
      %1396 = vmatprep.subr.mxu0 0.0
      %1397 = vmatpush2.xpose.msra.mxu0 %v1302
      %1398 = vmatprep.subr.mxu0 0.0
      %1399 = vmatpush2.xpose.msra.mxu0 %v1299
      %1400 = vmatprep.subr.mxu0 0.0
      %1401 = vmatpush2.xpose.msra.mxu0 %v1296
      %1402 = vmatprep.subr.mxu0 0.0
      %1403 = vmatpush2.xpose.msra.mxu0 %v1293
      %1404 = vmatprep.mubr.f32.mxu0 0.0
      %1405 = vmatmul.mubr.f32.gmra.mxu0 %v1242
      %v1406 = vpop.f32.mrf.mxu0
      %v1407 = vadd.f32 0.0, %v1406
      %v1408 = vpop.f32.mrf.mxu0
      %v1409 = vadd.f32 0.0, %v1408
      %1410 = vdwg.mxu0
      %v1412 = vsel %vm555, %v1206, 0
      %v1415 = vsel %vm555, %v1174, 0
      %v1418 = vsel %vm555, %v1175, 0
      %v1421 = vsel %vm555, %v1176, 0
      %v1424 = vsel %vm555, %v1177, 0
      %v1427 = vsel %vm555, %v1178, 0
      %v1430 = vsel %vm555, %v1179, 0
      %v1433 = vsel %vm555, %v1180, 0
      %v1436 = vsel %vm555, %v1181, 0
      %v1439 = vsel %vm555, %v1182, 0
      %v1442 = vsel %vm555, %v1183, 0
      %v1445 = vsel %vm555, %v1184, 0
      %v1448 = vsel %vm555, %v1185, 0
      %v1451 = vsel %vm555, %v1186, 0
      %v1454 = vsel %vm555, %v1187, 0
      %v1457 = vsel %vm555, %v1188, 0
      %v1460 = vsel %vm555, %v1189, 0
      %v1463 = vsel %vm555, %v1190, 0
      %v1466 = vsel %vm555, %v1191, 0
      %v1469 = vsel %vm555, %v1192, 0
      %v1472 = vsel %vm555, %v1193, 0
      %v1475 = vsel %vm555, %v1194, 0
      %v1478 = vsel %vm555, %v1195, 0
      %v1481 = vsel %vm555, %v1196, 0
      %v1484 = vsel %vm555, %v1197, 0
      %v1487 = vsel %vm555, %v1198, 0
      %v1490 = vsel %vm555, %v1199, 0
      %v1493 = vsel %vm555, %v1200, 0
      %v1496 = vsel %vm555, %v1201, 0
      %v1499 = vsel %vm555, %v1202, 0
      %v1502 = vsel %vm555, %v1203, 0
      %v1505 = vsel %vm555, %v1204, 0
      %v1508 = vsel %vm555, %v1205, 0
      %1510 = vmatprep.subr.mxu0 0.0
      %1511 = vmatpush1.xpose.msra.mxu0 %v1460
      %1512 = vmatprep.subr.mxu0 0.0
      %1513 = vmatpush1.xpose.msra.mxu0 %v1457
      %1514 = vmatprep.subr.mxu0 0.0
      %1515 = vmatpush1.xpose.msra.mxu0 %v1454
      %1516 = vmatprep.subr.mxu0 0.0
      %1517 = vmatpush1.xpose.msra.mxu0 %v1451
      %1518 = vmatprep.subr.mxu0 0.0
      %1519 = vmatpush1.xpose.msra.mxu0 %v1448
      %1520 = vmatprep.subr.mxu0 0.0
      %1521 = vmatpush1.xpose.msra.mxu0 %v1445
      %1522 = vmatprep.subr.mxu0 0.0
      %1523 = vmatpush1.xpose.msra.mxu0 %v1442
      %1524 = vmatprep.subr.mxu0 0.0
      %1525 = vmatpush1.xpose.msra.mxu0 %v1439
      %1526 = vmatprep.subr.mxu0 0.0
      %1527 = vmatpush1.xpose.msra.mxu0 %v1436
      %1528 = vmatprep.subr.mxu0 0.0
      %1529 = vmatpush1.xpose.msra.mxu0 %v1433
      %1530 = vmatprep.subr.mxu0 0.0
      %1531 = vmatpush1.xpose.msra.mxu0 %v1430
      %1532 = vmatprep.subr.mxu0 0.0
      %1533 = vmatpush1.xpose.msra.mxu0 %v1427
      %1534 = vmatprep.subr.mxu0 0.0
      %1535 = vmatpush1.xpose.msra.mxu0 %v1424
      %1536 = vmatprep.subr.mxu0 0.0
      %1537 = vmatpush1.xpose.msra.mxu0 %v1421
      %1538 = vmatprep.subr.mxu0 0.0
      %1539 = vmatpush1.xpose.msra.mxu0 %v1418
      %1540 = vmatprep.subr.mxu0 0.0
      %1541 = vmatpush1.xpose.msra.mxu0 %v1415
      %1542 = vmatprep.subr.mxu0 0.0
      %1543 = vmatpush2.xpose.msra.mxu0 %v1508
      %1544 = vmatprep.subr.mxu0 0.0
      %1545 = vmatpush2.xpose.msra.mxu0 %v1505
      %1546 = vmatprep.subr.mxu0 0.0
      %1547 = vmatpush2.xpose.msra.mxu0 %v1502
      %1548 = vmatprep.subr.mxu0 0.0
      %1549 = vmatpush2.xpose.msra.mxu0 %v1499
      %1550 = vmatprep.subr.mxu0 0.0
      %1551 = vmatpush2.xpose.msra.mxu0 %v1496
      %1552 = vmatprep.subr.mxu0 0.0
      %1553 = vmatpush2.xpose.msra.mxu0 %v1493
      %1554 = vmatprep.subr.mxu0 0.0
      %1555 = vmatpush2.xpose.msra.mxu0 %v1490
      %1556 = vmatprep.subr.mxu0 0.0
      %1557 = vmatpush2.xpose.msra.mxu0 %v1487
      %1558 = vmatprep.subr.mxu0 0.0
      %1559 = vmatpush2.xpose.msra.mxu0 %v1484
      %1560 = vmatprep.subr.mxu0 0.0
      %1561 = vmatpush2.xpose.msra.mxu0 %v1481
      %1562 = vmatprep.subr.mxu0 0.0
      %1563 = vmatpush2.xpose.msra.mxu0 %v1478
      %1564 = vmatprep.subr.mxu0 0.0
      %1565 = vmatpush2.xpose.msra.mxu0 %v1475
      %1566 = vmatprep.subr.mxu0 0.0
      %1567 = vmatpush2.xpose.msra.mxu0 %v1472
      %1568 = vmatprep.subr.mxu0 0.0
      %1569 = vmatpush2.xpose.msra.mxu0 %v1469
      %1570 = vmatprep.subr.mxu0 0.0
      %1571 = vmatpush2.xpose.msra.mxu0 %v1466
      %1572 = vmatprep.subr.mxu0 0.0
      %1573 = vmatpush2.xpose.msra.mxu0 %v1463
      %1574 = vmatprep.mubr.f32.mxu0 0.0
      %1575 = vmatmul.mubr.f32.gmra.mxu0 %v1412
      %v1576 = vpop.f32.mrf.mxu0
      %v1577 = vadd.f32 %v1407, %v1576
      %v1578 = vpop.f32.mrf.mxu0
      %v1579 = vadd.f32 %v1409, %v1578
      %1580 = vdwg.mxu0
      %v1581 = vld [vmem:[#allocation2 + $0x2] sm:$0xff]
      %v1582 = vld [vmem:[#allocation2 + $0xa] sm:$0xff]
      %v1583 = vld [vmem:[#allocation2 + $0x1a] sm:$0xff]
      %v1584 = vld [vmem:[#allocation2 + $0x22] sm:$0xff]
      %v1585 = vld [vmem:[#allocation2 + $0x32] sm:$0xff]
      %v1586 = vld [vmem:[#allocation2 + $0x3a] sm:$0xff]
      %v1587 = vld [vmem:[#allocation2 + $0x4a] sm:$0xff]
      %v1588 = vld [vmem:[#allocation2 + $0x52] sm:$0xff]
      %v1589 = vld [vmem:[#allocation2 + $0x62] sm:$0xff]
      %v1590 = vld [vmem:[#allocation2 + $0x6a] sm:$0xff]
      %v1591 = vld [vmem:[#allocation2 + $0x7a] sm:$0xff]
      %v1592 = vld [vmem:[#allocation2 + $0x82] sm:$0xff]
      %v1593 = vld [vmem:[#allocation2 + $0x92] sm:$0xff]
      %v1594 = vld [vmem:[#allocation2 + $0x9a] sm:$0xff]
      %v1595 = vld [vmem:[#allocation2 + $0xaa] sm:$0xff]
      %v1596 = vld [vmem:[#allocation2 + $0xb2] sm:$0xff]
      %v1597 = vld [vmem:[#allocation2 + $0xc2] sm:$0xff]
      %v1598 = vld [vmem:[#allocation2 + $0xca] sm:$0xff]
      %v1599 = vld [vmem:[#allocation2 + $0xda] sm:$0xff]
      %v1600 = vld [vmem:[#allocation2 + $0xe2] sm:$0xff]
      %v1601 = vld [vmem:[#allocation2 + $0xf2] sm:$0xff]
      %v1602 = vld [vmem:[#allocation2 + $0xfa] sm:$0xff]
      %v1603 = vld [vmem:[#allocation2 + $0x10a] sm:$0xff]
      %v1604 = vld [vmem:[#allocation2 + $0x112] sm:$0xff]
      %v1605 = vld [vmem:[#allocation2 + $0x122] sm:$0xff]
      %v1606 = vld [vmem:[#allocation2 + $0x12a] sm:$0xff]
      %v1607 = vld [vmem:[#allocation2 + $0x13a] sm:$0xff]
      %v1608 = vld [vmem:[#allocation2 + $0x142] sm:$0xff]
      %v1609 = vld [vmem:[#allocation2 + $0x152] sm:$0xff]
      %v1610 = vld [vmem:[#allocation2 + $0x15a] sm:$0xff]
      %v1611 = vld [vmem:[#allocation2 + $0x16a] sm:$0xff]
      %v1612 = vld [vmem:[#allocation2 + $0x172] sm:$0xff]
      %s1613 = scalar_lea.vmem %s7, 16
      %v1614 = vld [vmem:[%s1613] sm:$0xff]
      %v1616 = vsel %vm555, %v1614, 0
      %v1619 = vsel %vm555, %v1581, 0
      %v1622 = vsel %vm555, %v1582, 0
      %v1625 = vsel %vm555, %v1583, 0
      %v1628 = vsel %vm555, %v1584, 0
      %v1631 = vsel %vm555, %v1585, 0
      %v1634 = vsel %vm555, %v1586, 0
      %v1637 = vsel %vm555, %v1587, 0
      %v1640 = vsel %vm555, %v1588, 0
      %v1643 = vsel %vm555, %v1589, 0
      %v1646 = vsel %vm555, %v1590, 0
      %v1649 = vsel %vm555, %v1591, 0
      %v1652 = vsel %vm555, %v1592, 0
      %v1655 = vsel %vm555, %v1593, 0
      %v1658 = vsel %vm555, %v1594, 0
      %v1661 = vsel %vm555, %v1595, 0
      %v1664 = vsel %vm555, %v1596, 0
      %v1667 = vsel %vm555, %v1597, 0
      %v1670 = vsel %vm555, %v1598, 0
      %v1673 = vsel %vm555, %v1599, 0
      %v1676 = vsel %vm555, %v1600, 0
      %v1679 = vsel %vm555, %v1601, 0
      %v1682 = vsel %vm555, %v1602, 0
      %v1685 = vsel %vm555, %v1603, 0
      %v1688 = vsel %vm555, %v1604, 0
      %v1691 = vsel %vm555, %v1605, 0
      %v1694 = vsel %vm555, %v1606, 0
      %v1697 = vsel %vm555, %v1607, 0
      %v1700 = vsel %vm555, %v1608, 0
      %v1703 = vsel %vm555, %v1609, 0
      %v1706 = vsel %vm555, %v1610, 0
      %v1709 = vsel %vm555, %v1611, 0
      %v1712 = vsel %vm555, %v1612, 0
      %1714 = vmatprep.subr.mxu0 0.0
      %1715 = vmatpush1.xpose.msra.mxu0 %v1664
      %1716 = vmatprep.subr.mxu0 0.0
      %1717 = vmatpush1.xpose.msra.mxu0 %v1661
      %1718 = vmatprep.subr.mxu0 0.0
      %1719 = vmatpush1.xpose.msra.mxu0 %v1658
      %1720 = vmatprep.subr.mxu0 0.0
      %1721 = vmatpush1.xpose.msra.mxu0 %v1655
      %1722 = vmatprep.subr.mxu0 0.0
      %1723 = vmatpush1.xpose.msra.mxu0 %v1652
      %1724 = vmatprep.subr.mxu0 0.0
      %1725 = vmatpush1.xpose.msra.mxu0 %v1649
      %1726 = vmatprep.subr.mxu0 0.0
      %1727 = vmatpush1.xpose.msra.mxu0 %v1646
      %1728 = vmatprep.subr.mxu0 0.0
      %1729 = vmatpush1.xpose.msra.mxu0 %v1643
      %1730 = vmatprep.subr.mxu0 0.0
      %1731 = vmatpush1.xpose.msra.mxu0 %v1640
      %1732 = vmatprep.subr.mxu0 0.0
      %1733 = vmatpush1.xpose.msra.mxu0 %v1637
      %1734 = vmatprep.subr.mxu0 0.0
      %1735 = vmatpush1.xpose.msra.mxu0 %v1634
      %1736 = vmatprep.subr.mxu0 0.0
      %1737 = vmatpush1.xpose.msra.mxu0 %v1631
      %1738 = vmatprep.subr.mxu0 0.0
      %1739 = vmatpush1.xpose.msra.mxu0 %v1628
      %1740 = vmatprep.subr.mxu0 0.0
      %1741 = vmatpush1.xpose.msra.mxu0 %v1625
      %1742 = vmatprep.subr.mxu0 0.0
      %1743 = vmatpush1.xpose.msra.mxu0 %v1622
      %1744 = vmatprep.subr.mxu0 0.0
      %1745 = vmatpush1.xpose.msra.mxu0 %v1619
      %1746 = vmatprep.subr.mxu0 0.0
      %1747 = vmatpush2.xpose.msra.mxu0 %v1712
      %1748 = vmatprep.subr.mxu0 0.0
      %1749 = vmatpush2.xpose.msra.mxu0 %v1709
      %1750 = vmatprep.subr.mxu0 0.0
      %1751 = vmatpush2.xpose.msra.mxu0 %v1706
      %1752 = vmatprep.subr.mxu0 0.0
      %1753 = vmatpush2.xpose.msra.mxu0 %v1703
      %1754 = vmatprep.subr.mxu0 0.0
      %1755 = vmatpush2.xpose.msra.mxu0 %v1700
      %1756 = vmatprep.subr.mxu0 0.0
      %1757 = vmatpush2.xpose.msra.mxu0 %v1697
      %1758 = vmatprep.subr.mxu0 0.0
      %1759 = vmatpush2.xpose.msra.mxu0 %v1694
      %1760 = vmatprep.subr.mxu0 0.0
      %1761 = vmatpush2.xpose.msra.mxu0 %v1691
      %1762 = vmatprep.subr.mxu0 0.0
      %1763 = vmatpush2.xpose.msra.mxu0 %v1688
      %1764 = vmatprep.subr.mxu0 0.0
      %1765 = vmatpush2.xpose.msra.mxu0 %v1685
      %1766 = vmatprep.subr.mxu0 0.0
      %1767 = vmatpush2.xpose.msra.mxu0 %v1682
      %1768 = vmatprep.subr.mxu0 0.0
      %1769 = vmatpush2.xpose.msra.mxu0 %v1679
      %1770 = vmatprep.subr.mxu0 0.0
      %1771 = vmatpush2.xpose.msra.mxu0 %v1676
      %1772 = vmatprep.subr.mxu0 0.0
      %1773 = vmatpush2.xpose.msra.mxu0 %v1673
      %1774 = vmatprep.subr.mxu0 0.0
      %1775 = vmatpush2.xpose.msra.mxu0 %v1670
      %1776 = vmatprep.subr.mxu0 0.0
      %1777 = vmatpush2.xpose.msra.mxu0 %v1667
      %1778 = vmatprep.mubr.f32.mxu0 0.0
      %1779 = vmatmul.mubr.f32.gmra.mxu0 %v1616
      %v1780 = vpop.f32.mrf.mxu0
      %v1781 = vadd.f32 0.0, %v1780
      %v1782 = vpop.f32.mrf.mxu0
      %v1783 = vadd.f32 0.0, %v1782
      %1784 = vdwg.mxu0
      %v1785 = vadd.f32 %v1577, %v1781
      %v1786 = vadd.f32 %v1579, %v1783
      %v1787 = vld [vmem:[%s1141] sm:$0xff]
      %v1788 = vld [vmem:[%s1141 + $0x8] sm:$0xff]
      %v1789 = vld [vmem:[%s1141 + $0x18] sm:$0xff]
      %v1790 = vld [vmem:[%s1141 + $0x20] sm:$0xff]
      %v1791 = vld [vmem:[%s1141 + $0x30] sm:$0xff]
      %v1792 = vld [vmem:[%s1141 + $0x38] sm:$0xff]
      %v1793 = vld [vmem:[%s1141 + $0x48] sm:$0xff]
      %v1794 = vld [vmem:[%s1141 + $0x50] sm:$0xff]
      %v1795 = vld [vmem:[%s1141 + $0x60] sm:$0xff]
      %v1796 = vld [vmem:[%s1141 + $0x68] sm:$0xff]
      %v1797 = vld [vmem:[%s1141 + $0x78] sm:$0xff]
      %v1798 = vld [vmem:[%s1141 + $0x80] sm:$0xff]
      %v1799 = vld [vmem:[%s1141 + $0x90] sm:$0xff]
      %v1800 = vld [vmem:[%s1141 + $0x98] sm:$0xff]
      %v1801 = vld [vmem:[%s1141 + $0xa8] sm:$0xff]
      %v1802 = vld [vmem:[%s1141 + $0xb0] sm:$0xff]
      %v1803 = vld [vmem:[%s1141 + $0xc0] sm:$0xff]
      %v1804 = vld [vmem:[%s1141 + $0xc8] sm:$0xff]
      %v1805 = vld [vmem:[%s1141 + $0xd8] sm:$0xff]
      %v1806 = vld [vmem:[%s1141 + $0xe0] sm:$0xff]
      %v1807 = vld [vmem:[%s1141 + $0xf0] sm:$0xff]
      %v1808 = vld [vmem:[%s1141 + $0xf8] sm:$0xff]
      %v1809 = vld [vmem:[%s1141 + $0x108] sm:$0xff]
      %v1810 = vld [vmem:[%s1141 + $0x110] sm:$0xff]
      %v1811 = vld [vmem:[%s1141 + $0x120] sm:$0xff]
      %v1812 = vld [vmem:[%s1141 + $0x128] sm:$0xff]
      %v1813 = vld [vmem:[%s1141 + $0x138] sm:$0xff]
      %v1814 = vld [vmem:[%s1141 + $0x140] sm:$0xff]
      %v1815 = vld [vmem:[%s1141 + $0x150] sm:$0xff]
      %v1816 = vld [vmem:[%s1141 + $0x158] sm:$0xff]
      %v1817 = vld [vmem:[%s1141 + $0x168] sm:$0xff]
      %v1818 = vld [vmem:[%s1141 + $0x170] sm:$0xff]
      %s1819 = scalar_lea.vmem %s7, 24
      %v1820 = vld [vmem:[%s1819] sm:$0xff]
      %v1822 = vsel %vm555, %v1820, 0
      %v1825 = vsel %vm555, %v1787, 0
      %v1828 = vsel %vm555, %v1788, 0
      %v1831 = vsel %vm555, %v1789, 0
      %v1834 = vsel %vm555, %v1790, 0
      %v1837 = vsel %vm555, %v1791, 0
      %v1840 = vsel %vm555, %v1792, 0
      %v1843 = vsel %vm555, %v1793, 0
      %v1846 = vsel %vm555, %v1794, 0
      %v1849 = vsel %vm555, %v1795, 0
      %v1852 = vsel %vm555, %v1796, 0
      %v1855 = vsel %vm555, %v1797, 0
      %v1858 = vsel %vm555, %v1798, 0
      %v1861 = vsel %vm555, %v1799, 0
      %v1864 = vsel %vm555, %v1800, 0
      %v1867 = vsel %vm555, %v1801, 0
      %v1870 = vsel %vm555, %v1802, 0
      %v1873 = vsel %vm555, %v1803, 0
      %v1876 = vsel %vm555, %v1804, 0
      %v1879 = vsel %vm555, %v1805, 0
      %v1882 = vsel %vm555, %v1806, 0
      %v1885 = vsel %vm555, %v1807, 0
      %v1888 = vsel %vm555, %v1808, 0
      %v1891 = vsel %vm555, %v1809, 0
      %v1894 = vsel %vm555, %v1810, 0
      %v1897 = vsel %vm555, %v1811, 0
      %v1900 = vsel %vm555, %v1812, 0
      %v1903 = vsel %vm555, %v1813, 0
      %v1906 = vsel %vm555, %v1814, 0
      %v1909 = vsel %vm555, %v1815, 0
      %v1912 = vsel %vm555, %v1816, 0
      %v1915 = vsel %vm555, %v1817, 0
      %v1918 = vsel %vm555, %v1818, 0
      %1920 = vmatprep.subr.mxu0 0.0
      %1921 = vmatpush1.xpose.msra.mxu0 %v1870
      %1922 = vmatprep.subr.mxu0 0.0
      %1923 = vmatpush1.xpose.msra.mxu0 %v1867
      %1924 = vmatprep.subr.mxu0 0.0
      %1925 = vmatpush1.xpose.msra.mxu0 %v1864
      %1926 = vmatprep.subr.mxu0 0.0
      %1927 = vmatpush1.xpose.msra.mxu0 %v1861
      %1928 = vmatprep.subr.mxu0 0.0
      %1929 = vmatpush1.xpose.msra.mxu0 %v1858
      %1930 = vmatprep.subr.mxu0 0.0
      %1931 = vmatpush1.xpose.msra.mxu0 %v1855
      %1932 = vmatprep.subr.mxu0 0.0
      %1933 = vmatpush1.xpose.msra.mxu0 %v1852
      %1934 = vmatprep.subr.mxu0 0.0
      %1935 = vmatpush1.xpose.msra.mxu0 %v1849
      %1936 = vmatprep.subr.mxu0 0.0
      %1937 = vmatpush1.xpose.msra.mxu0 %v1846
      %1938 = vmatprep.subr.mxu0 0.0
      %1939 = vmatpush1.xpose.msra.mxu0 %v1843
      %1940 = vmatprep.subr.mxu0 0.0
      %1941 = vmatpush1.xpose.msra.mxu0 %v1840
      %1942 = vmatprep.subr.mxu0 0.0
      %1943 = vmatpush1.xpose.msra.mxu0 %v1837
      %1944 = vmatprep.subr.mxu0 0.0
      %1945 = vmatpush1.xpose.msra.mxu0 %v1834
      %1946 = vmatprep.subr.mxu0 0.0
      %1947 = vmatpush1.xpose.msra.mxu0 %v1831
      %1948 = vmatprep.subr.mxu0 0.0
      %1949 = vmatpush1.xpose.msra.mxu0 %v1828
      %1950 = vmatprep.subr.mxu0 0.0
      %1951 = vmatpush1.xpose.msra.mxu0 %v1825
      %1952 = vmatprep.subr.mxu0 0.0
      %1953 = vmatpush2.xpose.msra.mxu0 %v1918
      %1954 = vmatprep.subr.mxu0 0.0
      %1955 = vmatpush2.xpose.msra.mxu0 %v1915
      %1956 = vmatprep.subr.mxu0 0.0
      %1957 = vmatpush2.xpose.msra.mxu0 %v1912
      %1958 = vmatprep.subr.mxu0 0.0
      %1959 = vmatpush2.xpose.msra.mxu0 %v1909
      %1960 = vmatprep.subr.mxu0 0.0
      %1961 = vmatpush2.xpose.msra.mxu0 %v1906
      %1962 = vmatprep.subr.mxu0 0.0
      %1963 = vmatpush2.xpose.msra.mxu0 %v1903
      %1964 = vmatprep.subr.mxu0 0.0
      %1965 = vmatpush2.xpose.msra.mxu0 %v1900
      %1966 = vmatprep.subr.mxu0 0.0
      %1967 = vmatpush2.xpose.msra.mxu0 %v1897
      %1968 = vmatprep.subr.mxu0 0.0
      %1969 = vmatpush2.xpose.msra.mxu0 %v1894
      %1970 = vmatprep.subr.mxu0 0.0
      %1971 = vmatpush2.xpose.msra.mxu0 %v1891
      %1972 = vmatprep.subr.mxu0 0.0
      %1973 = vmatpush2.xpose.msra.mxu0 %v1888
      %1974 = vmatprep.subr.mxu0 0.0
      %1975 = vmatpush2.xpose.msra.mxu0 %v1885
      %1976 = vmatprep.subr.mxu0 0.0
      %1977 = vmatpush2.xpose.msra.mxu0 %v1882
      %1978 = vmatprep.subr.mxu0 0.0
      %1979 = vmatpush2.xpose.msra.mxu0 %v1879
      %1980 = vmatprep.subr.mxu0 0.0
      %1981 = vmatpush2.xpose.msra.mxu0 %v1876
      %1982 = vmatprep.subr.mxu0 0.0
      %1983 = vmatpush2.xpose.msra.mxu0 %v1873
      %1984 = vmatprep.mubr.f32.mxu0 0.0
      %1985 = vmatmul.mubr.f32.gmra.mxu0 %v1822
      %v1986 = vpop.f32.mrf.mxu0
      %v1987 = vadd.f32 0.0, %v1986
      %v1988 = vpop.f32.mrf.mxu0
      %v1989 = vadd.f32 0.0, %v1988
      %1990 = vdwg.mxu0
      %v1991 = vadd.f32 %v1785, %v1987
      %v1992 = vadd.f32 %v1786, %v1989
      %v1993 = vld [vmem:[%s1141 + $0x1] sm:$0xff]
      %v1994 = vld [vmem:[%s1141 + $0x9] sm:$0xff]
      %v1995 = vld [vmem:[%s1141 + $0x19] sm:$0xff]
      %v1996 = vld [vmem:[%s1141 + $0x21] sm:$0xff]
      %v1997 = vld [vmem:[%s1141 + $0x31] sm:$0xff]
      %v1998 = vld [vmem:[%s1141 + $0x39] sm:$0xff]
      %v1999 = vld [vmem:[%s1141 + $0x49] sm:$0xff]
      %v2000 = vld [vmem:[%s1141 + $0x51] sm:$0xff]
      %v2001 = vld [vmem:[%s1141 + $0x61] sm:$0xff]
      %v2002 = vld [vmem:[%s1141 + $0x69] sm:$0xff]
      %v2003 = vld [vmem:[%s1141 + $0x79] sm:$0xff]
      %v2004 = vld [vmem:[%s1141 + $0x81] sm:$0xff]
      %v2005 = vld [vmem:[%s1141 + $0x91] sm:$0xff]
      %v2006 = vld [vmem:[%s1141 + $0x99] sm:$0xff]
      %v2007 = vld [vmem:[%s1141 + $0xa9] sm:$0xff]
      %v2008 = vld [vmem:[%s1141 + $0xb1] sm:$0xff]
      %v2009 = vld [vmem:[%s1141 + $0xc1] sm:$0xff]
      %v2010 = vld [vmem:[%s1141 + $0xc9] sm:$0xff]
      %v2011 = vld [vmem:[%s1141 + $0xd9] sm:$0xff]
      %v2012 = vld [vmem:[%s1141 + $0xe1] sm:$0xff]
      %v2013 = vld [vmem:[%s1141 + $0xf1] sm:$0xff]
      %v2014 = vld [vmem:[%s1141 + $0xf9] sm:$0xff]
      %v2015 = vld [vmem:[%s1141 + $0x109] sm:$0xff]
      %v2016 = vld [vmem:[%s1141 + $0x111] sm:$0xff]
      %v2017 = vld [vmem:[%s1141 + $0x121] sm:$0xff]
      %v2018 = vld [vmem:[%s1141 + $0x129] sm:$0xff]
      %v2019 = vld [vmem:[%s1141 + $0x139] sm:$0xff]
      %v2020 = vld [vmem:[%s1141 + $0x141] sm:$0xff]
      %v2021 = vld [vmem:[%s1141 + $0x151] sm:$0xff]
      %v2022 = vld [vmem:[%s1141 + $0x159] sm:$0xff]
      %v2023 = vld [vmem:[%s1141 + $0x169] sm:$0xff]
      %v2024 = vld [vmem:[%s1141 + $0x171] sm:$0xff]
      %s2025 = scalar_lea.vmem %s7, 32
      %v2026 = vld [vmem:[%s2025] sm:$0xff]
      %v2028 = vsel %vm555, %v2026, 0
      %v2031 = vsel %vm555, %v1993, 0
      %v2034 = vsel %vm555, %v1994, 0
      %v2037 = vsel %vm555, %v1995, 0
      %v2040 = vsel %vm555, %v1996, 0
      %v2043 = vsel %vm555, %v1997, 0
      %v2046 = vsel %vm555, %v1998, 0
      %v2049 = vsel %vm555, %v1999, 0
      %v2052 = vsel %vm555, %v2000, 0
      %v2055 = vsel %vm555, %v2001, 0
      %v2058 = vsel %vm555, %v2002, 0
      %v2061 = vsel %vm555, %v2003, 0
      %v2064 = vsel %vm555, %v2004, 0
      %v2067 = vsel %vm555, %v2005, 0
      %v2070 = vsel %vm555, %v2006, 0
      %v2073 = vsel %vm555, %v2007, 0
      %v2076 = vsel %vm555, %v2008, 0
      %v2079 = vsel %vm555, %v2009, 0
      %v2082 = vsel %vm555, %v2010, 0
      %v2085 = vsel %vm555, %v2011, 0
      %v2088 = vsel %vm555, %v2012, 0
      %v2091 = vsel %vm555, %v2013, 0
      %v2094 = vsel %vm555, %v2014, 0
      %v2097 = vsel %vm555, %v2015, 0
      %v2100 = vsel %vm555, %v2016, 0
      %v2103 = vsel %vm555, %v2017, 0
      %v2106 = vsel %vm555, %v2018, 0
      %v2109 = vsel %vm555, %v2019, 0
      %v2112 = vsel %vm555, %v2020, 0
      %v2115 = vsel %vm555, %v2021, 0
      %v2118 = vsel %vm555, %v2022, 0
      %v2121 = vsel %vm555, %v2023, 0
      %v2124 = vsel %vm555, %v2024, 0
      %2126 = vmatprep.subr.mxu0 0.0
      %2127 = vmatpush1.xpose.msra.mxu0 %v2076
      %2128 = vmatprep.subr.mxu0 0.0
      %2129 = vmatpush1.xpose.msra.mxu0 %v2073
      %2130 = vmatprep.subr.mxu0 0.0
      %2131 = vmatpush1.xpose.msra.mxu0 %v2070
      %2132 = vmatprep.subr.mxu0 0.0
      %2133 = vmatpush1.xpose.msra.mxu0 %v2067
      %2134 = vmatprep.subr.mxu0 0.0
      %2135 = vmatpush1.xpose.msra.mxu0 %v2064
      %2136 = vmatprep.subr.mxu0 0.0
      %2137 = vmatpush1.xpose.msra.mxu0 %v2061
      %2138 = vmatprep.subr.mxu0 0.0
      %2139 = vmatpush1.xpose.msra.mxu0 %v2058
      %2140 = vmatprep.subr.mxu0 0.0
      %2141 = vmatpush1.xpose.msra.mxu0 %v2055
      %2142 = vmatprep.subr.mxu0 0.0
      %2143 = vmatpush1.xpose.msra.mxu0 %v2052
      %2144 = vmatprep.subr.mxu0 0.0
      %2145 = vmatpush1.xpose.msra.mxu0 %v2049
      %2146 = vmatprep.subr.mxu0 0.0
      %2147 = vmatpush1.xpose.msra.mxu0 %v2046
      %2148 = vmatprep.subr.mxu0 0.0
      %2149 = vmatpush1.xpose.msra.mxu0 %v2043
      %2150 = vmatprep.subr.mxu0 0.0
      %2151 = vmatpush1.xpose.msra.mxu0 %v2040
      %2152 = vmatprep.subr.mxu0 0.0
      %2153 = vmatpush1.xpose.msra.mxu0 %v2037
      %2154 = vmatprep.subr.mxu0 0.0
      %2155 = vmatpush1.xpose.msra.mxu0 %v2034
      %2156 = vmatprep.subr.mxu0 0.0
      %2157 = vmatpush1.xpose.msra.mxu0 %v2031
      %2158 = vmatprep.subr.mxu0 0.0
      %2159 = vmatpush2.xpose.msra.mxu0 %v2124
      %2160 = vmatprep.subr.mxu0 0.0
      %2161 = vmatpush2.xpose.msra.mxu0 %v2121
      %2162 = vmatprep.subr.mxu0 0.0
      %2163 = vmatpush2.xpose.msra.mxu0 %v2118
      %2164 = vmatprep.subr.mxu0 0.0
      %2165 = vmatpush2.xpose.msra.mxu0 %v2115
      %2166 = vmatprep.subr.mxu0 0.0
      %2167 = vmatpush2.xpose.msra.mxu0 %v2112
      %2168 = vmatprep.subr.mxu0 0.0
      %2169 = vmatpush2.xpose.msra.mxu0 %v2109
      %2170 = vmatprep.subr.mxu0 0.0
      %2171 = vmatpush2.xpose.msra.mxu0 %v2106
      %2172 = vmatprep.subr.mxu0 0.0
      %2173 = vmatpush2.xpose.msra.mxu0 %v2103
      %2174 = vmatprep.subr.mxu0 0.0
      %2175 = vmatpush2.xpose.msra.mxu0 %v2100
      %2176 = vmatprep.subr.mxu0 0.0
      %2177 = vmatpush2.xpose.msra.mxu0 %v2097
      %2178 = vmatprep.subr.mxu0 0.0
      %2179 = vmatpush2.xpose.msra.mxu0 %v2094
      %2180 = vmatprep.subr.mxu0 0.0
      %2181 = vmatpush2.xpose.msra.mxu0 %v2091
      %2182 = vmatprep.subr.mxu0 0.0
      %2183 = vmatpush2.xpose.msra.mxu0 %v2088
      %2184 = vmatprep.subr.mxu0 0.0
      %2185 = vmatpush2.xpose.msra.mxu0 %v2085
      %2186 = vmatprep.subr.mxu0 0.0
      %2187 = vmatpush2.xpose.msra.mxu0 %v2082
      %2188 = vmatprep.subr.mxu0 0.0
      %2189 = vmatpush2.xpose.msra.mxu0 %v2079
      %2190 = vmatprep.mubr.f32.mxu0 0.0
      %2191 = vmatmul.mubr.f32.gmra.mxu0 %v2028
      %v2192 = vpop.f32.mrf.mxu0
      %v2193 = vadd.f32 0.0, %v2192
      %v2194 = vpop.f32.mrf.mxu0
      %v2195 = vadd.f32 0.0, %v2194
      %2196 = vdwg.mxu0
      %v2197 = vadd.f32 %v1991, %v2193
      %v2198 = vadd.f32 %v1992, %v2195
      %v2199 = vld [vmem:[%s1141 + $0x2] sm:$0xff]
      %v2200 = vld [vmem:[%s1141 + $0xa] sm:$0xff]
      %v2201 = vld [vmem:[%s1141 + $0x1a] sm:$0xff]
      %v2202 = vld [vmem:[%s1141 + $0x22] sm:$0xff]
      %v2203 = vld [vmem:[%s1141 + $0x32] sm:$0xff]
      %v2204 = vld [vmem:[%s1141 + $0x3a] sm:$0xff]
      %v2205 = vld [vmem:[%s1141 + $0x4a] sm:$0xff]
      %v2206 = vld [vmem:[%s1141 + $0x52] sm:$0xff]
      %v2207 = vld [vmem:[%s1141 + $0x62] sm:$0xff]
      %v2208 = vld [vmem:[%s1141 + $0x6a] sm:$0xff]
      %v2209 = vld [vmem:[%s1141 + $0x7a] sm:$0xff]
      %v2210 = vld [vmem:[%s1141 + $0x82] sm:$0xff]
      %v2211 = vld [vmem:[%s1141 + $0x92] sm:$0xff]
      %v2212 = vld [vmem:[%s1141 + $0x9a] sm:$0xff]
      %v2213 = vld [vmem:[%s1141 + $0xaa] sm:$0xff]
      %v2214 = vld [vmem:[%s1141 + $0xb2] sm:$0xff]
      %v2215 = vld [vmem:[%s1141 + $0xc2] sm:$0xff]
      %v2216 = vld [vmem:[%s1141 + $0xca] sm:$0xff]
      %v2217 = vld [vmem:[%s1141 + $0xda] sm:$0xff]
      %v2218 = vld [vmem:[%s1141 + $0xe2] sm:$0xff]
      %v2219 = vld [vmem:[%s1141 + $0xf2] sm:$0xff]
      %v2220 = vld [vmem:[%s1141 + $0xfa] sm:$0xff]
      %v2221 = vld [vmem:[%s1141 + $0x10a] sm:$0xff]
      %v2222 = vld [vmem:[%s1141 + $0x112] sm:$0xff]
      %v2223 = vld [vmem:[%s1141 + $0x122] sm:$0xff]
      %v2224 = vld [vmem:[%s1141 + $0x12a] sm:$0xff]
      %v2225 = vld [vmem:[%s1141 + $0x13a] sm:$0xff]
      %v2226 = vld [vmem:[%s1141 + $0x142] sm:$0xff]
      %v2227 = vld [vmem:[%s1141 + $0x152] sm:$0xff]
      %v2228 = vld [vmem:[%s1141 + $0x15a] sm:$0xff]
      %v2229 = vld [vmem:[%s1141 + $0x16a] sm:$0xff]
      %v2230 = vld [vmem:[%s1141 + $0x172] sm:$0xff]
      %s2231 = scalar_lea.vmem %s7, 40
      %v2232 = vld [vmem:[%s2231] sm:$0xff]
      %v2234 = vsel %vm555, %v2232, 0
      %v2237 = vsel %vm555, %v2199, 0
      %v2240 = vsel %vm555, %v2200, 0
      %v2243 = vsel %vm555, %v2201, 0
      %v2246 = vsel %vm555, %v2202, 0
      %v2249 = vsel %vm555, %v2203, 0
      %v2252 = vsel %vm555, %v2204, 0
      %v2255 = vsel %vm555, %v2205, 0
      %v2258 = vsel %vm555, %v2206, 0
      %v2261 = vsel %vm555, %v2207, 0
      %v2264 = vsel %vm555, %v2208, 0
      %v2267 = vsel %vm555, %v2209, 0
      %v2270 = vsel %vm555, %v2210, 0
      %v2273 = vsel %vm555, %v2211, 0
      %v2276 = vsel %vm555, %v2212, 0
      %v2279 = vsel %vm555, %v2213, 0
      %v2282 = vsel %vm555, %v2214, 0
      %v2285 = vsel %vm555, %v2215, 0
      %v2288 = vsel %vm555, %v2216, 0
      %v2291 = vsel %vm555, %v2217, 0
      %v2294 = vsel %vm555, %v2218, 0
      %v2297 = vsel %vm555, %v2219, 0
      %v2300 = vsel %vm555, %v2220, 0
      %v2303 = vsel %vm555, %v2221, 0
      %v2306 = vsel %vm555, %v2222, 0
      %v2309 = vsel %vm555, %v2223, 0
      %v2312 = vsel %vm555, %v2224, 0
      %v2315 = vsel %vm555, %v2225, 0
      %v2318 = vsel %vm555, %v2226, 0
      %v2321 = vsel %vm555, %v2227, 0
      %v2324 = vsel %vm555, %v2228, 0
      %v2327 = vsel %vm555, %v2229, 0
      %v2330 = vsel %vm555, %v2230, 0
      %2332 = vmatprep.subr.mxu0 0.0
      %2333 = vmatpush1.xpose.msra.mxu0 %v2282
      %2334 = vmatprep.subr.mxu0 0.0
      %2335 = vmatpush1.xpose.msra.mxu0 %v2279
      %2336 = vmatprep.subr.mxu0 0.0
      %2337 = vmatpush1.xpose.msra.mxu0 %v2276
      %2338 = vmatprep.subr.mxu0 0.0
      %2339 = vmatpush1.xpose.msra.mxu0 %v2273
      %2340 = vmatprep.subr.mxu0 0.0
      %2341 = vmatpush1.xpose.msra.mxu0 %v2270
      %2342 = vmatprep.subr.mxu0 0.0
      %2343 = vmatpush1.xpose.msra.mxu0 %v2267
      %2344 = vmatprep.subr.mxu0 0.0
      %2345 = vmatpush1.xpose.msra.mxu0 %v2264
      %2346 = vmatprep.subr.mxu0 0.0
      %2347 = vmatpush1.xpose.msra.mxu0 %v2261
      %2348 = vmatprep.subr.mxu0 0.0
      %2349 = vmatpush1.xpose.msra.mxu0 %v2258
      %2350 = vmatprep.subr.mxu0 0.0
      %2351 = vmatpush1.xpose.msra.mxu0 %v2255
      %2352 = vmatprep.subr.mxu0 0.0
      %2353 = vmatpush1.xpose.msra.mxu0 %v2252
      %2354 = vmatprep.subr.mxu0 0.0
      %2355 = vmatpush1.xpose.msra.mxu0 %v2249
      %2356 = vmatprep.subr.mxu0 0.0
      %2357 = vmatpush1.xpose.msra.mxu0 %v2246
      %2358 = vmatprep.subr.mxu0 0.0
      %2359 = vmatpush1.xpose.msra.mxu0 %v2243
      %2360 = vmatprep.subr.mxu0 0.0
      %2361 = vmatpush1.xpose.msra.mxu0 %v2240
      %2362 = vmatprep.subr.mxu0 0.0
      %2363 = vmatpush1.xpose.msra.mxu0 %v2237
      %2364 = vmatprep.subr.mxu0 0.0
      %2365 = vmatpush2.xpose.msra.mxu0 %v2330
      %2366 = vmatprep.subr.mxu0 0.0
      %2367 = vmatpush2.xpose.msra.mxu0 %v2327
      %2368 = vmatprep.subr.mxu0 0.0
      %2369 = vmatpush2.xpose.msra.mxu0 %v2324
      %2370 = vmatprep.subr.mxu0 0.0
      %2371 = vmatpush2.xpose.msra.mxu0 %v2321
      %2372 = vmatprep.subr.mxu0 0.0
      %2373 = vmatpush2.xpose.msra.mxu0 %v2318
      %2374 = vmatprep.subr.mxu0 0.0
      %2375 = vmatpush2.xpose.msra.mxu0 %v2315
      %2376 = vmatprep.subr.mxu0 0.0
      %2377 = vmatpush2.xpose.msra.mxu0 %v2312
      %2378 = vmatprep.subr.mxu0 0.0
      %2379 = vmatpush2.xpose.msra.mxu0 %v2309
      %2380 = vmatprep.subr.mxu0 0.0
      %2381 = vmatpush2.xpose.msra.mxu0 %v2306
      %2382 = vmatprep.subr.mxu0 0.0
      %2383 = vmatpush2.xpose.msra.mxu0 %v2303
      %2384 = vmatprep.subr.mxu0 0.0
      %2385 = vmatpush2.xpose.msra.mxu0 %v2300
      %2386 = vmatprep.subr.mxu0 0.0
      %2387 = vmatpush2.xpose.msra.mxu0 %v2297
      %2388 = vmatprep.subr.mxu0 0.0
      %2389 = vmatpush2.xpose.msra.mxu0 %v2294
      %2390 = vmatprep.subr.mxu0 0.0
      %2391 = vmatpush2.xpose.msra.mxu0 %v2291
      %2392 = vmatprep.subr.mxu0 0.0
      %2393 = vmatpush2.xpose.msra.mxu0 %v2288
      %2394 = vmatprep.subr.mxu0 0.0
      %2395 = vmatpush2.xpose.msra.mxu0 %v2285
      %2396 = vmatprep.mubr.f32.mxu0 0.0
      %2397 = vmatmul.mubr.f32.gmra.mxu0 %v2234
      %v2398 = vpop.f32.mrf.mxu0
      %v2399 = vadd.f32 0.0, %v2398
      %v2400 = vpop.f32.mrf.mxu0
      %v2401 = vadd.f32 0.0, %v2400
      %2402 = vdwg.mxu0
      %v2403 = vadd.f32 %v2197, %v2399
      %v2404 = vadd.f32 %v2198, %v2401
      %s2405 = scalar_lea.vmem [#allocation2], 48
      %v2406 = vld [vmem:[%s2405] sm:$0xff]
      %v2407 = vld [vmem:[%s2405 + $0x8] sm:$0xff]
      %v2408 = vld [vmem:[%s2405 + $0x18] sm:$0xff]
      %v2409 = vld [vmem:[%s2405 + $0x20] sm:$0xff]
      %v2410 = vld [vmem:[%s2405 + $0x30] sm:$0xff]
      %v2411 = vld [vmem:[%s2405 + $0x38] sm:$0xff]
      %v2412 = vld [vmem:[%s2405 + $0x48] sm:$0xff]
      %v2413 = vld [vmem:[%s2405 + $0x50] sm:$0xff]
      %v2414 = vld [vmem:[%s2405 + $0x60] sm:$0xff]
      %v2415 = vld [vmem:[%s2405 + $0x68] sm:$0xff]
      %v2416 = vld [vmem:[%s2405 + $0x78] sm:$0xff]
      %v2417 = vld [vmem:[%s2405 + $0x80] sm:$0xff]
      %v2418 = vld [vmem:[%s2405 + $0x90] sm:$0xff]
      %v2419 = vld [vmem:[%s2405 + $0x98] sm:$0xff]
      %v2420 = vld [vmem:[%s2405 + $0xa8] sm:$0xff]
      %v2421 = vld [vmem:[%s2405 + $0xb0] sm:$0xff]
      %v2422 = vld [vmem:[%s2405 + $0xc0] sm:$0xff]
      %v2423 = vld [vmem:[%s2405 + $0xc8] sm:$0xff]
      %v2424 = vld [vmem:[%s2405 + $0xd8] sm:$0xff]
      %v2425 = vld [vmem:[%s2405 + $0xe0] sm:$0xff]
      %v2426 = vld [vmem:[%s2405 + $0xf0] sm:$0xff]
      %v2427 = vld [vmem:[%s2405 + $0xf8] sm:$0xff]
      %v2428 = vld [vmem:[%s2405 + $0x108] sm:$0xff]
      %v2429 = vld [vmem:[%s2405 + $0x110] sm:$0xff]
      %v2430 = vld [vmem:[%s2405 + $0x120] sm:$0xff]
      %v2431 = vld [vmem:[%s2405 + $0x128] sm:$0xff]
      %v2432 = vld [vmem:[%s2405 + $0x138] sm:$0xff]
      %v2433 = vld [vmem:[%s2405 + $0x140] sm:$0xff]
      %v2434 = vld [vmem:[%s2405 + $0x150] sm:$0xff]
      %v2435 = vld [vmem:[%s2405 + $0x158] sm:$0xff]
      %v2436 = vld [vmem:[%s2405 + $0x168] sm:$0xff]
      %v2437 = vld [vmem:[%s2405 + $0x170] sm:$0xff]
      %s2438 = scalar_lea.vmem %s7, 48
      %v2439 = vld [vmem:[%s2438] sm:$0xff]
      %v2441 = vsel %vm555, %v2439, 0
      %v2444 = vsel %vm555, %v2406, 0
      %v2447 = vsel %vm555, %v2407, 0
      %v2450 = vsel %vm555, %v2408, 0
      %v2453 = vsel %vm555, %v2409, 0
      %v2456 = vsel %vm555, %v2410, 0
      %v2459 = vsel %vm555, %v2411, 0
      %v2462 = vsel %vm555, %v2412, 0
      %v2465 = vsel %vm555, %v2413, 0
      %v2468 = vsel %vm555, %v2414, 0
      %v2471 = vsel %vm555, %v2415, 0
      %v2474 = vsel %vm555, %v2416, 0
      %v2477 = vsel %vm555, %v2417, 0
      %v2480 = vsel %vm555, %v2418, 0
      %v2483 = vsel %vm555, %v2419, 0
      %v2486 = vsel %vm555, %v2420, 0
      %v2489 = vsel %vm555, %v2421, 0
      %v2492 = vsel %vm555, %v2422, 0
      %v2495 = vsel %vm555, %v2423, 0
      %v2498 = vsel %vm555, %v2424, 0
      %v2501 = vsel %vm555, %v2425, 0
      %v2504 = vsel %vm555, %v2426, 0
      %v2507 = vsel %vm555, %v2427, 0
      %v2510 = vsel %vm555, %v2428, 0
      %v2513 = vsel %vm555, %v2429, 0
      %v2516 = vsel %vm555, %v2430, 0
      %v2519 = vsel %vm555, %v2431, 0
      %v2522 = vsel %vm555, %v2432, 0
      %v2525 = vsel %vm555, %v2433, 0
      %v2528 = vsel %vm555, %v2434, 0
      %v2531 = vsel %vm555, %v2435, 0
      %v2534 = vsel %vm555, %v2436, 0
      %v2537 = vsel %vm555, %v2437, 0
      %2539 = vmatprep.subr.mxu0 0.0
      %2540 = vmatpush1.xpose.msra.mxu0 %v2489
      %2541 = vmatprep.subr.mxu0 0.0
      %2542 = vmatpush1.xpose.msra.mxu0 %v2486
      %2543 = vmatprep.subr.mxu0 0.0
      %2544 = vmatpush1.xpose.msra.mxu0 %v2483
      %2545 = vmatprep.subr.mxu0 0.0
      %2546 = vmatpush1.xpose.msra.mxu0 %v2480
      %2547 = vmatprep.subr.mxu0 0.0
      %2548 = vmatpush1.xpose.msra.mxu0 %v2477
      %2549 = vmatprep.subr.mxu0 0.0
      %2550 = vmatpush1.xpose.msra.mxu0 %v2474
      %2551 = vmatprep.subr.mxu0 0.0
      %2552 = vmatpush1.xpose.msra.mxu0 %v2471
      %2553 = vmatprep.subr.mxu0 0.0
      %2554 = vmatpush1.xpose.msra.mxu0 %v2468
      %2555 = vmatprep.subr.mxu0 0.0
      %2556 = vmatpush1.xpose.msra.mxu0 %v2465
      %2557 = vmatprep.subr.mxu0 0.0
      %2558 = vmatpush1.xpose.msra.mxu0 %v2462
      %2559 = vmatprep.subr.mxu0 0.0
      %2560 = vmatpush1.xpose.msra.mxu0 %v2459
      %2561 = vmatprep.subr.mxu0 0.0
      %2562 = vmatpush1.xpose.msra.mxu0 %v2456
      %2563 = vmatprep.subr.mxu0 0.0
      %2564 = vmatpush1.xpose.msra.mxu0 %v2453
      %2565 = vmatprep.subr.mxu0 0.0
      %2566 = vmatpush1.xpose.msra.mxu0 %v2450
      %2567 = vmatprep.subr.mxu0 0.0
      %2568 = vmatpush1.xpose.msra.mxu0 %v2447
      %2569 = vmatprep.subr.mxu0 0.0
      %2570 = vmatpush1.xpose.msra.mxu0 %v2444
      %2571 = vmatprep.subr.mxu0 0.0
      %2572 = vmatpush2.xpose.msra.mxu0 %v2537
      %2573 = vmatprep.subr.mxu0 0.0
      %2574 = vmatpush2.xpose.msra.mxu0 %v2534
      %2575 = vmatprep.subr.mxu0 0.0
      %2576 = vmatpush2.xpose.msra.mxu0 %v2531
      %2577 = vmatprep.subr.mxu0 0.0
      %2578 = vmatpush2.xpose.msra.mxu0 %v2528
      %2579 = vmatprep.subr.mxu0 0.0
      %2580 = vmatpush2.xpose.msra.mxu0 %v2525
      %2581 = vmatprep.subr.mxu0 0.0
      %2582 = vmatpush2.xpose.msra.mxu0 %v2522
      %2583 = vmatprep.subr.mxu0 0.0
      %2584 = vmatpush2.xpose.msra.mxu0 %v2519
      %2585 = vmatprep.subr.mxu0 0.0
      %2586 = vmatpush2.xpose.msra.mxu0 %v2516
      %2587 = vmatprep.subr.mxu0 0.0
      %2588 = vmatpush2.xpose.msra.mxu0 %v2513
      %2589 = vmatprep.subr.mxu0 0.0
      %2590 = vmatpush2.xpose.msra.mxu0 %v2510
      %2591 = vmatprep.subr.mxu0 0.0
      %2592 = vmatpush2.xpose.msra.mxu0 %v2507
      %2593 = vmatprep.subr.mxu0 0.0
      %2594 = vmatpush2.xpose.msra.mxu0 %v2504
      %2595 = vmatprep.subr.mxu0 0.0
      %2596 = vmatpush2.xpose.msra.mxu0 %v2501
      %2597 = vmatprep.subr.mxu0 0.0
      %2598 = vmatpush2.xpose.msra.mxu0 %v2498
      %2599 = vmatprep.subr.mxu0 0.0
      %2600 = vmatpush2.xpose.msra.mxu0 %v2495
      %2601 = vmatprep.subr.mxu0 0.0
      %2602 = vmatpush2.xpose.msra.mxu0 %v2492
      %2603 = vmatprep.mubr.f32.mxu0 0.0
      %2604 = vmatmul.mubr.f32.gmra.mxu0 %v2441
      %v2605 = vpop.f32.mrf.mxu0
      %v2606 = vadd.f32 0.0, %v2605
      %v2607 = vpop.f32.mrf.mxu0
      %v2608 = vadd.f32 0.0, %v2607
      %2609 = vdwg.mxu0
      %v2610 = vadd.f32 %v2403, %v2606
      %v2611 = vadd.f32 %v2404, %v2608
      %v2612 = vld [vmem:[%s2405 + $0x1] sm:$0xff]
      %v2613 = vld [vmem:[%s2405 + $0x9] sm:$0xff]
      %v2614 = vld [vmem:[%s2405 + $0x19] sm:$0xff]
      %v2615 = vld [vmem:[%s2405 + $0x21] sm:$0xff]
      %v2616 = vld [vmem:[%s2405 + $0x31] sm:$0xff]
      %v2617 = vld [vmem:[%s2405 + $0x39] sm:$0xff]
      %v2618 = vld [vmem:[%s2405 + $0x49] sm:$0xff]
      %v2619 = vld [vmem:[%s2405 + $0x51] sm:$0xff]
      %v2620 = vld [vmem:[%s2405 + $0x61] sm:$0xff]
      %v2621 = vld [vmem:[%s2405 + $0x69] sm:$0xff]
      %v2622 = vld [vmem:[%s2405 + $0x79] sm:$0xff]
      %v2623 = vld [vmem:[%s2405 + $0x81] sm:$0xff]
      %v2624 = vld [vmem:[%s2405 + $0x91] sm:$0xff]
      %v2625 = vld [vmem:[%s2405 + $0x99] sm:$0xff]
      %v2626 = vld [vmem:[%s2405 + $0xa9] sm:$0xff]
      %v2627 = vld [vmem:[%s2405 + $0xb1] sm:$0xff]
      %v2628 = vld [vmem:[%s2405 + $0xc1] sm:$0xff]
      %v2629 = vld [vmem:[%s2405 + $0xc9] sm:$0xff]
      %v2630 = vld [vmem:[%s2405 + $0xd9] sm:$0xff]
      %v2631 = vld [vmem:[%s2405 + $0xe1] sm:$0xff]
      %v2632 = vld [vmem:[%s2405 + $0xf1] sm:$0xff]
      %v2633 = vld [vmem:[%s2405 + $0xf9] sm:$0xff]
      %v2634 = vld [vmem:[%s2405 + $0x109] sm:$0xff]
      %v2635 = vld [vmem:[%s2405 + $0x111] sm:$0xff]
      %v2636 = vld [vmem:[%s2405 + $0x121] sm:$0xff]
      %v2637 = vld [vmem:[%s2405 + $0x129] sm:$0xff]
      %v2638 = vld [vmem:[%s2405 + $0x139] sm:$0xff]
      %v2639 = vld [vmem:[%s2405 + $0x141] sm:$0xff]
      %v2640 = vld [vmem:[%s2405 + $0x151] sm:$0xff]
      %v2641 = vld [vmem:[%s2405 + $0x159] sm:$0xff]
      %v2642 = vld [vmem:[%s2405 + $0x169] sm:$0xff]
      %v2643 = vld [vmem:[%s2405 + $0x171] sm:$0xff]
      %s2644 = scalar_lea.vmem %s7, 56
      %v2645 = vld [vmem:[%s2644] sm:$0xff]
      %v2647 = vsel %vm555, %v2645, 0
      %v2650 = vsel %vm555, %v2612, 0
      %v2653 = vsel %vm555, %v2613, 0
      %v2656 = vsel %vm555, %v2614, 0
      %v2659 = vsel %vm555, %v2615, 0
      %v2662 = vsel %vm555, %v2616, 0
      %v2665 = vsel %vm555, %v2617, 0
      %v2668 = vsel %vm555, %v2618, 0
      %v2671 = vsel %vm555, %v2619, 0
      %v2674 = vsel %vm555, %v2620, 0
      %v2677 = vsel %vm555, %v2621, 0
      %v2680 = vsel %vm555, %v2622, 0
      %v2683 = vsel %vm555, %v2623, 0
      %v2686 = vsel %vm555, %v2624, 0
      %v2689 = vsel %vm555, %v2625, 0
      %v2692 = vsel %vm555, %v2626, 0
      %v2695 = vsel %vm555, %v2627, 0
      %v2698 = vsel %vm555, %v2628, 0
      %v2701 = vsel %vm555, %v2629, 0
      %v2704 = vsel %vm555, %v2630, 0
      %v2707 = vsel %vm555, %v2631, 0
      %v2710 = vsel %vm555, %v2632, 0
      %v2713 = vsel %vm555, %v2633, 0
      %v2716 = vsel %vm555, %v2634, 0
      %v2719 = vsel %vm555, %v2635, 0
      %v2722 = vsel %vm555, %v2636, 0
      %v2725 = vsel %vm555, %v2637, 0
      %v2728 = vsel %vm555, %v2638, 0
      %v2731 = vsel %vm555, %v2639, 0
      %v2734 = vsel %vm555, %v2640, 0
      %v2737 = vsel %vm555, %v2641, 0
      %v2740 = vsel %vm555, %v2642, 0
      %v2743 = vsel %vm555, %v2643, 0
      %2745 = vmatprep.subr.mxu0 0.0
      %2746 = vmatpush1.xpose.msra.mxu0 %v2695
      %2747 = vmatprep.subr.mxu0 0.0
      %2748 = vmatpush1.xpose.msra.mxu0 %v2692
      %2749 = vmatprep.subr.mxu0 0.0
      %2750 = vmatpush1.xpose.msra.mxu0 %v2689
      %2751 = vmatprep.subr.mxu0 0.0
      %2752 = vmatpush1.xpose.msra.mxu0 %v2686
      %2753 = vmatprep.subr.mxu0 0.0
      %2754 = vmatpush1.xpose.msra.mxu0 %v2683
      %2755 = vmatprep.subr.mxu0 0.0
      %2756 = vmatpush1.xpose.msra.mxu0 %v2680
      %2757 = vmatprep.subr.mxu0 0.0
      %2758 = vmatpush1.xpose.msra.mxu0 %v2677
      %2759 = vmatprep.subr.mxu0 0.0
      %2760 = vmatpush1.xpose.msra.mxu0 %v2674
      %2761 = vmatprep.subr.mxu0 0.0
      %2762 = vmatpush1.xpose.msra.mxu0 %v2671
      %2763 = vmatprep.subr.mxu0 0.0
      %2764 = vmatpush1.xpose.msra.mxu0 %v2668
      %2765 = vmatprep.subr.mxu0 0.0
      %2766 = vmatpush1.xpose.msra.mxu0 %v2665
      %2767 = vmatprep.subr.mxu0 0.0
      %2768 = vmatpush1.xpose.msra.mxu0 %v2662
      %2769 = vmatprep.subr.mxu0 0.0
      %2770 = vmatpush1.xpose.msra.mxu0 %v2659
      %2771 = vmatprep.subr.mxu0 0.0
      %2772 = vmatpush1.xpose.msra.mxu0 %v2656
      %2773 = vmatprep.subr.mxu0 0.0
      %2774 = vmatpush1.xpose.msra.mxu0 %v2653
      %2775 = vmatprep.subr.mxu0 0.0
      %2776 = vmatpush1.xpose.msra.mxu0 %v2650
      %2777 = vmatprep.subr.mxu0 0.0
      %2778 = vmatpush2.xpose.msra.mxu0 %v2743
      %2779 = vmatprep.subr.mxu0 0.0
      %2780 = vmatpush2.xpose.msra.mxu0 %v2740
      %2781 = vmatprep.subr.mxu0 0.0
      %2782 = vmatpush2.xpose.msra.mxu0 %v2737
      %2783 = vmatprep.subr.mxu0 0.0
      %2784 = vmatpush2.xpose.msra.mxu0 %v2734
      %2785 = vmatprep.subr.mxu0 0.0
      %2786 = vmatpush2.xpose.msra.mxu0 %v2731
      %2787 = vmatprep.subr.mxu0 0.0
      %2788 = vmatpush2.xpose.msra.mxu0 %v2728
      %2789 = vmatprep.subr.mxu0 0.0
      %2790 = vmatpush2.xpose.msra.mxu0 %v2725
      %2791 = vmatprep.subr.mxu0 0.0
      %2792 = vmatpush2.xpose.msra.mxu0 %v2722
      %2793 = vmatprep.subr.mxu0 0.0
      %2794 = vmatpush2.xpose.msra.mxu0 %v2719
      %2795 = vmatprep.subr.mxu0 0.0
      %2796 = vmatpush2.xpose.msra.mxu0 %v2716
      %2797 = vmatprep.subr.mxu0 0.0
      %2798 = vmatpush2.xpose.msra.mxu0 %v2713
      %2799 = vmatprep.subr.mxu0 0.0
      %2800 = vmatpush2.xpose.msra.mxu0 %v2710
      %2801 = vmatprep.subr.mxu0 0.0
      %2802 = vmatpush2.xpose.msra.mxu0 %v2707
      %2803 = vmatprep.subr.mxu0 0.0
      %2804 = vmatpush2.xpose.msra.mxu0 %v2704
      %2805 = vmatprep.subr.mxu0 0.0
      %2806 = vmatpush2.xpose.msra.mxu0 %v2701
      %2807 = vmatprep.subr.mxu0 0.0
      %2808 = vmatpush2.xpose.msra.mxu0 %v2698
      %2809 = vmatprep.mubr.f32.mxu0 0.0
      %2810 = vmatmul.mubr.f32.gmra.mxu0 %v2647
      %v2811 = vpop.f32.mrf.mxu0
      %v2812 = vadd.f32 0.0, %v2811
      %v2813 = vpop.f32.mrf.mxu0
      %v2814 = vadd.f32 0.0, %v2813
      %2815 = vdwg.mxu0
      %v2816 = vadd.f32 %v2610, %v2812
      %v2817 = vadd.f32 %v2611, %v2814
      %v2818 = vld [vmem:[%s2405 + $0x2] sm:$0xff]
      %v2819 = vld [vmem:[%s2405 + $0xa] sm:$0xff]
      %v2820 = vld [vmem:[%s2405 + $0x1a] sm:$0xff]
      %v2821 = vld [vmem:[%s2405 + $0x22] sm:$0xff]
      %v2822 = vld [vmem:[%s2405 + $0x32] sm:$0xff]
      %v2823 = vld [vmem:[%s2405 + $0x3a] sm:$0xff]
      %v2824 = vld [vmem:[%s2405 + $0x4a] sm:$0xff]
      %v2825 = vld [vmem:[%s2405 + $0x52] sm:$0xff]
      %v2826 = vld [vmem:[%s2405 + $0x62] sm:$0xff]
      %v2827 = vld [vmem:[%s2405 + $0x6a] sm:$0xff]
      %v2828 = vld [vmem:[%s2405 + $0x7a] sm:$0xff]
      %v2829 = vld [vmem:[%s2405 + $0x82] sm:$0xff]
      %v2830 = vld [vmem:[%s2405 + $0x92] sm:$0xff]
      %v2831 = vld [vmem:[%s2405 + $0x9a] sm:$0xff]
      %v2832 = vld [vmem:[%s2405 + $0xaa] sm:$0xff]
      %v2833 = vld [vmem:[%s2405 + $0xb2] sm:$0xff]
      %v2834 = vld [vmem:[%s2405 + $0xc2] sm:$0xff]
      %v2835 = vld [vmem:[%s2405 + $0xca] sm:$0xff]
      %v2836 = vld [vmem:[%s2405 + $0xda] sm:$0xff]
      %v2837 = vld [vmem:[%s2405 + $0xe2] sm:$0xff]
      %v2838 = vld [vmem:[%s2405 + $0xf2] sm:$0xff]
      %v2839 = vld [vmem:[%s2405 + $0xfa] sm:$0xff]
      %v2840 = vld [vmem:[%s2405 + $0x10a] sm:$0xff]
      %v2841 = vld [vmem:[%s2405 + $0x112] sm:$0xff]
      %v2842 = vld [vmem:[%s2405 + $0x122] sm:$0xff]
      %v2843 = vld [vmem:[%s2405 + $0x12a] sm:$0xff]
      %v2844 = vld [vmem:[%s2405 + $0x13a] sm:$0xff]
      %v2845 = vld [vmem:[%s2405 + $0x142] sm:$0xff]
      %v2846 = vld [vmem:[%s2405 + $0x152] sm:$0xff]
      %v2847 = vld [vmem:[%s2405 + $0x15a] sm:$0xff]
      %v2848 = vld [vmem:[%s2405 + $0x16a] sm:$0xff]
      %v2849 = vld [vmem:[%s2405 + $0x172] sm:$0xff]
      %s2850 = scalar_lea.vmem %s7, 64
      %v2851 = vld [vmem:[%s2850] sm:$0xff]
      %v2853 = vsel %vm555, %v2851, 0
      %v2856 = vsel %vm555, %v2818, 0
      %v2859 = vsel %vm555, %v2819, 0
      %v2862 = vsel %vm555, %v2820, 0
      %v2865 = vsel %vm555, %v2821, 0
      %v2868 = vsel %vm555, %v2822, 0
      %v2871 = vsel %vm555, %v2823, 0
      %v2874 = vsel %vm555, %v2824, 0
      %v2877 = vsel %vm555, %v2825, 0
      %v2880 = vsel %vm555, %v2826, 0
      %v2883 = vsel %vm555, %v2827, 0
      %v2886 = vsel %vm555, %v2828, 0
      %v2889 = vsel %vm555, %v2829, 0
      %v2892 = vsel %vm555, %v2830, 0
      %v2895 = vsel %vm555, %v2831, 0
      %v2898 = vsel %vm555, %v2832, 0
      %v2901 = vsel %vm555, %v2833, 0
      %v2904 = vsel %vm555, %v2834, 0
      %v2907 = vsel %vm555, %v2835, 0
      %v2910 = vsel %vm555, %v2836, 0
      %v2913 = vsel %vm555, %v2837, 0
      %v2916 = vsel %vm555, %v2838, 0
      %v2919 = vsel %vm555, %v2839, 0
      %v2922 = vsel %vm555, %v2840, 0
      %v2925 = vsel %vm555, %v2841, 0
      %v2928 = vsel %vm555, %v2842, 0
      %v2931 = vsel %vm555, %v2843, 0
      %v2934 = vsel %vm555, %v2844, 0
      %v2937 = vsel %vm555, %v2845, 0
      %v2940 = vsel %vm555, %v2846, 0
      %v2943 = vsel %vm555, %v2847, 0
      %v2946 = vsel %vm555, %v2848, 0
      %v2949 = vsel %vm555, %v2849, 0
      %2951 = vmatprep.subr.mxu0 0.0
      %2952 = vmatpush1.xpose.msra.mxu0 %v2901
      %2953 = vmatprep.subr.mxu0 0.0
      %2954 = vmatpush1.xpose.msra.mxu0 %v2898
      %2955 = vmatprep.subr.mxu0 0.0
      %2956 = vmatpush1.xpose.msra.mxu0 %v2895
      %2957 = vmatprep.subr.mxu0 0.0
      %2958 = vmatpush1.xpose.msra.mxu0 %v2892
      %2959 = vmatprep.subr.mxu0 0.0
      %2960 = vmatpush1.xpose.msra.mxu0 %v2889
      %2961 = vmatprep.subr.mxu0 0.0
      %2962 = vmatpush1.xpose.msra.mxu0 %v2886
      %2963 = vmatprep.subr.mxu0 0.0
      %2964 = vmatpush1.xpose.msra.mxu0 %v2883
      %2965 = vmatprep.subr.mxu0 0.0
      %2966 = vmatpush1.xpose.msra.mxu0 %v2880
      %2967 = vmatprep.subr.mxu0 0.0
      %2968 = vmatpush1.xpose.msra.mxu0 %v2877
      %2969 = vmatprep.subr.mxu0 0.0
      %2970 = vmatpush1.xpose.msra.mxu0 %v2874
      %2971 = vmatprep.subr.mxu0 0.0
      %2972 = vmatpush1.xpose.msra.mxu0 %v2871
      %2973 = vmatprep.subr.mxu0 0.0
      %2974 = vmatpush1.xpose.msra.mxu0 %v2868
      %2975 = vmatprep.subr.mxu0 0.0
      %2976 = vmatpush1.xpose.msra.mxu0 %v2865
      %2977 = vmatprep.subr.mxu0 0.0
      %2978 = vmatpush1.xpose.msra.mxu0 %v2862
      %2979 = vmatprep.subr.mxu0 0.0
      %2980 = vmatpush1.xpose.msra.mxu0 %v2859
      %2981 = vmatprep.subr.mxu0 0.0
      %2982 = vmatpush1.xpose.msra.mxu0 %v2856
      %2983 = vmatprep.subr.mxu0 0.0
      %2984 = vmatpush2.xpose.msra.mxu0 %v2949
      %2985 = vmatprep.subr.mxu0 0.0
      %2986 = vmatpush2.xpose.msra.mxu0 %v2946
      %2987 = vmatprep.subr.mxu0 0.0
      %2988 = vmatpush2.xpose.msra.mxu0 %v2943
      %2989 = vmatprep.subr.mxu0 0.0
      %2990 = vmatpush2.xpose.msra.mxu0 %v2940
      %2991 = vmatprep.subr.mxu0 0.0
      %2992 = vmatpush2.xpose.msra.mxu0 %v2937
      %2993 = vmatprep.subr.mxu0 0.0
      %2994 = vmatpush2.xpose.msra.mxu0 %v2934
      %2995 = vmatprep.subr.mxu0 0.0
      %2996 = vmatpush2.xpose.msra.mxu0 %v2931
      %2997 = vmatprep.subr.mxu0 0.0
      %2998 = vmatpush2.xpose.msra.mxu0 %v2928
      %2999 = vmatprep.subr.mxu0 0.0
      %3000 = vmatpush2.xpose.msra.mxu0 %v2925
      %3001 = vmatprep.subr.mxu0 0.0
      %3002 = vmatpush2.xpose.msra.mxu0 %v2922
      %3003 = vmatprep.subr.mxu0 0.0
      %3004 = vmatpush2.xpose.msra.mxu0 %v2919
      %3005 = vmatprep.subr.mxu0 0.0
      %3006 = vmatpush2.xpose.msra.mxu0 %v2916
      %3007 = vmatprep.subr.mxu0 0.0
      %3008 = vmatpush2.xpose.msra.mxu0 %v2913
      %3009 = vmatprep.subr.mxu0 0.0
      %3010 = vmatpush2.xpose.msra.mxu0 %v2910
      %3011 = vmatprep.subr.mxu0 0.0
      %3012 = vmatpush2.xpose.msra.mxu0 %v2907
      %3013 = vmatprep.subr.mxu0 0.0
      %3014 = vmatpush2.xpose.msra.mxu0 %v2904
      %3015 = vmatprep.mubr.f32.mxu0 0.0
      %3016 = vmatmul.mubr.f32.gmra.mxu0 %v2853
      %v3017 = vpop.f32.mrf.mxu0
      %v3018 = vadd.f32 0.0, %v3017
      %v3019 = vpop.f32.mrf.mxu0
      %v3020 = vadd.f32 0.0, %v3019
      %3021 = vdwg.mxu0
      %v3022 = vadd.f32 %v2816, %v3018
      %v3023 = vadd.f32 %v2817, %v3020
      %v3024 = vld [vmem:[%s8] sm:$0xff]
      %3026 = vset.pattern.permute.xlu0 0
      %3027 = vperm.xlu0 %3026, %v3024
      %v3028 = vpop.permute.xlu0 %3027
      %v3030 = vmul.f32 %v3022, %v3028
      %v3031 = vmul.f32 %v3023, %v3028
      %v3032 = vld [vmem:[%s9] sm:$0xff]
      %3034 = vset.pattern.permute.xlu0 0
      %3035 = vperm.xlu0 %3034, %v3032
      %v3036 = vpop.permute.xlu0 %3035
      %v3038 = vadd.f32 %v3030, %v3036
      %v3039 = vadd.f32 %v3031, %v3036
      %v3040 = vmax.f32 %v3038, 0.0
      %v3041 = vmax.f32 %v3039, 0.0
      %3042 = vst [vmem:[%s521 + $0x10] sm:$0xff] %v3040
      %3043 = vst [vmem:[%s521 + $0x18] sm:$0xff] %v3041
      %3044 = vst.msk [vmem:[#allocation3] sm:$0xff] %vm555, 0.0
      %3045 = vst.msk [vmem:[#allocation3 + $0x8] sm:$0xff] %vm555, 0.0
      %3046 = vst.msk [vmem:[#allocation3 + $0x10] sm:$0x3] %vm1088, 0.0
      %3047 = vst.msk [vmem:[#allocation3 + $0x18] sm:$0xff] %vm555, 0.0
      %3048 = vst.msk [vmem:[#allocation3 + $0x20] sm:$0xff] %vm555, 0.0
      %3049 = vst.msk [vmem:[#allocation3 + $0x28] sm:$0x3] %vm1088, 0.0
      %3050 = vst.msk [vmem:[#allocation3 + $0x30] sm:$0xff] %vm555, 0.0
      %3051 = vst.msk [vmem:[#allocation3 + $0x38] sm:$0xff] %vm555, 0.0
      %3052 = vst.msk [vmem:[#allocation3 + $0x40] sm:$0x3] %vm1088, 0.0
      %3053 = vst.msk [vmem:[#allocation3 + $0x48] sm:$0xff] %vm555, 0.0
      %3054 = vst.msk [vmem:[#allocation3 + $0x50] sm:$0xff] %vm555, 0.0
      %3055 = vst.msk [vmem:[#allocation3 + $0x58] sm:$0x3] %vm1088, 0.0
      %3056 = vst.msk [vmem:[#allocation3 + $0x60] sm:$0xff] %vm555, 0.0
      %3057 = vst.msk [vmem:[#allocation3 + $0x68] sm:$0xff] %vm555, 0.0
      %3058 = vst.msk [vmem:[#allocation3 + $0x70] sm:$0x3] %vm1088, 0.0
      %3059 = vst.msk [vmem:[#allocation3 + $0x78] sm:$0xff] %vm555, 0.0
      %3060 = vst.msk [vmem:[#allocation3 + $0x80] sm:$0xff] %vm555, 0.0
      %3061 = vst.msk [vmem:[#allocation3 + $0x88] sm:$0x3] %vm1088, 0.0
      %3062 = vst.msk [vmem:[#allocation3 + $0x90] sm:$0xff] %vm555, 0.0
      %3063 = vst.msk [vmem:[#allocation3 + $0x98] sm:$0xff] %vm555, 0.0
      %3064 = vst.msk [vmem:[#allocation3 + $0xa0] sm:$0x3] %vm1088, 0.0
      %3065 = vst.msk [vmem:[#allocation3 + $0xa8] sm:$0xff] %vm555, 0.0
      %3066 = vst.msk [vmem:[#allocation3 + $0xb0] sm:$0xff] %vm555, 0.0
      %3067 = vst.msk [vmem:[#allocation3 + $0xb8] sm:$0x3] %vm1088, 0.0
      %3068 = vst.msk [vmem:[#allocation3 + $0xc0] sm:$0xff] %vm555, 0.0
      %3069 = vst.msk [vmem:[#allocation3 + $0xc8] sm:$0xff] %vm555, 0.0
      %3070 = vst.msk [vmem:[#allocation3 + $0xd0] sm:$0x3] %vm1088, 0.0
      %3071 = vst.msk [vmem:[#allocation3 + $0xd8] sm:$0xff] %vm555, 0.0
      %3072 = vst.msk [vmem:[#allocation3 + $0xe0] sm:$0xff] %vm555, 0.0
      %3073 = vst.msk [vmem:[#allocation3 + $0xe8] sm:$0x3] %vm1088, 0.0
      %3074 = vst.msk [vmem:[#allocation3 + $0xf0] sm:$0xff] %vm555, 0.0
      %3075 = vst.msk [vmem:[#allocation3 + $0xf8] sm:$0xff] %vm555, 0.0
      %3076 = vst.msk [vmem:[#allocation3 + $0x100] sm:$0x3] %vm1088, 0.0
      %3077 = vst.msk [vmem:[#allocation3 + $0x108] sm:$0xff] %vm555, 0.0
      %3078 = vst.msk [vmem:[#allocation3 + $0x110] sm:$0xff] %vm555, 0.0
      %3079 = vst.msk [vmem:[#allocation3 + $0x118] sm:$0x3] %vm1088, 0.0
      %3080 = vst.msk [vmem:[#allocation3 + $0x120] sm:$0xff] %vm555, 0.0
      %3081 = vst.msk [vmem:[#allocation3 + $0x128] sm:$0xff] %vm555, 0.0
      %3082 = vst.msk [vmem:[#allocation3 + $0x130] sm:$0x3] %vm1088, 0.0
      %3083 = vst.msk [vmem:[#allocation3 + $0x138] sm:$0xff] %vm555, 0.0
      %3084 = vst.msk [vmem:[#allocation3 + $0x140] sm:$0xff] %vm555, 0.0
      %3085 = vst.msk [vmem:[#allocation3 + $0x148] sm:$0x3] %vm1088, 0.0
      %3086 = vst.msk [vmem:[#allocation3 + $0x150] sm:$0xff] %vm555, 0.0
      %3087 = vst.msk [vmem:[#allocation3 + $0x158] sm:$0xff] %vm555, 0.0
      %3088 = vst.msk [vmem:[#allocation3 + $0x160] sm:$0x3] %vm1088, 0.0
      %3089 = vst.msk [vmem:[#allocation3 + $0x168] sm:$0xff] %vm555, 0.0
      %3090 = vst.msk [vmem:[#allocation3 + $0x170] sm:$0xff] %vm555, 0.0
      %3091 = vst.msk [vmem:[#allocation3 + $0x178] sm:$0x3] %vm1088, 0.0
      %3092 = vst.msk [vmem:[#allocation3 + $0x180] sm:$0xff] %vm555, 0.0
      %3093 = vst.msk [vmem:[#allocation3 + $0x188] sm:$0xff] %vm555, 0.0
      %3094 = vst.msk [vmem:[#allocation3 + $0x190] sm:$0x3] %vm1088, 0.0
      %3095 = vst.msk [vmem:[#allocation3 + $0x198] sm:$0xff] %vm555, 0.0
      %3096 = vst.msk [vmem:[#allocation3 + $0x1a0] sm:$0xff] %vm555, 0.0
      %3097 = vst.msk [vmem:[#allocation3 + $0x1a8] sm:$0x3] %vm1088, 0.0
      %3130 = vrot.lane.b32.xlu0 %v1054, 124
      %v3131 = vpop.permute.xlu0 %3130
      %3132 = vrot.lane.b32.xlu0 %v1055, 124
      %v3133 = vpop.permute.xlu0 %3132
      %3134 = vrot.lane.b32.xlu0 %v1056, 124
      %v3135 = vpop.permute.xlu0 %3134
      %3136 = vrot.lane.b32.xlu0 %v1057, 124
      %v3137 = vpop.permute.xlu0 %3136
      %3138 = vrot.lane.b32.xlu0 %v1058, 124
      %v3139 = vpop.permute.xlu0 %3138
      %3140 = vrot.lane.b32.xlu0 %v1059, 124
      %v3141 = vpop.permute.xlu0 %3140
      %3142 = vrot.lane.b32.xlu0 %v1060, 124
      %v3143 = vpop.permute.xlu0 %3142
      %3144 = vrot.lane.b32.xlu0 %v1061, 124
      %v3145 = vpop.permute.xlu0 %3144
      %3146 = vrot.lane.b32.xlu0 %v1062, 124
      %v3147 = vpop.permute.xlu0 %3146
      %3148 = vrot.lane.b32.xlu0 %v1063, 124
      %v3149 = vpop.permute.xlu0 %3148
      %3150 = vrot.lane.b32.xlu0 %v1064, 124
      %v3151 = vpop.permute.xlu0 %3150
      %3152 = vrot.lane.b32.xlu0 %v1065, 124
      %v3153 = vpop.permute.xlu0 %3152
      %3154 = vrot.lane.b32.xlu0 %v1066, 124
      %v3155 = vpop.permute.xlu0 %3154
      %3156 = vrot.lane.b32.xlu0 %v1067, 124
      %v3157 = vpop.permute.xlu0 %3156
      %3158 = vrot.lane.b32.xlu0 %v1068, 124
      %v3159 = vpop.permute.xlu0 %3158
      %3160 = vrot.lane.b32.xlu0 %v1069, 124
      %v3161 = vpop.permute.xlu0 %3160
      %3162 = vrot.lane.b32.xlu0 %v1070, 124
      %v3163 = vpop.permute.xlu0 %3162
      %3164 = vrot.lane.b32.xlu0 %v1071, 124
      %v3165 = vpop.permute.xlu0 %3164
      %3166 = vrot.lane.b32.xlu0 %v1072, 124
      %v3167 = vpop.permute.xlu0 %3166
      %3168 = vrot.lane.b32.xlu0 %v1073, 124
      %v3169 = vpop.permute.xlu0 %3168
      %3170 = vrot.lane.b32.xlu0 %v1074, 124
      %v3171 = vpop.permute.xlu0 %3170
      %3172 = vrot.lane.b32.xlu0 %v1075, 124
      %v3173 = vpop.permute.xlu0 %3172
      %3174 = vrot.lane.b32.xlu0 %v1076, 124
      %v3175 = vpop.permute.xlu0 %3174
      %3176 = vrot.lane.b32.xlu0 %v1077, 124
      %v3177 = vpop.permute.xlu0 %3176
      %3178 = vrot.lane.b32.xlu0 %v1078, 124
      %v3179 = vpop.permute.xlu0 %3178
      %3180 = vrot.lane.b32.xlu0 %v1079, 124
      %v3181 = vpop.permute.xlu0 %3180
      %3182 = vrot.lane.b32.xlu0 %v1080, 124
      %v3183 = vpop.permute.xlu0 %3182
      %3184 = vrot.lane.b32.xlu0 %v1081, 124
      %v3185 = vpop.permute.xlu0 %3184
      %3186 = vrot.lane.b32.xlu0 %v1082, 124
      %v3187 = vpop.permute.xlu0 %3186
      %3188 = vrot.lane.b32.xlu0 %v1083, 124
      %v3189 = vpop.permute.xlu0 %3188
      %3190 = vrot.lane.b32.xlu0 %v1084, 124
      %v3191 = vpop.permute.xlu0 %3190
      %3192 = vrot.lane.b32.xlu0 %v1085, 124
      %v3193 = vpop.permute.xlu0 %3192
      %s3226 = scalar_lea.vmem [#allocation3], 24
      %3227 = vst.msk [vmem:[%s3226 + $0x1] sm:$0xff] %vm555, %v3131
      %3228 = vst.msk [vmem:[%s3226 + $0x9] sm:$0xff] %vm555, %v3133
      %3229 = vst.msk [vmem:[%s3226 + $0x19] sm:$0xff] %vm555, %v3135
      %3230 = vst.msk [vmem:[%s3226 + $0x21] sm:$0xff] %vm555, %v3137
      %3231 = vst.msk [vmem:[%s3226 + $0x31] sm:$0xff] %vm555, %v3139
      %3232 = vst.msk [vmem:[%s3226 + $0x39] sm:$0xff] %vm555, %v3141
      %3233 = vst.msk [vmem:[%s3226 + $0x49] sm:$0xff] %vm555, %v3143
      %3234 = vst.msk [vmem:[%s3226 + $0x51] sm:$0xff] %vm555, %v3145
      %3235 = vst.msk [vmem:[%s3226 + $0x61] sm:$0xff] %vm555, %v3147
      %3236 = vst.msk [vmem:[%s3226 + $0x69] sm:$0xff] %vm555, %v3149
      %3237 = vst.msk [vmem:[%s3226 + $0x79] sm:$0xff] %vm555, %v3151
      %3238 = vst.msk [vmem:[%s3226 + $0x81] sm:$0xff] %vm555, %v3153
      %3239 = vst.msk [vmem:[%s3226 + $0x91] sm:$0xff] %vm555, %v3155
      %3240 = vst.msk [vmem:[%s3226 + $0x99] sm:$0xff] %vm555, %v3157
      %3241 = vst.msk [vmem:[%s3226 + $0xa9] sm:$0xff] %vm555, %v3159
      %3242 = vst.msk [vmem:[%s3226 + $0xb1] sm:$0xff] %vm555, %v3161
      %3243 = vst.msk [vmem:[%s3226 + $0xc1] sm:$0xff] %vm555, %v3163
      %3244 = vst.msk [vmem:[%s3226 + $0xc9] sm:$0xff] %vm555, %v3165
      %3245 = vst.msk [vmem:[%s3226 + $0xd9] sm:$0xff] %vm555, %v3167
      %3246 = vst.msk [vmem:[%s3226 + $0xe1] sm:$0xff] %vm555, %v3169
      %3247 = vst.msk [vmem:[%s3226 + $0xf1] sm:$0xff] %vm555, %v3171
      %3248 = vst.msk [vmem:[%s3226 + $0xf9] sm:$0xff] %vm555, %v3173
      %3249 = vst.msk [vmem:[%s3226 + $0x109] sm:$0xff] %vm555, %v3175
      %3250 = vst.msk [vmem:[%s3226 + $0x111] sm:$0xff] %vm555, %v3177
      %3251 = vst.msk [vmem:[%s3226 + $0x121] sm:$0xff] %vm555, %v3179
      %3252 = vst.msk [vmem:[%s3226 + $0x129] sm:$0xff] %vm555, %v3181
      %3253 = vst.msk [vmem:[%s3226 + $0x139] sm:$0xff] %vm555, %v3183
      %3254 = vst.msk [vmem:[%s3226 + $0x141] sm:$0xff] %vm555, %v3185
      %3255 = vst.msk [vmem:[%s3226 + $0x151] sm:$0xff] %vm555, %v3187
      %3256 = vst.msk [vmem:[%s3226 + $0x159] sm:$0xff] %vm555, %v3189
      %3257 = vst.msk [vmem:[%s3226 + $0x169] sm:$0xff] %vm555, %v3191
      %3258 = vst.msk [vmem:[%s3226 + $0x171] sm:$0xff] %vm555, %v3193
      %v3259 = vld [vmem:[#allocation3] sm:$0xff]
      %v3260 = vld [vmem:[#allocation3 + $0x8] sm:$0xff]
      %v3261 = vld [vmem:[#allocation3 + $0x18] sm:$0xff]
      %v3262 = vld [vmem:[#allocation3 + $0x20] sm:$0xff]
      %v3263 = vld [vmem:[#allocation3 + $0x30] sm:$0xff]
      %v3264 = vld [vmem:[#allocation3 + $0x38] sm:$0xff]
      %v3265 = vld [vmem:[#allocation3 + $0x48] sm:$0xff]
      %v3266 = vld [vmem:[#allocation3 + $0x50] sm:$0xff]
      %v3267 = vld [vmem:[#allocation3 + $0x60] sm:$0xff]
      %v3268 = vld [vmem:[#allocation3 + $0x68] sm:$0xff]
      %v3269 = vld [vmem:[#allocation3 + $0x78] sm:$0xff]
      %v3270 = vld [vmem:[#allocation3 + $0x80] sm:$0xff]
      %v3271 = vld [vmem:[#allocation3 + $0x90] sm:$0xff]
      %v3272 = vld [vmem:[#allocation3 + $0x98] sm:$0xff]
      %v3273 = vld [vmem:[#allocation3 + $0xa8] sm:$0xff]
      %v3274 = vld [vmem:[#allocation3 + $0xb0] sm:$0xff]
      %v3275 = vld [vmem:[#allocation3 + $0xc0] sm:$0xff]
      %v3276 = vld [vmem:[#allocation3 + $0xc8] sm:$0xff]
      %v3277 = vld [vmem:[#allocation3 + $0xd8] sm:$0xff]
      %v3278 = vld [vmem:[#allocation3 + $0xe0] sm:$0xff]
      %v3279 = vld [vmem:[#allocation3 + $0xf0] sm:$0xff]
      %v3280 = vld [vmem:[#allocation3 + $0xf8] sm:$0xff]
      %v3281 = vld [vmem:[#allocation3 + $0x108] sm:$0xff]
      %v3282 = vld [vmem:[#allocation3 + $0x110] sm:$0xff]
      %v3283 = vld [vmem:[#allocation3 + $0x120] sm:$0xff]
      %v3284 = vld [vmem:[#allocation3 + $0x128] sm:$0xff]
      %v3285 = vld [vmem:[#allocation3 + $0x138] sm:$0xff]
      %v3286 = vld [vmem:[#allocation3 + $0x140] sm:$0xff]
      %v3287 = vld [vmem:[#allocation3 + $0x150] sm:$0xff]
      %v3288 = vld [vmem:[#allocation3 + $0x158] sm:$0xff]
      %v3289 = vld [vmem:[#allocation3 + $0x168] sm:$0xff]
      %v3290 = vld [vmem:[#allocation3 + $0x170] sm:$0xff]
      %v3291 = vld [vmem:[%s10] sm:$0xff]
      %v3292 = vld [vmem:[#allocation3 + $0x1] sm:$0xff]
      %v3293 = vld [vmem:[#allocation3 + $0x9] sm:$0xff]
      %v3294 = vld [vmem:[#allocation3 + $0x19] sm:$0xff]
      %v3295 = vld [vmem:[#allocation3 + $0x21] sm:$0xff]
      %v3296 = vld [vmem:[#allocation3 + $0x31] sm:$0xff]
      %v3297 = vld [vmem:[#allocation3 + $0x39] sm:$0xff]
      %v3298 = vld [vmem:[#allocation3 + $0x49] sm:$0xff]
      %v3299 = vld [vmem:[#allocation3 + $0x51] sm:$0xff]
      %v3300 = vld [vmem:[#allocation3 + $0x61] sm:$0xff]
      %v3301 = vld [vmem:[#allocation3 + $0x69] sm:$0xff]
      %v3302 = vld [vmem:[#allocation3 + $0x79] sm:$0xff]
      %v3303 = vld [vmem:[#allocation3 + $0x81] sm:$0xff]
      %v3304 = vld [vmem:[#allocation3 + $0x91] sm:$0xff]
      %v3305 = vld [vmem:[#allocation3 + $0x99] sm:$0xff]
      %v3306 = vld [vmem:[#allocation3 + $0xa9] sm:$0xff]
      %v3307 = vld [vmem:[#allocation3 + $0xb1] sm:$0xff]
      %v3308 = vld [vmem:[#allocation3 + $0xc1] sm:$0xff]
      %v3309 = vld [vmem:[#allocation3 + $0xc9] sm:$0xff]
      %v3310 = vld [vmem:[#allocation3 + $0xd9] sm:$0xff]
      %v3311 = vld [vmem:[#allocation3 + $0xe1] sm:$0xff]
      %v3312 = vld [vmem:[#allocation3 + $0xf1] sm:$0xff]
      %v3313 = vld [vmem:[#allocation3 + $0xf9] sm:$0xff]
      %v3314 = vld [vmem:[#allocation3 + $0x109] sm:$0xff]
      %v3315 = vld [vmem:[#allocation3 + $0x111] sm:$0xff]
      %v3316 = vld [vmem:[#allocation3 + $0x121] sm:$0xff]
      %v3317 = vld [vmem:[#allocation3 + $0x129] sm:$0xff]
      %v3318 = vld [vmem:[#allocation3 + $0x139] sm:$0xff]
      %v3319 = vld [vmem:[#allocation3 + $0x141] sm:$0xff]
      %v3320 = vld [vmem:[#allocation3 + $0x151] sm:$0xff]
      %v3321 = vld [vmem:[#allocation3 + $0x159] sm:$0xff]
      %v3322 = vld [vmem:[#allocation3 + $0x169] sm:$0xff]
      %v3323 = vld [vmem:[#allocation3 + $0x171] sm:$0xff]
      %s3324 = scalar_lea.vmem %s10, 8
      %v3325 = vld [vmem:[%s3324] sm:$0xff]
      %v3327 = vsel %vm555, %v3325, 0
      %v3330 = vsel %vm555, %v3292, 0
      %v3333 = vsel %vm555, %v3293, 0
      %v3336 = vsel %vm555, %v3294, 0
      %v3339 = vsel %vm555, %v3295, 0
      %v3342 = vsel %vm555, %v3296, 0
      %v3345 = vsel %vm555, %v3297, 0
      %v3348 = vsel %vm555, %v3298, 0
      %v3351 = vsel %vm555, %v3299, 0
      %v3354 = vsel %vm555, %v3300, 0
      %v3357 = vsel %vm555, %v3301, 0
      %v3360 = vsel %vm555, %v3302, 0
      %v3363 = vsel %vm555, %v3303, 0
      %v3366 = vsel %vm555, %v3304, 0
      %v3369 = vsel %vm555, %v3305, 0
      %v3372 = vsel %vm555, %v3306, 0
      %v3375 = vsel %vm555, %v3307, 0
      %v3378 = vsel %vm555, %v3308, 0
      %v3381 = vsel %vm555, %v3309, 0
      %v3384 = vsel %vm555, %v3310, 0
      %v3387 = vsel %vm555, %v3311, 0
      %v3390 = vsel %vm555, %v3312, 0
      %v3393 = vsel %vm555, %v3313, 0
      %v3396 = vsel %vm555, %v3314, 0
      %v3399 = vsel %vm555, %v3315, 0
      %v3402 = vsel %vm555, %v3316, 0
      %v3405 = vsel %vm555, %v3317, 0
      %v3408 = vsel %vm555, %v3318, 0
      %v3411 = vsel %vm555, %v3319, 0
      %v3414 = vsel %vm555, %v3320, 0
      %v3417 = vsel %vm555, %v3321, 0
      %v3420 = vsel %vm555, %v3322, 0
      %v3423 = vsel %vm555, %v3323, 0
      %3425 = vmatprep.subr.mxu0 0.0
      %3426 = vmatpush1.xpose.msra.mxu0 %v3375
      %3427 = vmatprep.subr.mxu0 0.0
      %3428 = vmatpush1.xpose.msra.mxu0 %v3372
      %3429 = vmatprep.subr.mxu0 0.0
      %3430 = vmatpush1.xpose.msra.mxu0 %v3369
      %3431 = vmatprep.subr.mxu0 0.0
      %3432 = vmatpush1.xpose.msra.mxu0 %v3366
      %3433 = vmatprep.subr.mxu0 0.0
      %3434 = vmatpush1.xpose.msra.mxu0 %v3363
      %3435 = vmatprep.subr.mxu0 0.0
      %3436 = vmatpush1.xpose.msra.mxu0 %v3360
      %3437 = vmatprep.subr.mxu0 0.0
      %3438 = vmatpush1.xpose.msra.mxu0 %v3357
      %3439 = vmatprep.subr.mxu0 0.0
      %3440 = vmatpush1.xpose.msra.mxu0 %v3354
      %3441 = vmatprep.subr.mxu0 0.0
      %3442 = vmatpush1.xpose.msra.mxu0 %v3351
      %3443 = vmatprep.subr.mxu0 0.0
      %3444 = vmatpush1.xpose.msra.mxu0 %v3348
      %3445 = vmatprep.subr.mxu0 0.0
      %3446 = vmatpush1.xpose.msra.mxu0 %v3345
      %3447 = vmatprep.subr.mxu0 0.0
      %3448 = vmatpush1.xpose.msra.mxu0 %v3342
      %3449 = vmatprep.subr.mxu0 0.0
      %3450 = vmatpush1.xpose.msra.mxu0 %v3339
      %3451 = vmatprep.subr.mxu0 0.0
      %3452 = vmatpush1.xpose.msra.mxu0 %v3336
      %3453 = vmatprep.subr.mxu0 0.0
      %3454 = vmatpush1.xpose.msra.mxu0 %v3333
      %3455 = vmatprep.subr.mxu0 0.0
      %3456 = vmatpush1.xpose.msra.mxu0 %v3330
      %3457 = vmatprep.subr.mxu0 0.0
      %3458 = vmatpush2.xpose.msra.mxu0 %v3423
      %3459 = vmatprep.subr.mxu0 0.0
      %3460 = vmatpush2.xpose.msra.mxu0 %v3420
      %3461 = vmatprep.subr.mxu0 0.0
      %3462 = vmatpush2.xpose.msra.mxu0 %v3417
      %3463 = vmatprep.subr.mxu0 0.0
      %3464 = vmatpush2.xpose.msra.mxu0 %v3414
      %3465 = vmatprep.subr.mxu0 0.0
      %3466 = vmatpush2.xpose.msra.mxu0 %v3411
      %3467 = vmatprep.subr.mxu0 0.0
      %3468 = vmatpush2.xpose.msra.mxu0 %v3408
      %3469 = vmatprep.subr.mxu0 0.0
      %3470 = vmatpush2.xpose.msra.mxu0 %v3405
      %3471 = vmatprep.subr.mxu0 0.0
      %3472 = vmatpush2.xpose.msra.mxu0 %v3402
      %3473 = vmatprep.subr.mxu0 0.0
      %3474 = vmatpush2.xpose.msra.mxu0 %v3399
      %3475 = vmatprep.subr.mxu0 0.0
      %3476 = vmatpush2.xpose.msra.mxu0 %v3396
      %3477 = vmatprep.subr.mxu0 0.0
      %3478 = vmatpush2.xpose.msra.mxu0 %v3393
      %3479 = vmatprep.subr.mxu0 0.0
      %3480 = vmatpush2.xpose.msra.mxu0 %v3390
      %3481 = vmatprep.subr.mxu0 0.0
      %3482 = vmatpush2.xpose.msra.mxu0 %v3387
      %3483 = vmatprep.subr.mxu0 0.0
      %3484 = vmatpush2.xpose.msra.mxu0 %v3384
      %3485 = vmatprep.subr.mxu0 0.0
      %3486 = vmatpush2.xpose.msra.mxu0 %v3381
      %3487 = vmatprep.subr.mxu0 0.0
      %3488 = vmatpush2.xpose.msra.mxu0 %v3378
      %3489 = vmatprep.mubr.f32.mxu0 0.0
      %3490 = vmatmul.mubr.f32.gmra.mxu0 %v3327
      %v3491 = vpop.f32.mrf.mxu0
      %v3492 = vadd.f32 0.0, %v3491
      %v3493 = vpop.f32.mrf.mxu0
      %v3494 = vadd.f32 0.0, %v3493
      %3495 = vdwg.mxu0
      %v3497 = vsel %vm555, %v3291, 0
      %v3500 = vsel %vm555, %v3259, 0
      %v3503 = vsel %vm555, %v3260, 0
      %v3506 = vsel %vm555, %v3261, 0
      %v3509 = vsel %vm555, %v3262, 0
      %v3512 = vsel %vm555, %v3263, 0
      %v3515 = vsel %vm555, %v3264, 0
      %v3518 = vsel %vm555, %v3265, 0
      %v3521 = vsel %vm555, %v3266, 0
      %v3524 = vsel %vm555, %v3267, 0
      %v3527 = vsel %vm555, %v3268, 0
      %v3530 = vsel %vm555, %v3269, 0
      %v3533 = vsel %vm555, %v3270, 0
      %v3536 = vsel %vm555, %v3271, 0
      %v3539 = vsel %vm555, %v3272, 0
      %v3542 = vsel %vm555, %v3273, 0
      %v3545 = vsel %vm555, %v3274, 0
      %v3548 = vsel %vm555, %v3275, 0
      %v3551 = vsel %vm555, %v3276, 0
      %v3554 = vsel %vm555, %v3277, 0
      %v3557 = vsel %vm555, %v3278, 0
      %v3560 = vsel %vm555, %v3279, 0
      %v3563 = vsel %vm555, %v3280, 0
      %v3566 = vsel %vm555, %v3281, 0
      %v3569 = vsel %vm555, %v3282, 0
      %v3572 = vsel %vm555, %v3283, 0
      %v3575 = vsel %vm555, %v3284, 0
      %v3578 = vsel %vm555, %v3285, 0
      %v3581 = vsel %vm555, %v3286, 0
      %v3584 = vsel %vm555, %v3287, 0
      %v3587 = vsel %vm555, %v3288, 0
      %v3590 = vsel %vm555, %v3289, 0
      %v3593 = vsel %vm555, %v3290, 0
      %3595 = vmatprep.subr.mxu0 0.0
      %3596 = vmatpush1.xpose.msra.mxu0 %v3545
      %3597 = vmatprep.subr.mxu0 0.0
      %3598 = vmatpush1.xpose.msra.mxu0 %v3542
      %3599 = vmatprep.subr.mxu0 0.0
      %3600 = vmatpush1.xpose.msra.mxu0 %v3539
      %3601 = vmatprep.subr.mxu0 0.0
      %3602 = vmatpush1.xpose.msra.mxu0 %v3536
      %3603 = vmatprep.subr.mxu0 0.0
      %3604 = vmatpush1.xpose.msra.mxu0 %v3533
      %3605 = vmatprep.subr.mxu0 0.0
      %3606 = vmatpush1.xpose.msra.mxu0 %v3530
      %3607 = vmatprep.subr.mxu0 0.0
      %3608 = vmatpush1.xpose.msra.mxu0 %v3527
      %3609 = vmatprep.subr.mxu0 0.0
      %3610 = vmatpush1.xpose.msra.mxu0 %v3524
      %3611 = vmatprep.subr.mxu0 0.0
      %3612 = vmatpush1.xpose.msra.mxu0 %v3521
      %3613 = vmatprep.subr.mxu0 0.0
      %3614 = vmatpush1.xpose.msra.mxu0 %v3518
      %3615 = vmatprep.subr.mxu0 0.0
      %3616 = vmatpush1.xpose.msra.mxu0 %v3515
      %3617 = vmatprep.subr.mxu0 0.0
      %3618 = vmatpush1.xpose.msra.mxu0 %v3512
      %3619 = vmatprep.subr.mxu0 0.0
      %3620 = vmatpush1.xpose.msra.mxu0 %v3509
      %3621 = vmatprep.subr.mxu0 0.0
      %3622 = vmatpush1.xpose.msra.mxu0 %v3506
      %3623 = vmatprep.subr.mxu0 0.0
      %3624 = vmatpush1.xpose.msra.mxu0 %v3503
      %3625 = vmatprep.subr.mxu0 0.0
      %3626 = vmatpush1.xpose.msra.mxu0 %v3500
      %3627 = vmatprep.subr.mxu0 0.0
      %3628 = vmatpush2.xpose.msra.mxu0 %v3593
      %3629 = vmatprep.subr.mxu0 0.0
      %3630 = vmatpush2.xpose.msra.mxu0 %v3590
      %3631 = vmatprep.subr.mxu0 0.0
      %3632 = vmatpush2.xpose.msra.mxu0 %v3587
      %3633 = vmatprep.subr.mxu0 0.0
      %3634 = vmatpush2.xpose.msra.mxu0 %v3584
      %3635 = vmatprep.subr.mxu0 0.0
      %3636 = vmatpush2.xpose.msra.mxu0 %v3581
      %3637 = vmatprep.subr.mxu0 0.0
      %3638 = vmatpush2.xpose.msra.mxu0 %v3578
      %3639 = vmatprep.subr.mxu0 0.0
      %3640 = vmatpush2.xpose.msra.mxu0 %v3575
      %3641 = vmatprep.subr.mxu0 0.0
      %3642 = vmatpush2.xpose.msra.mxu0 %v3572
      %3643 = vmatprep.subr.mxu0 0.0
      %3644 = vmatpush2.xpose.msra.mxu0 %v3569
      %3645 = vmatprep.subr.mxu0 0.0
      %3646 = vmatpush2.xpose.msra.mxu0 %v3566
      %3647 = vmatprep.subr.mxu0 0.0
      %3648 = vmatpush2.xpose.msra.mxu0 %v3563
      %3649 = vmatprep.subr.mxu0 0.0
      %3650 = vmatpush2.xpose.msra.mxu0 %v3560
      %3651 = vmatprep.subr.mxu0 0.0
      %3652 = vmatpush2.xpose.msra.mxu0 %v3557
      %3653 = vmatprep.subr.mxu0 0.0
      %3654 = vmatpush2.xpose.msra.mxu0 %v3554
      %3655 = vmatprep.subr.mxu0 0.0
      %3656 = vmatpush2.xpose.msra.mxu0 %v3551
      %3657 = vmatprep.subr.mxu0 0.0
      %3658 = vmatpush2.xpose.msra.mxu0 %v3548
      %3659 = vmatprep.mubr.f32.mxu0 0.0
      %3660 = vmatmul.mubr.f32.gmra.mxu0 %v3497
      %v3661 = vpop.f32.mrf.mxu0
      %v3662 = vadd.f32 %v3492, %v3661
      %v3663 = vpop.f32.mrf.mxu0
      %v3664 = vadd.f32 %v3494, %v3663
      %3665 = vdwg.mxu0
      %v3666 = vld [vmem:[#allocation3 + $0x2] sm:$0xff]
      %v3667 = vld [vmem:[#allocation3 + $0xa] sm:$0xff]
      %v3668 = vld [vmem:[#allocation3 + $0x1a] sm:$0xff]
      %v3669 = vld [vmem:[#allocation3 + $0x22] sm:$0xff]
      %v3670 = vld [vmem:[#allocation3 + $0x32] sm:$0xff]
      %v3671 = vld [vmem:[#allocation3 + $0x3a] sm:$0xff]
      %v3672 = vld [vmem:[#allocation3 + $0x4a] sm:$0xff]
      %v3673 = vld [vmem:[#allocation3 + $0x52] sm:$0xff]
      %v3674 = vld [vmem:[#allocation3 + $0x62] sm:$0xff]
      %v3675 = vld [vmem:[#allocation3 + $0x6a] sm:$0xff]
      %v3676 = vld [vmem:[#allocation3 + $0x7a] sm:$0xff]
      %v3677 = vld [vmem:[#allocation3 + $0x82] sm:$0xff]
      %v3678 = vld [vmem:[#allocation3 + $0x92] sm:$0xff]
      %v3679 = vld [vmem:[#allocation3 + $0x9a] sm:$0xff]
      %v3680 = vld [vmem:[#allocation3 + $0xaa] sm:$0xff]
      %v3681 = vld [vmem:[#allocation3 + $0xb2] sm:$0xff]
      %v3682 = vld [vmem:[#allocation3 + $0xc2] sm:$0xff]
      %v3683 = vld [vmem:[#allocation3 + $0xca] sm:$0xff]
      %v3684 = vld [vmem:[#allocation3 + $0xda] sm:$0xff]
      %v3685 = vld [vmem:[#allocation3 + $0xe2] sm:$0xff]
      %v3686 = vld [vmem:[#allocation3 + $0xf2] sm:$0xff]
      %v3687 = vld [vmem:[#allocation3 + $0xfa] sm:$0xff]
      %v3688 = vld [vmem:[#allocation3 + $0x10a] sm:$0xff]
      %v3689 = vld [vmem:[#allocation3 + $0x112] sm:$0xff]
      %v3690 = vld [vmem:[#allocation3 + $0x122] sm:$0xff]
      %v3691 = vld [vmem:[#allocation3 + $0x12a] sm:$0xff]
      %v3692 = vld [vmem:[#allocation3 + $0x13a] sm:$0xff]
      %v3693 = vld [vmem:[#allocation3 + $0x142] sm:$0xff]
      %v3694 = vld [vmem:[#allocation3 + $0x152] sm:$0xff]
      %v3695 = vld [vmem:[#allocation3 + $0x15a] sm:$0xff]
      %v3696 = vld [vmem:[#allocation3 + $0x16a] sm:$0xff]
      %v3697 = vld [vmem:[#allocation3 + $0x172] sm:$0xff]
      %s3698 = scalar_lea.vmem %s10, 16
      %v3699 = vld [vmem:[%s3698] sm:$0xff]
      %v3701 = vsel %vm555, %v3699, 0
      %v3704 = vsel %vm555, %v3666, 0
      %v3707 = vsel %vm555, %v3667, 0
      %v3710 = vsel %vm555, %v3668, 0
      %v3713 = vsel %vm555, %v3669, 0
      %v3716 = vsel %vm555, %v3670, 0
      %v3719 = vsel %vm555, %v3671, 0
      %v3722 = vsel %vm555, %v3672, 0
      %v3725 = vsel %vm555, %v3673, 0
      %v3728 = vsel %vm555, %v3674, 0
      %v3731 = vsel %vm555, %v3675, 0
      %v3734 = vsel %vm555, %v3676, 0
      %v3737 = vsel %vm555, %v3677, 0
      %v3740 = vsel %vm555, %v3678, 0
      %v3743 = vsel %vm555, %v3679, 0
      %v3746 = vsel %vm555, %v3680, 0
      %v3749 = vsel %vm555, %v3681, 0
      %v3752 = vsel %vm555, %v3682, 0
      %v3755 = vsel %vm555, %v3683, 0
      %v3758 = vsel %vm555, %v3684, 0
      %v3761 = vsel %vm555, %v3685, 0
      %v3764 = vsel %vm555, %v3686, 0
      %v3767 = vsel %vm555, %v3687, 0
      %v3770 = vsel %vm555, %v3688, 0
      %v3773 = vsel %vm555, %v3689, 0
      %v3776 = vsel %vm555, %v3690, 0
      %v3779 = vsel %vm555, %v3691, 0
      %v3782 = vsel %vm555, %v3692, 0
      %v3785 = vsel %vm555, %v3693, 0
      %v3788 = vsel %vm555, %v3694, 0
      %v3791 = vsel %vm555, %v3695, 0
      %v3794 = vsel %vm555, %v3696, 0
      %v3797 = vsel %vm555, %v3697, 0
      %3799 = vmatprep.subr.mxu0 0.0
      %3800 = vmatpush1.xpose.msra.mxu0 %v3749
      %3801 = vmatprep.subr.mxu0 0.0
      %3802 = vmatpush1.xpose.msra.mxu0 %v3746
      %3803 = vmatprep.subr.mxu0 0.0
      %3804 = vmatpush1.xpose.msra.mxu0 %v3743
      %3805 = vmatprep.subr.mxu0 0.0
      %3806 = vmatpush1.xpose.msra.mxu0 %v3740
      %3807 = vmatprep.subr.mxu0 0.0
      %3808 = vmatpush1.xpose.msra.mxu0 %v3737
      %3809 = vmatprep.subr.mxu0 0.0
      %3810 = vmatpush1.xpose.msra.mxu0 %v3734
      %3811 = vmatprep.subr.mxu0 0.0
      %3812 = vmatpush1.xpose.msra.mxu0 %v3731
      %3813 = vmatprep.subr.mxu0 0.0
      %3814 = vmatpush1.xpose.msra.mxu0 %v3728
      %3815 = vmatprep.subr.mxu0 0.0
      %3816 = vmatpush1.xpose.msra.mxu0 %v3725
      %3817 = vmatprep.subr.mxu0 0.0
      %3818 = vmatpush1.xpose.msra.mxu0 %v3722
      %3819 = vmatprep.subr.mxu0 0.0
      %3820 = vmatpush1.xpose.msra.mxu0 %v3719
      %3821 = vmatprep.subr.mxu0 0.0
      %3822 = vmatpush1.xpose.msra.mxu0 %v3716
      %3823 = vmatprep.subr.mxu0 0.0
      %3824 = vmatpush1.xpose.msra.mxu0 %v3713
      %3825 = vmatprep.subr.mxu0 0.0
      %3826 = vmatpush1.xpose.msra.mxu0 %v3710
      %3827 = vmatprep.subr.mxu0 0.0
      %3828 = vmatpush1.xpose.msra.mxu0 %v3707
      %3829 = vmatprep.subr.mxu0 0.0
      %3830 = vmatpush1.xpose.msra.mxu0 %v3704
      %3831 = vmatprep.subr.mxu0 0.0
      %3832 = vmatpush2.xpose.msra.mxu0 %v3797
      %3833 = vmatprep.subr.mxu0 0.0
      %3834 = vmatpush2.xpose.msra.mxu0 %v3794
      %3835 = vmatprep.subr.mxu0 0.0
      %3836 = vmatpush2.xpose.msra.mxu0 %v3791
      %3837 = vmatprep.subr.mxu0 0.0
      %3838 = vmatpush2.xpose.msra.mxu0 %v3788
      %3839 = vmatprep.subr.mxu0 0.0
      %3840 = vmatpush2.xpose.msra.mxu0 %v3785
      %3841 = vmatprep.subr.mxu0 0.0
      %3842 = vmatpush2.xpose.msra.mxu0 %v3782
      %3843 = vmatprep.subr.mxu0 0.0
      %3844 = vmatpush2.xpose.msra.mxu0 %v3779
      %3845 = vmatprep.subr.mxu0 0.0
      %3846 = vmatpush2.xpose.msra.mxu0 %v3776
      %3847 = vmatprep.subr.mxu0 0.0
      %3848 = vmatpush2.xpose.msra.mxu0 %v3773
      %3849 = vmatprep.subr.mxu0 0.0
      %3850 = vmatpush2.xpose.msra.mxu0 %v3770
      %3851 = vmatprep.subr.mxu0 0.0
      %3852 = vmatpush2.xpose.msra.mxu0 %v3767
      %3853 = vmatprep.subr.mxu0 0.0
      %3854 = vmatpush2.xpose.msra.mxu0 %v3764
      %3855 = vmatprep.subr.mxu0 0.0
      %3856 = vmatpush2.xpose.msra.mxu0 %v3761
      %3857 = vmatprep.subr.mxu0 0.0
      %3858 = vmatpush2.xpose.msra.mxu0 %v3758
      %3859 = vmatprep.subr.mxu0 0.0
      %3860 = vmatpush2.xpose.msra.mxu0 %v3755
      %3861 = vmatprep.subr.mxu0 0.0
      %3862 = vmatpush2.xpose.msra.mxu0 %v3752
      %3863 = vmatprep.mubr.f32.mxu0 0.0
      %3864 = vmatmul.mubr.f32.gmra.mxu0 %v3701
      %v3865 = vpop.f32.mrf.mxu0
      %v3866 = vadd.f32 0.0, %v3865
      %v3867 = vpop.f32.mrf.mxu0
      %v3868 = vadd.f32 0.0, %v3867
      %3869 = vdwg.mxu0
      %v3870 = vadd.f32 %v3662, %v3866
      %v3871 = vadd.f32 %v3664, %v3868
      %v3872 = vld [vmem:[%s3226] sm:$0xff]
      %v3873 = vld [vmem:[%s3226 + $0x8] sm:$0xff]
      %v3874 = vld [vmem:[%s3226 + $0x18] sm:$0xff]
      %v3875 = vld [vmem:[%s3226 + $0x20] sm:$0xff]
      %v3876 = vld [vmem:[%s3226 + $0x30] sm:$0xff]
      %v3877 = vld [vmem:[%s3226 + $0x38] sm:$0xff]
      %v3878 = vld [vmem:[%s3226 + $0x48] sm:$0xff]
      %v3879 = vld [vmem:[%s3226 + $0x50] sm:$0xff]
      %v3880 = vld [vmem:[%s3226 + $0x60] sm:$0xff]
      %v3881 = vld [vmem:[%s3226 + $0x68] sm:$0xff]
      %v3882 = vld [vmem:[%s3226 + $0x78] sm:$0xff]
      %v3883 = vld [vmem:[%s3226 + $0x80] sm:$0xff]
      %v3884 = vld [vmem:[%s3226 + $0x90] sm:$0xff]
      %v3885 = vld [vmem:[%s3226 + $0x98] sm:$0xff]
      %v3886 = vld [vmem:[%s3226 + $0xa8] sm:$0xff]
      %v3887 = vld [vmem:[%s3226 + $0xb0] sm:$0xff]
      %v3888 = vld [vmem:[%s3226 + $0xc0] sm:$0xff]
      %v3889 = vld [vmem:[%s3226 + $0xc8] sm:$0xff]
      %v3890 = vld [vmem:[%s3226 + $0xd8] sm:$0xff]
      %v3891 = vld [vmem:[%s3226 + $0xe0] sm:$0xff]
      %v3892 = vld [vmem:[%s3226 + $0xf0] sm:$0xff]
      %v3893 = vld [vmem:[%s3226 + $0xf8] sm:$0xff]
      %v3894 = vld [vmem:[%s3226 + $0x108] sm:$0xff]
      %v3895 = vld [vmem:[%s3226 + $0x110] sm:$0xff]
      %v3896 = vld [vmem:[%s3226 + $0x120] sm:$0xff]
      %v3897 = vld [vmem:[%s3226 + $0x128] sm:$0xff]
      %v3898 = vld [vmem:[%s3226 + $0x138] sm:$0xff]
      %v3899 = vld [vmem:[%s3226 + $0x140] sm:$0xff]
      %v3900 = vld [vmem:[%s3226 + $0x150] sm:$0xff]
      %v3901 = vld [vmem:[%s3226 + $0x158] sm:$0xff]
      %v3902 = vld [vmem:[%s3226 + $0x168] sm:$0xff]
      %v3903 = vld [vmem:[%s3226 + $0x170] sm:$0xff]
      %s3904 = scalar_lea.vmem %s10, 24
      %v3905 = vld [vmem:[%s3904] sm:$0xff]
      %v3907 = vsel %vm555, %v3905, 0
      %v3910 = vsel %vm555, %v3872, 0
      %v3913 = vsel %vm555, %v3873, 0
      %v3916 = vsel %vm555, %v3874, 0
      %v3919 = vsel %vm555, %v3875, 0
      %v3922 = vsel %vm555, %v3876, 0
      %v3925 = vsel %vm555, %v3877, 0
      %v3928 = vsel %vm555, %v3878, 0
      %v3931 = vsel %vm555, %v3879, 0
      %v3934 = vsel %vm555, %v3880, 0
      %v3937 = vsel %vm555, %v3881, 0
      %v3940 = vsel %vm555, %v3882, 0
      %v3943 = vsel %vm555, %v3883, 0
      %v3946 = vsel %vm555, %v3884, 0
      %v3949 = vsel %vm555, %v3885, 0
      %v3952 = vsel %vm555, %v3886, 0
      %v3955 = vsel %vm555, %v3887, 0
      %v3958 = vsel %vm555, %v3888, 0
      %v3961 = vsel %vm555, %v3889, 0
      %v3964 = vsel %vm555, %v3890, 0
      %v3967 = vsel %vm555, %v3891, 0
      %v3970 = vsel %vm555, %v3892, 0
      %v3973 = vsel %vm555, %v3893, 0
      %v3976 = vsel %vm555, %v3894, 0
      %v3979 = vsel %vm555, %v3895, 0
      %v3982 = vsel %vm555, %v3896, 0
      %v3985 = vsel %vm555, %v3897, 0
      %v3988 = vsel %vm555, %v3898, 0
      %v3991 = vsel %vm555, %v3899, 0
      %v3994 = vsel %vm555, %v3900, 0
      %v3997 = vsel %vm555, %v3901, 0
      %v4000 = vsel %vm555, %v3902, 0
      %v4003 = vsel %vm555, %v3903, 0
      %4005 = vmatprep.subr.mxu0 0.0
      %4006 = vmatpush1.xpose.msra.mxu0 %v3955
      %4007 = vmatprep.subr.mxu0 0.0
      %4008 = vmatpush1.xpose.msra.mxu0 %v3952
      %4009 = vmatprep.subr.mxu0 0.0
      %4010 = vmatpush1.xpose.msra.mxu0 %v3949
      %4011 = vmatprep.subr.mxu0 0.0
      %4012 = vmatpush1.xpose.msra.mxu0 %v3946
      %4013 = vmatprep.subr.mxu0 0.0
      %4014 = vmatpush1.xpose.msra.mxu0 %v3943
      %4015 = vmatprep.subr.mxu0 0.0
      %4016 = vmatpush1.xpose.msra.mxu0 %v3940
      %4017 = vmatprep.subr.mxu0 0.0
      %4018 = vmatpush1.xpose.msra.mxu0 %v3937
      %4019 = vmatprep.subr.mxu0 0.0
      %4020 = vmatpush1.xpose.msra.mxu0 %v3934
      %4021 = vmatprep.subr.mxu0 0.0
      %4022 = vmatpush1.xpose.msra.mxu0 %v3931
      %4023 = vmatprep.subr.mxu0 0.0
      %4024 = vmatpush1.xpose.msra.mxu0 %v3928
      %4025 = vmatprep.subr.mxu0 0.0
      %4026 = vmatpush1.xpose.msra.mxu0 %v3925
      %4027 = vmatprep.subr.mxu0 0.0
      %4028 = vmatpush1.xpose.msra.mxu0 %v3922
      %4029 = vmatprep.subr.mxu0 0.0
      %4030 = vmatpush1.xpose.msra.mxu0 %v3919
      %4031 = vmatprep.subr.mxu0 0.0
      %4032 = vmatpush1.xpose.msra.mxu0 %v3916
      %4033 = vmatprep.subr.mxu0 0.0
      %4034 = vmatpush1.xpose.msra.mxu0 %v3913
      %4035 = vmatprep.subr.mxu0 0.0
      %4036 = vmatpush1.xpose.msra.mxu0 %v3910
      %4037 = vmatprep.subr.mxu0 0.0
      %4038 = vmatpush2.xpose.msra.mxu0 %v4003
      %4039 = vmatprep.subr.mxu0 0.0
      %4040 = vmatpush2.xpose.msra.mxu0 %v4000
      %4041 = vmatprep.subr.mxu0 0.0
      %4042 = vmatpush2.xpose.msra.mxu0 %v3997
      %4043 = vmatprep.subr.mxu0 0.0
      %4044 = vmatpush2.xpose.msra.mxu0 %v3994
      %4045 = vmatprep.subr.mxu0 0.0
      %4046 = vmatpush2.xpose.msra.mxu0 %v3991
      %4047 = vmatprep.subr.mxu0 0.0
      %4048 = vmatpush2.xpose.msra.mxu0 %v3988
      %4049 = vmatprep.subr.mxu0 0.0
      %4050 = vmatpush2.xpose.msra.mxu0 %v3985
      %4051 = vmatprep.subr.mxu0 0.0
      %4052 = vmatpush2.xpose.msra.mxu0 %v3982
      %4053 = vmatprep.subr.mxu0 0.0
      %4054 = vmatpush2.xpose.msra.mxu0 %v3979
      %4055 = vmatprep.subr.mxu0 0.0
      %4056 = vmatpush2.xpose.msra.mxu0 %v3976
      %4057 = vmatprep.subr.mxu0 0.0
      %4058 = vmatpush2.xpose.msra.mxu0 %v3973
      %4059 = vmatprep.subr.mxu0 0.0
      %4060 = vmatpush2.xpose.msra.mxu0 %v3970
      %4061 = vmatprep.subr.mxu0 0.0
      %4062 = vmatpush2.xpose.msra.mxu0 %v3967
      %4063 = vmatprep.subr.mxu0 0.0
      %4064 = vmatpush2.xpose.msra.mxu0 %v3964
      %4065 = vmatprep.subr.mxu0 0.0
      %4066 = vmatpush2.xpose.msra.mxu0 %v3961
      %4067 = vmatprep.subr.mxu0 0.0
      %4068 = vmatpush2.xpose.msra.mxu0 %v3958
      %4069 = vmatprep.mubr.f32.mxu0 0.0
      %4070 = vmatmul.mubr.f32.gmra.mxu0 %v3907
      %v4071 = vpop.f32.mrf.mxu0
      %v4072 = vadd.f32 0.0, %v4071
      %v4073 = vpop.f32.mrf.mxu0
      %v4074 = vadd.f32 0.0, %v4073
      %4075 = vdwg.mxu0
      %v4076 = vadd.f32 %v3870, %v4072
      %v4077 = vadd.f32 %v3871, %v4074
      %v4078 = vld [vmem:[%s3226 + $0x1] sm:$0xff]
      %v4079 = vld [vmem:[%s3226 + $0x9] sm:$0xff]
      %v4080 = vld [vmem:[%s3226 + $0x19] sm:$0xff]
      %v4081 = vld [vmem:[%s3226 + $0x21] sm:$0xff]
      %v4082 = vld [vmem:[%s3226 + $0x31] sm:$0xff]
      %v4083 = vld [vmem:[%s3226 + $0x39] sm:$0xff]
      %v4084 = vld [vmem:[%s3226 + $0x49] sm:$0xff]
      %v4085 = vld [vmem:[%s3226 + $0x51] sm:$0xff]
      %v4086 = vld [vmem:[%s3226 + $0x61] sm:$0xff]
      %v4087 = vld [vmem:[%s3226 + $0x69] sm:$0xff]
      %v4088 = vld [vmem:[%s3226 + $0x79] sm:$0xff]
      %v4089 = vld [vmem:[%s3226 + $0x81] sm:$0xff]
      %v4090 = vld [vmem:[%s3226 + $0x91] sm:$0xff]
      %v4091 = vld [vmem:[%s3226 + $0x99] sm:$0xff]
      %v4092 = vld [vmem:[%s3226 + $0xa9] sm:$0xff]
      %v4093 = vld [vmem:[%s3226 + $0xb1] sm:$0xff]
      %v4094 = vld [vmem:[%s3226 + $0xc1] sm:$0xff]
      %v4095 = vld [vmem:[%s3226 + $0xc9] sm:$0xff]
      %v4096 = vld [vmem:[%s3226 + $0xd9] sm:$0xff]
      %v4097 = vld [vmem:[%s3226 + $0xe1] sm:$0xff]
      %v4098 = vld [vmem:[%s3226 + $0xf1] sm:$0xff]
      %v4099 = vld [vmem:[%s3226 + $0xf9] sm:$0xff]
      %v4100 = vld [vmem:[%s3226 + $0x109] sm:$0xff]
      %v4101 = vld [vmem:[%s3226 + $0x111] sm:$0xff]
      %v4102 = vld [vmem:[%s3226 + $0x121] sm:$0xff]
      %v4103 = vld [vmem:[%s3226 + $0x129] sm:$0xff]
      %v4104 = vld [vmem:[%s3226 + $0x139] sm:$0xff]
      %v4105 = vld [vmem:[%s3226 + $0x141] sm:$0xff]
      %v4106 = vld [vmem:[%s3226 + $0x151] sm:$0xff]
      %v4107 = vld [vmem:[%s3226 + $0x159] sm:$0xff]
      %v4108 = vld [vmem:[%s3226 + $0x169] sm:$0xff]
      %v4109 = vld [vmem:[%s3226 + $0x171] sm:$0xff]
      %s4110 = scalar_lea.vmem %s10, 32
      %v4111 = vld [vmem:[%s4110] sm:$0xff]
      %v4113 = vsel %vm555, %v4111, 0
      %v4116 = vsel %vm555, %v4078, 0
      %v4119 = vsel %vm555, %v4079, 0
      %v4122 = vsel %vm555, %v4080, 0
      %v4125 = vsel %vm555, %v4081, 0
      %v4128 = vsel %vm555, %v4082, 0
      %v4131 = vsel %vm555, %v4083, 0
      %v4134 = vsel %vm555, %v4084, 0
      %v4137 = vsel %vm555, %v4085, 0
      %v4140 = vsel %vm555, %v4086, 0
      %v4143 = vsel %vm555, %v4087, 0
      %v4146 = vsel %vm555, %v4088, 0
      %v4149 = vsel %vm555, %v4089, 0
      %v4152 = vsel %vm555, %v4090, 0
      %v4155 = vsel %vm555, %v4091, 0
      %v4158 = vsel %vm555, %v4092, 0
      %v4161 = vsel %vm555, %v4093, 0
      %v4164 = vsel %vm555, %v4094, 0
      %v4167 = vsel %vm555, %v4095, 0
      %v4170 = vsel %vm555, %v4096, 0
      %v4173 = vsel %vm555, %v4097, 0
      %v4176 = vsel %vm555, %v4098, 0
      %v4179 = vsel %vm555, %v4099, 0
      %v4182 = vsel %vm555, %v4100, 0
      %v4185 = vsel %vm555, %v4101, 0
      %v4188 = vsel %vm555, %v4102, 0
      %v4191 = vsel %vm555, %v4103, 0
      %v4194 = vsel %vm555, %v4104, 0
      %v4197 = vsel %vm555, %v4105, 0
      %v4200 = vsel %vm555, %v4106, 0
      %v4203 = vsel %vm555, %v4107, 0
      %v4206 = vsel %vm555, %v4108, 0
      %v4209 = vsel %vm555, %v4109, 0
      %4211 = vmatprep.subr.mxu0 0.0
      %4212 = vmatpush1.xpose.msra.mxu0 %v4161
      %4213 = vmatprep.subr.mxu0 0.0
      %4214 = vmatpush1.xpose.msra.mxu0 %v4158
      %4215 = vmatprep.subr.mxu0 0.0
      %4216 = vmatpush1.xpose.msra.mxu0 %v4155
      %4217 = vmatprep.subr.mxu0 0.0
      %4218 = vmatpush1.xpose.msra.mxu0 %v4152
      %4219 = vmatprep.subr.mxu0 0.0
      %4220 = vmatpush1.xpose.msra.mxu0 %v4149
      %4221 = vmatprep.subr.mxu0 0.0
      %4222 = vmatpush1.xpose.msra.mxu0 %v4146
      %4223 = vmatprep.subr.mxu0 0.0
      %4224 = vmatpush1.xpose.msra.mxu0 %v4143
      %4225 = vmatprep.subr.mxu0 0.0
      %4226 = vmatpush1.xpose.msra.mxu0 %v4140
      %4227 = vmatprep.subr.mxu0 0.0
      %4228 = vmatpush1.xpose.msra.mxu0 %v4137
      %4229 = vmatprep.subr.mxu0 0.0
      %4230 = vmatpush1.xpose.msra.mxu0 %v4134
      %4231 = vmatprep.subr.mxu0 0.0
      %4232 = vmatpush1.xpose.msra.mxu0 %v4131
      %4233 = vmatprep.subr.mxu0 0.0
      %4234 = vmatpush1.xpose.msra.mxu0 %v4128
      %4235 = vmatprep.subr.mxu0 0.0
      %4236 = vmatpush1.xpose.msra.mxu0 %v4125
      %4237 = vmatprep.subr.mxu0 0.0
      %4238 = vmatpush1.xpose.msra.mxu0 %v4122
      %4239 = vmatprep.subr.mxu0 0.0
      %4240 = vmatpush1.xpose.msra.mxu0 %v4119
      %4241 = vmatprep.subr.mxu0 0.0
      %4242 = vmatpush1.xpose.msra.mxu0 %v4116
      %4243 = vmatprep.subr.mxu0 0.0
      %4244 = vmatpush2.xpose.msra.mxu0 %v4209
      %4245 = vmatprep.subr.mxu0 0.0
      %4246 = vmatpush2.xpose.msra.mxu0 %v4206
      %4247 = vmatprep.subr.mxu0 0.0
      %4248 = vmatpush2.xpose.msra.mxu0 %v4203
      %4249 = vmatprep.subr.mxu0 0.0
      %4250 = vmatpush2.xpose.msra.mxu0 %v4200
      %4251 = vmatprep.subr.mxu0 0.0
      %4252 = vmatpush2.xpose.msra.mxu0 %v4197
      %4253 = vmatprep.subr.mxu0 0.0
      %4254 = vmatpush2.xpose.msra.mxu0 %v4194
      %4255 = vmatprep.subr.mxu0 0.0
      %4256 = vmatpush2.xpose.msra.mxu0 %v4191
      %4257 = vmatprep.subr.mxu0 0.0
      %4258 = vmatpush2.xpose.msra.mxu0 %v4188
      %4259 = vmatprep.subr.mxu0 0.0
      %4260 = vmatpush2.xpose.msra.mxu0 %v4185
      %4261 = vmatprep.subr.mxu0 0.0
      %4262 = vmatpush2.xpose.msra.mxu0 %v4182
      %4263 = vmatprep.subr.mxu0 0.0
      %4264 = vmatpush2.xpose.msra.mxu0 %v4179
      %4265 = vmatprep.subr.mxu0 0.0
      %4266 = vmatpush2.xpose.msra.mxu0 %v4176
      %4267 = vmatprep.subr.mxu0 0.0
      %4268 = vmatpush2.xpose.msra.mxu0 %v4173
      %4269 = vmatprep.subr.mxu0 0.0
      %4270 = vmatpush2.xpose.msra.mxu0 %v4170
      %4271 = vmatprep.subr.mxu0 0.0
      %4272 = vmatpush2.xpose.msra.mxu0 %v4167
      %4273 = vmatprep.subr.mxu0 0.0
      %4274 = vmatpush2.xpose.msra.mxu0 %v4164
      %4275 = vmatprep.mubr.f32.mxu0 0.0
      %4276 = vmatmul.mubr.f32.gmra.mxu0 %v4113
      %v4277 = vpop.f32.mrf.mxu0
      %v4278 = vadd.f32 0.0, %v4277
      %v4279 = vpop.f32.mrf.mxu0
      %v4280 = vadd.f32 0.0, %v4279
      %4281 = vdwg.mxu0
      %v4282 = vadd.f32 %v4076, %v4278
      %v4283 = vadd.f32 %v4077, %v4280
      %v4284 = vld [vmem:[%s3226 + $0x2] sm:$0xff]
      %v4285 = vld [vmem:[%s3226 + $0xa] sm:$0xff]
      %v4286 = vld [vmem:[%s3226 + $0x1a] sm:$0xff]
      %v4287 = vld [vmem:[%s3226 + $0x22] sm:$0xff]
      %v4288 = vld [vmem:[%s3226 + $0x32] sm:$0xff]
      %v4289 = vld [vmem:[%s3226 + $0x3a] sm:$0xff]
      %v4290 = vld [vmem:[%s3226 + $0x4a] sm:$0xff]
      %v4291 = vld [vmem:[%s3226 + $0x52] sm:$0xff]
      %v4292 = vld [vmem:[%s3226 + $0x62] sm:$0xff]
      %v4293 = vld [vmem:[%s3226 + $0x6a] sm:$0xff]
      %v4294 = vld [vmem:[%s3226 + $0x7a] sm:$0xff]
      %v4295 = vld [vmem:[%s3226 + $0x82] sm:$0xff]
      %v4296 = vld [vmem:[%s3226 + $0x92] sm:$0xff]
      %v4297 = vld [vmem:[%s3226 + $0x9a] sm:$0xff]
      %v4298 = vld [vmem:[%s3226 + $0xaa] sm:$0xff]
      %v4299 = vld [vmem:[%s3226 + $0xb2] sm:$0xff]
      %v4300 = vld [vmem:[%s3226 + $0xc2] sm:$0xff]
      %v4301 = vld [vmem:[%s3226 + $0xca] sm:$0xff]
      %v4302 = vld [vmem:[%s3226 + $0xda] sm:$0xff]
      %v4303 = vld [vmem:[%s3226 + $0xe2] sm:$0xff]
      %v4304 = vld [vmem:[%s3226 + $0xf2] sm:$0xff]
      %v4305 = vld [vmem:[%s3226 + $0xfa] sm:$0xff]
      %v4306 = vld [vmem:[%s3226 + $0x10a] sm:$0xff]
      %v4307 = vld [vmem:[%s3226 + $0x112] sm:$0xff]
      %v4308 = vld [vmem:[%s3226 + $0x122] sm:$0xff]
      %v4309 = vld [vmem:[%s3226 + $0x12a] sm:$0xff]
      %v4310 = vld [vmem:[%s3226 + $0x13a] sm:$0xff]
      %v4311 = vld [vmem:[%s3226 + $0x142] sm:$0xff]
      %v4312 = vld [vmem:[%s3226 + $0x152] sm:$0xff]
      %v4313 = vld [vmem:[%s3226 + $0x15a] sm:$0xff]
      %v4314 = vld [vmem:[%s3226 + $0x16a] sm:$0xff]
      %v4315 = vld [vmem:[%s3226 + $0x172] sm:$0xff]
      %s4316 = scalar_lea.vmem %s10, 40
      %v4317 = vld [vmem:[%s4316] sm:$0xff]
      %v4319 = vsel %vm555, %v4317, 0
      %v4322 = vsel %vm555, %v4284, 0
      %v4325 = vsel %vm555, %v4285, 0
      %v4328 = vsel %vm555, %v4286, 0
      %v4331 = vsel %vm555, %v4287, 0
      %v4334 = vsel %vm555, %v4288, 0
      %v4337 = vsel %vm555, %v4289, 0
      %v4340 = vsel %vm555, %v4290, 0
      %v4343 = vsel %vm555, %v4291, 0
      %v4346 = vsel %vm555, %v4292, 0
      %v4349 = vsel %vm555, %v4293, 0
      %v4352 = vsel %vm555, %v4294, 0
      %v4355 = vsel %vm555, %v4295, 0
      %v4358 = vsel %vm555, %v4296, 0
      %v4361 = vsel %vm555, %v4297, 0
      %v4364 = vsel %vm555, %v4298, 0
      %v4367 = vsel %vm555, %v4299, 0
      %v4370 = vsel %vm555, %v4300, 0
      %v4373 = vsel %vm555, %v4301, 0
      %v4376 = vsel %vm555, %v4302, 0
      %v4379 = vsel %vm555, %v4303, 0
      %v4382 = vsel %vm555, %v4304, 0
      %v4385 = vsel %vm555, %v4305, 0
      %v4388 = vsel %vm555, %v4306, 0
      %v4391 = vsel %vm555, %v4307, 0
      %v4394 = vsel %vm555, %v4308, 0
      %v4397 = vsel %vm555, %v4309, 0
      %v4400 = vsel %vm555, %v4310, 0
      %v4403 = vsel %vm555, %v4311, 0
      %v4406 = vsel %vm555, %v4312, 0
      %v4409 = vsel %vm555, %v4313, 0
      %v4412 = vsel %vm555, %v4314, 0
      %v4415 = vsel %vm555, %v4315, 0
      %4417 = vmatprep.subr.mxu0 0.0
      %4418 = vmatpush1.xpose.msra.mxu0 %v4367
      %4419 = vmatprep.subr.mxu0 0.0
      %4420 = vmatpush1.xpose.msra.mxu0 %v4364
      %4421 = vmatprep.subr.mxu0 0.0
      %4422 = vmatpush1.xpose.msra.mxu0 %v4361
      %4423 = vmatprep.subr.mxu0 0.0
      %4424 = vmatpush1.xpose.msra.mxu0 %v4358
      %4425 = vmatprep.subr.mxu0 0.0
      %4426 = vmatpush1.xpose.msra.mxu0 %v4355
      %4427 = vmatprep.subr.mxu0 0.0
      %4428 = vmatpush1.xpose.msra.mxu0 %v4352
      %4429 = vmatprep.subr.mxu0 0.0
      %4430 = vmatpush1.xpose.msra.mxu0 %v4349
      %4431 = vmatprep.subr.mxu0 0.0
      %4432 = vmatpush1.xpose.msra.mxu0 %v4346
      %4433 = vmatprep.subr.mxu0 0.0
      %4434 = vmatpush1.xpose.msra.mxu0 %v4343
      %4435 = vmatprep.subr.mxu0 0.0
      %4436 = vmatpush1.xpose.msra.mxu0 %v4340
      %4437 = vmatprep.subr.mxu0 0.0
      %4438 = vmatpush1.xpose.msra.mxu0 %v4337
      %4439 = vmatprep.subr.mxu0 0.0
      %4440 = vmatpush1.xpose.msra.mxu0 %v4334
      %4441 = vmatprep.subr.mxu0 0.0
      %4442 = vmatpush1.xpose.msra.mxu0 %v4331
      %4443 = vmatprep.subr.mxu0 0.0
      %4444 = vmatpush1.xpose.msra.mxu0 %v4328
      %4445 = vmatprep.subr.mxu0 0.0
      %4446 = vmatpush1.xpose.msra.mxu0 %v4325
      %4447 = vmatprep.subr.mxu0 0.0
      %4448 = vmatpush1.xpose.msra.mxu0 %v4322
      %4449 = vmatprep.subr.mxu0 0.0
      %4450 = vmatpush2.xpose.msra.mxu0 %v4415
      %4451 = vmatprep.subr.mxu0 0.0
      %4452 = vmatpush2.xpose.msra.mxu0 %v4412
      %4453 = vmatprep.subr.mxu0 0.0
      %4454 = vmatpush2.xpose.msra.mxu0 %v4409
      %4455 = vmatprep.subr.mxu0 0.0
      %4456 = vmatpush2.xpose.msra.mxu0 %v4406
      %4457 = vmatprep.subr.mxu0 0.0
      %4458 = vmatpush2.xpose.msra.mxu0 %v4403
      %4459 = vmatprep.subr.mxu0 0.0
      %4460 = vmatpush2.xpose.msra.mxu0 %v4400
      %4461 = vmatprep.subr.mxu0 0.0
      %4462 = vmatpush2.xpose.msra.mxu0 %v4397
      %4463 = vmatprep.subr.mxu0 0.0
      %4464 = vmatpush2.xpose.msra.mxu0 %v4394
      %4465 = vmatprep.subr.mxu0 0.0
      %4466 = vmatpush2.xpose.msra.mxu0 %v4391
      %4467 = vmatprep.subr.mxu0 0.0
      %4468 = vmatpush2.xpose.msra.mxu0 %v4388
      %4469 = vmatprep.subr.mxu0 0.0
      %4470 = vmatpush2.xpose.msra.mxu0 %v4385
      %4471 = vmatprep.subr.mxu0 0.0
      %4472 = vmatpush2.xpose.msra.mxu0 %v4382
      %4473 = vmatprep.subr.mxu0 0.0
      %4474 = vmatpush2.xpose.msra.mxu0 %v4379
      %4475 = vmatprep.subr.mxu0 0.0
      %4476 = vmatpush2.xpose.msra.mxu0 %v4376
      %4477 = vmatprep.subr.mxu0 0.0
      %4478 = vmatpush2.xpose.msra.mxu0 %v4373
      %4479 = vmatprep.subr.mxu0 0.0
      %4480 = vmatpush2.xpose.msra.mxu0 %v4370
      %4481 = vmatprep.mubr.f32.mxu0 0.0
      %4482 = vmatmul.mubr.f32.gmra.mxu0 %v4319
      %v4483 = vpop.f32.mrf.mxu0
      %v4484 = vadd.f32 0.0, %v4483
      %v4485 = vpop.f32.mrf.mxu0
      %v4486 = vadd.f32 0.0, %v4485
      %4487 = vdwg.mxu0
      %v4488 = vadd.f32 %v4282, %v4484
      %v4489 = vadd.f32 %v4283, %v4486
      %s4490 = scalar_lea.vmem [#allocation3], 48
      %v4491 = vld [vmem:[%s4490] sm:$0xff]
      %v4492 = vld [vmem:[%s4490 + $0x8] sm:$0xff]
      %v4493 = vld [vmem:[%s4490 + $0x18] sm:$0xff]
      %v4494 = vld [vmem:[%s4490 + $0x20] sm:$0xff]
      %v4495 = vld [vmem:[%s4490 + $0x30] sm:$0xff]
      %v4496 = vld [vmem:[%s4490 + $0x38] sm:$0xff]
      %v4497 = vld [vmem:[%s4490 + $0x48] sm:$0xff]
      %v4498 = vld [vmem:[%s4490 + $0x50] sm:$0xff]
      %v4499 = vld [vmem:[%s4490 + $0x60] sm:$0xff]
      %v4500 = vld [vmem:[%s4490 + $0x68] sm:$0xff]
      %v4501 = vld [vmem:[%s4490 + $0x78] sm:$0xff]
      %v4502 = vld [vmem:[%s4490 + $0x80] sm:$0xff]
      %v4503 = vld [vmem:[%s4490 + $0x90] sm:$0xff]
      %v4504 = vld [vmem:[%s4490 + $0x98] sm:$0xff]
      %v4505 = vld [vmem:[%s4490 + $0xa8] sm:$0xff]
      %v4506 = vld [vmem:[%s4490 + $0xb0] sm:$0xff]
      %v4507 = vld [vmem:[%s4490 + $0xc0] sm:$0xff]
      %v4508 = vld [vmem:[%s4490 + $0xc8] sm:$0xff]
      %v4509 = vld [vmem:[%s4490 + $0xd8] sm:$0xff]
      %v4510 = vld [vmem:[%s4490 + $0xe0] sm:$0xff]
      %v4511 = vld [vmem:[%s4490 + $0xf0] sm:$0xff]
      %v4512 = vld [vmem:[%s4490 + $0xf8] sm:$0xff]
      %v4513 = vld [vmem:[%s4490 + $0x108] sm:$0xff]
      %v4514 = vld [vmem:[%s4490 + $0x110] sm:$0xff]
      %v4515 = vld [vmem:[%s4490 + $0x120] sm:$0xff]
      %v4516 = vld [vmem:[%s4490 + $0x128] sm:$0xff]
      %v4517 = vld [vmem:[%s4490 + $0x138] sm:$0xff]
      %v4518 = vld [vmem:[%s4490 + $0x140] sm:$0xff]
      %v4519 = vld [vmem:[%s4490 + $0x150] sm:$0xff]
      %v4520 = vld [vmem:[%s4490 + $0x158] sm:$0xff]
      %v4521 = vld [vmem:[%s4490 + $0x168] sm:$0xff]
      %v4522 = vld [vmem:[%s4490 + $0x170] sm:$0xff]
      %s4523 = scalar_lea.vmem %s10, 48
      %v4524 = vld [vmem:[%s4523] sm:$0xff]
      %v4526 = vsel %vm555, %v4524, 0
      %v4529 = vsel %vm555, %v4491, 0
      %v4532 = vsel %vm555, %v4492, 0
      %v4535 = vsel %vm555, %v4493, 0
      %v4538 = vsel %vm555, %v4494, 0
      %v4541 = vsel %vm555, %v4495, 0
      %v4544 = vsel %vm555, %v4496, 0
      %v4547 = vsel %vm555, %v4497, 0
      %v4550 = vsel %vm555, %v4498, 0
      %v4553 = vsel %vm555, %v4499, 0
      %v4556 = vsel %vm555, %v4500, 0
      %v4559 = vsel %vm555, %v4501, 0
      %v4562 = vsel %vm555, %v4502, 0
      %v4565 = vsel %vm555, %v4503, 0
      %v4568 = vsel %vm555, %v4504, 0
      %v4571 = vsel %vm555, %v4505, 0
      %v4574 = vsel %vm555, %v4506, 0
      %v4577 = vsel %vm555, %v4507, 0
      %v4580 = vsel %vm555, %v4508, 0
      %v4583 = vsel %vm555, %v4509, 0
      %v4586 = vsel %vm555, %v4510, 0
      %v4589 = vsel %vm555, %v4511, 0
      %v4592 = vsel %vm555, %v4512, 0
      %v4595 = vsel %vm555, %v4513, 0
      %v4598 = vsel %vm555, %v4514, 0
      %v4601 = vsel %vm555, %v4515, 0
      %v4604 = vsel %vm555, %v4516, 0
      %v4607 = vsel %vm555, %v4517, 0
      %v4610 = vsel %vm555, %v4518, 0
      %v4613 = vsel %vm555, %v4519, 0
      %v4616 = vsel %vm555, %v4520, 0
      %v4619 = vsel %vm555, %v4521, 0
      %v4622 = vsel %vm555, %v4522, 0
      %4624 = vmatprep.subr.mxu0 0.0
      %4625 = vmatpush1.xpose.msra.mxu0 %v4574
      %4626 = vmatprep.subr.mxu0 0.0
      %4627 = vmatpush1.xpose.msra.mxu0 %v4571
      %4628 = vmatprep.subr.mxu0 0.0
      %4629 = vmatpush1.xpose.msra.mxu0 %v4568
      %4630 = vmatprep.subr.mxu0 0.0
      %4631 = vmatpush1.xpose.msra.mxu0 %v4565
      %4632 = vmatprep.subr.mxu0 0.0
      %4633 = vmatpush1.xpose.msra.mxu0 %v4562
      %4634 = vmatprep.subr.mxu0 0.0
      %4635 = vmatpush1.xpose.msra.mxu0 %v4559
      %4636 = vmatprep.subr.mxu0 0.0
      %4637 = vmatpush1.xpose.msra.mxu0 %v4556
      %4638 = vmatprep.subr.mxu0 0.0
      %4639 = vmatpush1.xpose.msra.mxu0 %v4553
      %4640 = vmatprep.subr.mxu0 0.0
      %4641 = vmatpush1.xpose.msra.mxu0 %v4550
      %4642 = vmatprep.subr.mxu0 0.0
      %4643 = vmatpush1.xpose.msra.mxu0 %v4547
      %4644 = vmatprep.subr.mxu0 0.0
      %4645 = vmatpush1.xpose.msra.mxu0 %v4544
      %4646 = vmatprep.subr.mxu0 0.0
      %4647 = vmatpush1.xpose.msra.mxu0 %v4541
      %4648 = vmatprep.subr.mxu0 0.0
      %4649 = vmatpush1.xpose.msra.mxu0 %v4538
      %4650 = vmatprep.subr.mxu0 0.0
      %4651 = vmatpush1.xpose.msra.mxu0 %v4535
      %4652 = vmatprep.subr.mxu0 0.0
      %4653 = vmatpush1.xpose.msra.mxu0 %v4532
      %4654 = vmatprep.subr.mxu0 0.0
      %4655 = vmatpush1.xpose.msra.mxu0 %v4529
      %4656 = vmatprep.subr.mxu0 0.0
      %4657 = vmatpush2.xpose.msra.mxu0 %v4622
      %4658 = vmatprep.subr.mxu0 0.0
      %4659 = vmatpush2.xpose.msra.mxu0 %v4619
      %4660 = vmatprep.subr.mxu0 0.0
      %4661 = vmatpush2.xpose.msra.mxu0 %v4616
      %4662 = vmatprep.subr.mxu0 0.0
      %4663 = vmatpush2.xpose.msra.mxu0 %v4613
      %4664 = vmatprep.subr.mxu0 0.0
      %4665 = vmatpush2.xpose.msra.mxu0 %v4610
      %4666 = vmatprep.subr.mxu0 0.0
      %4667 = vmatpush2.xpose.msra.mxu0 %v4607
      %4668 = vmatprep.subr.mxu0 0.0
      %4669 = vmatpush2.xpose.msra.mxu0 %v4604
      %4670 = vmatprep.subr.mxu0 0.0
      %4671 = vmatpush2.xpose.msra.mxu0 %v4601
      %4672 = vmatprep.subr.mxu0 0.0
      %4673 = vmatpush2.xpose.msra.mxu0 %v4598
      %4674 = vmatprep.subr.mxu0 0.0
      %4675 = vmatpush2.xpose.msra.mxu0 %v4595
      %4676 = vmatprep.subr.mxu0 0.0
      %4677 = vmatpush2.xpose.msra.mxu0 %v4592
      %4678 = vmatprep.subr.mxu0 0.0
      %4679 = vmatpush2.xpose.msra.mxu0 %v4589
      %4680 = vmatprep.subr.mxu0 0.0
      %4681 = vmatpush2.xpose.msra.mxu0 %v4586
      %4682 = vmatprep.subr.mxu0 0.0
      %4683 = vmatpush2.xpose.msra.mxu0 %v4583
      %4684 = vmatprep.subr.mxu0 0.0
      %4685 = vmatpush2.xpose.msra.mxu0 %v4580
      %4686 = vmatprep.subr.mxu0 0.0
      %4687 = vmatpush2.xpose.msra.mxu0 %v4577
      %4688 = vmatprep.mubr.f32.mxu0 0.0
      %4689 = vmatmul.mubr.f32.gmra.mxu0 %v4526
      %v4690 = vpop.f32.mrf.mxu0
      %v4691 = vadd.f32 0.0, %v4690
      %v4692 = vpop.f32.mrf.mxu0
      %v4693 = vadd.f32 0.0, %v4692
      %4694 = vdwg.mxu0
      %v4695 = vadd.f32 %v4488, %v4691
      %v4696 = vadd.f32 %v4489, %v4693
      %v4697 = vld [vmem:[%s4490 + $0x1] sm:$0xff]
      %v4698 = vld [vmem:[%s4490 + $0x9] sm:$0xff]
      %v4699 = vld [vmem:[%s4490 + $0x19] sm:$0xff]
      %v4700 = vld [vmem:[%s4490 + $0x21] sm:$0xff]
      %v4701 = vld [vmem:[%s4490 + $0x31] sm:$0xff]
      %v4702 = vld [vmem:[%s4490 + $0x39] sm:$0xff]
      %v4703 = vld [vmem:[%s4490 + $0x49] sm:$0xff]
      %v4704 = vld [vmem:[%s4490 + $0x51] sm:$0xff]
      %v4705 = vld [vmem:[%s4490 + $0x61] sm:$0xff]
      %v4706 = vld [vmem:[%s4490 + $0x69] sm:$0xff]
      %v4707 = vld [vmem:[%s4490 + $0x79] sm:$0xff]
      %v4708 = vld [vmem:[%s4490 + $0x81] sm:$0xff]
      %v4709 = vld [vmem:[%s4490 + $0x91] sm:$0xff]
      %v4710 = vld [vmem:[%s4490 + $0x99] sm:$0xff]
      %v4711 = vld [vmem:[%s4490 + $0xa9] sm:$0xff]
      %v4712 = vld [vmem:[%s4490 + $0xb1] sm:$0xff]
      %v4713 = vld [vmem:[%s4490 + $0xc1] sm:$0xff]
      %v4714 = vld [vmem:[%s4490 + $0xc9] sm:$0xff]
      %v4715 = vld [vmem:[%s4490 + $0xd9] sm:$0xff]
      %v4716 = vld [vmem:[%s4490 + $0xe1] sm:$0xff]
      %v4717 = vld [vmem:[%s4490 + $0xf1] sm:$0xff]
      %v4718 = vld [vmem:[%s4490 + $0xf9] sm:$0xff]
      %v4719 = vld [vmem:[%s4490 + $0x109] sm:$0xff]
      %v4720 = vld [vmem:[%s4490 + $0x111] sm:$0xff]
      %v4721 = vld [vmem:[%s4490 + $0x121] sm:$0xff]
      %v4722 = vld [vmem:[%s4490 + $0x129] sm:$0xff]
      %v4723 = vld [vmem:[%s4490 + $0x139] sm:$0xff]
      %v4724 = vld [vmem:[%s4490 + $0x141] sm:$0xff]
      %v4725 = vld [vmem:[%s4490 + $0x151] sm:$0xff]
      %v4726 = vld [vmem:[%s4490 + $0x159] sm:$0xff]
      %v4727 = vld [vmem:[%s4490 + $0x169] sm:$0xff]
      %v4728 = vld [vmem:[%s4490 + $0x171] sm:$0xff]
      %s4729 = scalar_lea.vmem %s10, 56
      %v4730 = vld [vmem:[%s4729] sm:$0xff]
      %v4732 = vsel %vm555, %v4730, 0
      %v4735 = vsel %vm555, %v4697, 0
      %v4738 = vsel %vm555, %v4698, 0
      %v4741 = vsel %vm555, %v4699, 0
      %v4744 = vsel %vm555, %v4700, 0
      %v4747 = vsel %vm555, %v4701, 0
      %v4750 = vsel %vm555, %v4702, 0
      %v4753 = vsel %vm555, %v4703, 0
      %v4756 = vsel %vm555, %v4704, 0
      %v4759 = vsel %vm555, %v4705, 0
      %v4762 = vsel %vm555, %v4706, 0
      %v4765 = vsel %vm555, %v4707, 0
      %v4768 = vsel %vm555, %v4708, 0
      %v4771 = vsel %vm555, %v4709, 0
      %v4774 = vsel %vm555, %v4710, 0
      %v4777 = vsel %vm555, %v4711, 0
      %v4780 = vsel %vm555, %v4712, 0
      %v4783 = vsel %vm555, %v4713, 0
      %v4786 = vsel %vm555, %v4714, 0
      %v4789 = vsel %vm555, %v4715, 0
      %v4792 = vsel %vm555, %v4716, 0
      %v4795 = vsel %vm555, %v4717, 0
      %v4798 = vsel %vm555, %v4718, 0
      %v4801 = vsel %vm555, %v4719, 0
      %v4804 = vsel %vm555, %v4720, 0
      %v4807 = vsel %vm555, %v4721, 0
      %v4810 = vsel %vm555, %v4722, 0
      %v4813 = vsel %vm555, %v4723, 0
      %v4816 = vsel %vm555, %v4724, 0
      %v4819 = vsel %vm555, %v4725, 0
      %v4822 = vsel %vm555, %v4726, 0
      %v4825 = vsel %vm555, %v4727, 0
      %v4828 = vsel %vm555, %v4728, 0
      %4830 = vmatprep.subr.mxu0 0.0
      %4831 = vmatpush1.xpose.msra.mxu0 %v4780
      %4832 = vmatprep.subr.mxu0 0.0
      %4833 = vmatpush1.xpose.msra.mxu0 %v4777
      %4834 = vmatprep.subr.mxu0 0.0
      %4835 = vmatpush1.xpose.msra.mxu0 %v4774
      %4836 = vmatprep.subr.mxu0 0.0
      %4837 = vmatpush1.xpose.msra.mxu0 %v4771
      %4838 = vmatprep.subr.mxu0 0.0
      %4839 = vmatpush1.xpose.msra.mxu0 %v4768
      %4840 = vmatprep.subr.mxu0 0.0
      %4841 = vmatpush1.xpose.msra.mxu0 %v4765
      %4842 = vmatprep.subr.mxu0 0.0
      %4843 = vmatpush1.xpose.msra.mxu0 %v4762
      %4844 = vmatprep.subr.mxu0 0.0
      %4845 = vmatpush1.xpose.msra.mxu0 %v4759
      %4846 = vmatprep.subr.mxu0 0.0
      %4847 = vmatpush1.xpose.msra.mxu0 %v4756
      %4848 = vmatprep.subr.mxu0 0.0
      %4849 = vmatpush1.xpose.msra.mxu0 %v4753
      %4850 = vmatprep.subr.mxu0 0.0
      %4851 = vmatpush1.xpose.msra.mxu0 %v4750
      %4852 = vmatprep.subr.mxu0 0.0
      %4853 = vmatpush1.xpose.msra.mxu0 %v4747
      %4854 = vmatprep.subr.mxu0 0.0
      %4855 = vmatpush1.xpose.msra.mxu0 %v4744
      %4856 = vmatprep.subr.mxu0 0.0
      %4857 = vmatpush1.xpose.msra.mxu0 %v4741
      %4858 = vmatprep.subr.mxu0 0.0
      %4859 = vmatpush1.xpose.msra.mxu0 %v4738
      %4860 = vmatprep.subr.mxu0 0.0
      %4861 = vmatpush1.xpose.msra.mxu0 %v4735
      %4862 = vmatprep.subr.mxu0 0.0
      %4863 = vmatpush2.xpose.msra.mxu0 %v4828
      %4864 = vmatprep.subr.mxu0 0.0
      %4865 = vmatpush2.xpose.msra.mxu0 %v4825
      %4866 = vmatprep.subr.mxu0 0.0
      %4867 = vmatpush2.xpose.msra.mxu0 %v4822
      %4868 = vmatprep.subr.mxu0 0.0
      %4869 = vmatpush2.xpose.msra.mxu0 %v4819
      %4870 = vmatprep.subr.mxu0 0.0
      %4871 = vmatpush2.xpose.msra.mxu0 %v4816
      %4872 = vmatprep.subr.mxu0 0.0
      %4873 = vmatpush2.xpose.msra.mxu0 %v4813
      %4874 = vmatprep.subr.mxu0 0.0
      %4875 = vmatpush2.xpose.msra.mxu0 %v4810
      %4876 = vmatprep.subr.mxu0 0.0
      %4877 = vmatpush2.xpose.msra.mxu0 %v4807
      %4878 = vmatprep.subr.mxu0 0.0
      %4879 = vmatpush2.xpose.msra.mxu0 %v4804
      %4880 = vmatprep.subr.mxu0 0.0
      %4881 = vmatpush2.xpose.msra.mxu0 %v4801
      %4882 = vmatprep.subr.mxu0 0.0
      %4883 = vmatpush2.xpose.msra.mxu0 %v4798
      %4884 = vmatprep.subr.mxu0 0.0
      %4885 = vmatpush2.xpose.msra.mxu0 %v4795
      %4886 = vmatprep.subr.mxu0 0.0
      %4887 = vmatpush2.xpose.msra.mxu0 %v4792
      %4888 = vmatprep.subr.mxu0 0.0
      %4889 = vmatpush2.xpose.msra.mxu0 %v4789
      %4890 = vmatprep.subr.mxu0 0.0
      %4891 = vmatpush2.xpose.msra.mxu0 %v4786
      %4892 = vmatprep.subr.mxu0 0.0
      %4893 = vmatpush2.xpose.msra.mxu0 %v4783
      %4894 = vmatprep.mubr.f32.mxu0 0.0
      %4895 = vmatmul.mubr.f32.gmra.mxu0 %v4732
      %v4896 = vpop.f32.mrf.mxu0
      %v4897 = vadd.f32 0.0, %v4896
      %v4898 = vpop.f32.mrf.mxu0
      %v4899 = vadd.f32 0.0, %v4898
      %4900 = vdwg.mxu0
      %v4901 = vadd.f32 %v4695, %v4897
      %v4902 = vadd.f32 %v4696, %v4899
      %v4903 = vld [vmem:[%s4490 + $0x2] sm:$0xff]
      %v4904 = vld [vmem:[%s4490 + $0xa] sm:$0xff]
      %v4905 = vld [vmem:[%s4490 + $0x1a] sm:$0xff]
      %v4906 = vld [vmem:[%s4490 + $0x22] sm:$0xff]
      %v4907 = vld [vmem:[%s4490 + $0x32] sm:$0xff]
      %v4908 = vld [vmem:[%s4490 + $0x3a] sm:$0xff]
      %v4909 = vld [vmem:[%s4490 + $0x4a] sm:$0xff]
      %v4910 = vld [vmem:[%s4490 + $0x52] sm:$0xff]
      %v4911 = vld [vmem:[%s4490 + $0x62] sm:$0xff]
      %v4912 = vld [vmem:[%s4490 + $0x6a] sm:$0xff]
      %v4913 = vld [vmem:[%s4490 + $0x7a] sm:$0xff]
      %v4914 = vld [vmem:[%s4490 + $0x82] sm:$0xff]
      %v4915 = vld [vmem:[%s4490 + $0x92] sm:$0xff]
      %v4916 = vld [vmem:[%s4490 + $0x9a] sm:$0xff]
      %v4917 = vld [vmem:[%s4490 + $0xaa] sm:$0xff]
      %v4918 = vld [vmem:[%s4490 + $0xb2] sm:$0xff]
      %v4919 = vld [vmem:[%s4490 + $0xc2] sm:$0xff]
      %v4920 = vld [vmem:[%s4490 + $0xca] sm:$0xff]
      %v4921 = vld [vmem:[%s4490 + $0xda] sm:$0xff]
      %v4922 = vld [vmem:[%s4490 + $0xe2] sm:$0xff]
      %v4923 = vld [vmem:[%s4490 + $0xf2] sm:$0xff]
      %v4924 = vld [vmem:[%s4490 + $0xfa] sm:$0xff]
      %v4925 = vld [vmem:[%s4490 + $0x10a] sm:$0xff]
      %v4926 = vld [vmem:[%s4490 + $0x112] sm:$0xff]
      %v4927 = vld [vmem:[%s4490 + $0x122] sm:$0xff]
      %v4928 = vld [vmem:[%s4490 + $0x12a] sm:$0xff]
      %v4929 = vld [vmem:[%s4490 + $0x13a] sm:$0xff]
      %v4930 = vld [vmem:[%s4490 + $0x142] sm:$0xff]
      %v4931 = vld [vmem:[%s4490 + $0x152] sm:$0xff]
      %v4932 = vld [vmem:[%s4490 + $0x15a] sm:$0xff]
      %v4933 = vld [vmem:[%s4490 + $0x16a] sm:$0xff]
      %v4934 = vld [vmem:[%s4490 + $0x172] sm:$0xff]
      %s4935 = scalar_lea.vmem %s10, 64
      %v4936 = vld [vmem:[%s4935] sm:$0xff]
      %v4938 = vsel %vm555, %v4936, 0
      %v4941 = vsel %vm555, %v4903, 0
      %v4944 = vsel %vm555, %v4904, 0
      %v4947 = vsel %vm555, %v4905, 0
      %v4950 = vsel %vm555, %v4906, 0
      %v4953 = vsel %vm555, %v4907, 0
      %v4956 = vsel %vm555, %v4908, 0
      %v4959 = vsel %vm555, %v4909, 0
      %v4962 = vsel %vm555, %v4910, 0
      %v4965 = vsel %vm555, %v4911, 0
      %v4968 = vsel %vm555, %v4912, 0
      %v4971 = vsel %vm555, %v4913, 0
      %v4974 = vsel %vm555, %v4914, 0
      %v4977 = vsel %vm555, %v4915, 0
      %v4980 = vsel %vm555, %v4916, 0
      %v4983 = vsel %vm555, %v4917, 0
      %v4986 = vsel %vm555, %v4918, 0
      %v4989 = vsel %vm555, %v4919, 0
      %v4992 = vsel %vm555, %v4920, 0
      %v4995 = vsel %vm555, %v4921, 0
      %v4998 = vsel %vm555, %v4922, 0
      %v5001 = vsel %vm555, %v4923, 0
      %v5004 = vsel %vm555, %v4924, 0
      %v5007 = vsel %vm555, %v4925, 0
      %v5010 = vsel %vm555, %v4926, 0
      %v5013 = vsel %vm555, %v4927, 0
      %v5016 = vsel %vm555, %v4928, 0
      %v5019 = vsel %vm555, %v4929, 0
      %v5022 = vsel %vm555, %v4930, 0
      %v5025 = vsel %vm555, %v4931, 0
      %v5028 = vsel %vm555, %v4932, 0
      %v5031 = vsel %vm555, %v4933, 0
      %v5034 = vsel %vm555, %v4934, 0
      %5036 = vmatprep.subr.mxu0 0.0
      %5037 = vmatpush1.xpose.msra.mxu0 %v4986
      %5038 = vmatprep.subr.mxu0 0.0
      %5039 = vmatpush1.xpose.msra.mxu0 %v4983
      %5040 = vmatprep.subr.mxu0 0.0
      %5041 = vmatpush1.xpose.msra.mxu0 %v4980
      %5042 = vmatprep.subr.mxu0 0.0
      %5043 = vmatpush1.xpose.msra.mxu0 %v4977
      %5044 = vmatprep.subr.mxu0 0.0
      %5045 = vmatpush1.xpose.msra.mxu0 %v4974
      %5046 = vmatprep.subr.mxu0 0.0
      %5047 = vmatpush1.xpose.msra.mxu0 %v4971
      %5048 = vmatprep.subr.mxu0 0.0
      %5049 = vmatpush1.xpose.msra.mxu0 %v4968
      %5050 = vmatprep.subr.mxu0 0.0
      %5051 = vmatpush1.xpose.msra.mxu0 %v4965
      %5052 = vmatprep.subr.mxu0 0.0
      %5053 = vmatpush1.xpose.msra.mxu0 %v4962
      %5054 = vmatprep.subr.mxu0 0.0
      %5055 = vmatpush1.xpose.msra.mxu0 %v4959
      %5056 = vmatprep.subr.mxu0 0.0
      %5057 = vmatpush1.xpose.msra.mxu0 %v4956
      %5058 = vmatprep.subr.mxu0 0.0
      %5059 = vmatpush1.xpose.msra.mxu0 %v4953
      %5060 = vmatprep.subr.mxu0 0.0
      %5061 = vmatpush1.xpose.msra.mxu0 %v4950
      %5062 = vmatprep.subr.mxu0 0.0
      %5063 = vmatpush1.xpose.msra.mxu0 %v4947
      %5064 = vmatprep.subr.mxu0 0.0
      %5065 = vmatpush1.xpose.msra.mxu0 %v4944
      %5066 = vmatprep.subr.mxu0 0.0
      %5067 = vmatpush1.xpose.msra.mxu0 %v4941
      %5068 = vmatprep.subr.mxu0 0.0
      %5069 = vmatpush2.xpose.msra.mxu0 %v5034
      %5070 = vmatprep.subr.mxu0 0.0
      %5071 = vmatpush2.xpose.msra.mxu0 %v5031
      %5072 = vmatprep.subr.mxu0 0.0
      %5073 = vmatpush2.xpose.msra.mxu0 %v5028
      %5074 = vmatprep.subr.mxu0 0.0
      %5075 = vmatpush2.xpose.msra.mxu0 %v5025
      %5076 = vmatprep.subr.mxu0 0.0
      %5077 = vmatpush2.xpose.msra.mxu0 %v5022
      %5078 = vmatprep.subr.mxu0 0.0
      %5079 = vmatpush2.xpose.msra.mxu0 %v5019
      %5080 = vmatprep.subr.mxu0 0.0
      %5081 = vmatpush2.xpose.msra.mxu0 %v5016
      %5082 = vmatprep.subr.mxu0 0.0
      %5083 = vmatpush2.xpose.msra.mxu0 %v5013
      %5084 = vmatprep.subr.mxu0 0.0
      %5085 = vmatpush2.xpose.msra.mxu0 %v5010
      %5086 = vmatprep.subr.mxu0 0.0
      %5087 = vmatpush2.xpose.msra.mxu0 %v5007
      %5088 = vmatprep.subr.mxu0 0.0
      %5089 = vmatpush2.xpose.msra.mxu0 %v5004
      %5090 = vmatprep.subr.mxu0 0.0
      %5091 = vmatpush2.xpose.msra.mxu0 %v5001
      %5092 = vmatprep.subr.mxu0 0.0
      %5093 = vmatpush2.xpose.msra.mxu0 %v4998
      %5094 = vmatprep.subr.mxu0 0.0
      %5095 = vmatpush2.xpose.msra.mxu0 %v4995
      %5096 = vmatprep.subr.mxu0 0.0
      %5097 = vmatpush2.xpose.msra.mxu0 %v4992
      %5098 = vmatprep.subr.mxu0 0.0
      %5099 = vmatpush2.xpose.msra.mxu0 %v4989
      %5100 = vmatprep.mubr.f32.mxu0 0.0
      %5101 = vmatmul.mubr.f32.gmra.mxu0 %v4938
      %v5102 = vpop.f32.mrf.mxu0
      %v5103 = vadd.f32 0.0, %v5102
      %v5104 = vpop.f32.mrf.mxu0
      %v5105 = vadd.f32 0.0, %v5104
      %5106 = vdwg.mxu0
      %v5107 = vadd.f32 %v4901, %v5103
      %v5108 = vadd.f32 %v4902, %v5105
      %v5109 = vld [vmem:[%s11] sm:$0xff]
      %5111 = vset.pattern.permute.xlu0 0
      %5112 = vperm.xlu0 %5111, %v5109
      %v5113 = vpop.permute.xlu0 %5112
      %v5115 = vmul.f32 %v5107, %v5113
      %v5116 = vmul.f32 %v5108, %v5113
      %v5117 = vld [vmem:[%s12] sm:$0xff]
      %5119 = vset.pattern.permute.xlu0 0
      %5120 = vperm.xlu0 %5119, %v5117
      %v5121 = vpop.permute.xlu0 %5120
      %v5123 = vadd.f32 %v5115, %v5121
      %v5124 = vadd.f32 %v5116, %v5121
      %v5125 = vmax.f32 %v5123, 0.0
      %v5126 = vmax.f32 %v5124, 0.0
      %5127 = vst [vmem:[%s521 + $0x20] sm:$0xff] %v5125
      %5128 = vst [vmem:[%s521 + $0x28] sm:$0xff] %v5126
      %5129 = vst.msk [vmem:[#allocation4] sm:$0xff] %vm555, -inf
      %5130 = vst.msk [vmem:[#allocation4 + $0x8] sm:$0xff] %vm555, -inf
      %5131 = vst.msk [vmem:[#allocation4 + $0x10] sm:$0x3] %vm1088, -inf
      %5132 = vst.msk [vmem:[#allocation4 + $0x18] sm:$0xff] %vm555, -inf
      %5133 = vst.msk [vmem:[#allocation4 + $0x20] sm:$0xff] %vm555, -inf
      %5134 = vst.msk [vmem:[#allocation4 + $0x28] sm:$0x3] %vm1088, -inf
      %5135 = vst.msk [vmem:[#allocation4 + $0x30] sm:$0xff] %vm555, -inf
      %5136 = vst.msk [vmem:[#allocation4 + $0x38] sm:$0xff] %vm555, -inf
      %5137 = vst.msk [vmem:[#allocation4 + $0x40] sm:$0x3] %vm1088, -inf
      %5138 = vst.msk [vmem:[#allocation4 + $0x48] sm:$0xff] %vm555, -inf
      %5139 = vst.msk [vmem:[#allocation4 + $0x50] sm:$0xff] %vm555, -inf
      %5140 = vst.msk [vmem:[#allocation4 + $0x58] sm:$0x3] %vm1088, -inf
      %5141 = vst.msk [vmem:[#allocation4 + $0x60] sm:$0xff] %vm555, -inf
      %5142 = vst.msk [vmem:[#allocation4 + $0x68] sm:$0xff] %vm555, -inf
      %5143 = vst.msk [vmem:[#allocation4 + $0x70] sm:$0x3] %vm1088, -inf
      %5144 = vst.msk [vmem:[#allocation4 + $0x78] sm:$0xff] %vm555, -inf
      %5145 = vst.msk [vmem:[#allocation4 + $0x80] sm:$0xff] %vm555, -inf
      %5146 = vst.msk [vmem:[#allocation4 + $0x88] sm:$0x3] %vm1088, -inf
      %5147 = vst.msk [vmem:[#allocation4 + $0x90] sm:$0xff] %vm555, -inf
      %5148 = vst.msk [vmem:[#allocation4 + $0x98] sm:$0xff] %vm555, -inf
      %5149 = vst.msk [vmem:[#allocation4 + $0xa0] sm:$0x3] %vm1088, -inf
      %5150 = vst.msk [vmem:[#allocation4 + $0xa8] sm:$0xff] %vm555, -inf
      %5151 = vst.msk [vmem:[#allocation4 + $0xb0] sm:$0xff] %vm555, -inf
      %5152 = vst.msk [vmem:[#allocation4 + $0xb8] sm:$0x3] %vm1088, -inf
      %5153 = vst.msk [vmem:[#allocation4 + $0xc0] sm:$0xff] %vm555, -inf
      %5154 = vst.msk [vmem:[#allocation4 + $0xc8] sm:$0xff] %vm555, -inf
      %5155 = vst.msk [vmem:[#allocation4 + $0xd0] sm:$0x3] %vm1088, -inf
      %5156 = vst.msk [vmem:[#allocation4 + $0xd8] sm:$0xff] %vm555, -inf
      %5157 = vst.msk [vmem:[#allocation4 + $0xe0] sm:$0xff] %vm555, -inf
      %5158 = vst.msk [vmem:[#allocation4 + $0xe8] sm:$0x3] %vm1088, -inf
      %5159 = vst.msk [vmem:[#allocation4 + $0xf0] sm:$0xff] %vm555, -inf
      %5160 = vst.msk [vmem:[#allocation4 + $0xf8] sm:$0xff] %vm555, -inf
      %5161 = vst.msk [vmem:[#allocation4 + $0x100] sm:$0x3] %vm1088, -inf
      %5162 = vst.msk [vmem:[#allocation4 + $0x108] sm:$0xff] %vm555, -inf
      %5163 = vst.msk [vmem:[#allocation4 + $0x110] sm:$0xff] %vm555, -inf
      %5164 = vst.msk [vmem:[#allocation4 + $0x118] sm:$0x3] %vm1088, -inf
      %5165 = vst.msk [vmem:[#allocation4 + $0x120] sm:$0xff] %vm555, -inf
      %5166 = vst.msk [vmem:[#allocation4 + $0x128] sm:$0xff] %vm555, -inf
      %5167 = vst.msk [vmem:[#allocation4 + $0x130] sm:$0x3] %vm1088, -inf
      %5168 = vst.msk [vmem:[#allocation4 + $0x138] sm:$0xff] %vm555, -inf
      %5169 = vst.msk [vmem:[#allocation4 + $0x140] sm:$0xff] %vm555, -inf
      %5170 = vst.msk [vmem:[#allocation4 + $0x148] sm:$0x3] %vm1088, -inf
      %5171 = vst.msk [vmem:[#allocation4 + $0x150] sm:$0xff] %vm555, -inf
      %5172 = vst.msk [vmem:[#allocation4 + $0x158] sm:$0xff] %vm555, -inf
      %5173 = vst.msk [vmem:[#allocation4 + $0x160] sm:$0x3] %vm1088, -inf
      %5174 = vst.msk [vmem:[#allocation4 + $0x168] sm:$0xff] %vm555, -inf
      %5175 = vst.msk [vmem:[#allocation4 + $0x170] sm:$0xff] %vm555, -inf
      %5176 = vst.msk [vmem:[#allocation4 + $0x178] sm:$0x3] %vm1088, -inf
      %5177 = vst.msk [vmem:[#allocation4 + $0x180] sm:$0xff] %vm555, -inf
      %5178 = vst.msk [vmem:[#allocation4 + $0x188] sm:$0xff] %vm555, -inf
      %5179 = vst.msk [vmem:[#allocation4 + $0x190] sm:$0x3] %vm1088, -inf
      %5180 = vst.msk [vmem:[#allocation4 + $0x198] sm:$0xff] %vm555, -inf
      %5181 = vst.msk [vmem:[#allocation4 + $0x1a0] sm:$0xff] %vm555, -inf
      %5182 = vst.msk [vmem:[#allocation4 + $0x1a8] sm:$0x3] %vm1088, -inf
      %s5183 = scalar_lea.vmem [#allocation4], 24
      %5184 = vst.msk [vmem:[%s5183 + $0x1] sm:$0xff] %vm555, %v522
      %5185 = vst.msk [vmem:[%s5183 + $0x9] sm:$0xff] %vm555, %v523
      %5186 = vst.msk [vmem:[%s5183 + $0x19] sm:$0xff] %vm555, %v524
      %5187 = vst.msk [vmem:[%s5183 + $0x21] sm:$0xff] %vm555, %v525
      %5188 = vst.msk [vmem:[%s5183 + $0x31] sm:$0xff] %vm555, %v526
      %5189 = vst.msk [vmem:[%s5183 + $0x39] sm:$0xff] %vm555, %v527
      %5190 = vst.msk [vmem:[%s5183 + $0x49] sm:$0xff] %vm555, %v528
      %5191 = vst.msk [vmem:[%s5183 + $0x51] sm:$0xff] %vm555, %v529
      %5192 = vst.msk [vmem:[%s5183 + $0x61] sm:$0xff] %vm555, %v530
      %5193 = vst.msk [vmem:[%s5183 + $0x69] sm:$0xff] %vm555, %v531
      %5194 = vst.msk [vmem:[%s5183 + $0x79] sm:$0xff] %vm555, %v532
      %5195 = vst.msk [vmem:[%s5183 + $0x81] sm:$0xff] %vm555, %v533
      %5196 = vst.msk [vmem:[%s5183 + $0x91] sm:$0xff] %vm555, %v534
      %5197 = vst.msk [vmem:[%s5183 + $0x99] sm:$0xff] %vm555, %v535
      %5198 = vst.msk [vmem:[%s5183 + $0xa9] sm:$0xff] %vm555, %v536
      %5199 = vst.msk [vmem:[%s5183 + $0xb1] sm:$0xff] %vm555, %v537
      %5200 = vst.msk [vmem:[%s5183 + $0xc1] sm:$0xff] %vm555, %v538
      %5201 = vst.msk [vmem:[%s5183 + $0xc9] sm:$0xff] %vm555, %v539
      %5202 = vst.msk [vmem:[%s5183 + $0xd9] sm:$0xff] %vm555, %v540
      %5203 = vst.msk [vmem:[%s5183 + $0xe1] sm:$0xff] %vm555, %v541
      %5204 = vst.msk [vmem:[%s5183 + $0xf1] sm:$0xff] %vm555, %v542
      %5205 = vst.msk [vmem:[%s5183 + $0xf9] sm:$0xff] %vm555, %v543
      %5206 = vst.msk [vmem:[%s5183 + $0x109] sm:$0xff] %vm555, %v544
      %5207 = vst.msk [vmem:[%s5183 + $0x111] sm:$0xff] %vm555, %v545
      %5208 = vst.msk [vmem:[%s5183 + $0x121] sm:$0xff] %vm555, %v546
      %5209 = vst.msk [vmem:[%s5183 + $0x129] sm:$0xff] %vm555, %v547
      %5210 = vst.msk [vmem:[%s5183 + $0x139] sm:$0xff] %vm555, %v548
      %5211 = vst.msk [vmem:[%s5183 + $0x141] sm:$0xff] %vm555, %v549
      %5212 = vst.msk [vmem:[%s5183 + $0x151] sm:$0xff] %vm555, %v550
      %5213 = vst.msk [vmem:[%s5183 + $0x159] sm:$0xff] %vm555, %v551
      %5214 = vst.msk [vmem:[%s5183 + $0x169] sm:$0xff] %vm555, %v552
      %5215 = vst.msk [vmem:[%s5183 + $0x171] sm:$0xff] %vm555, %v553
      %v5216 = vld [vmem:[#allocation4] sm:$0xff]
      %v5217 = vld [vmem:[#allocation4 + $0x8] sm:$0xff]
      %v5218 = vld [vmem:[#allocation4 + $0x18] sm:$0xff]
      %v5219 = vld [vmem:[#allocation4 + $0x20] sm:$0xff]
      %v5220 = vld [vmem:[#allocation4 + $0x30] sm:$0xff]
      %v5221 = vld [vmem:[#allocation4 + $0x38] sm:$0xff]
      %v5222 = vld [vmem:[#allocation4 + $0x48] sm:$0xff]
      %v5223 = vld [vmem:[#allocation4 + $0x50] sm:$0xff]
      %v5224 = vld [vmem:[#allocation4 + $0x60] sm:$0xff]
      %v5225 = vld [vmem:[#allocation4 + $0x68] sm:$0xff]
      %v5226 = vld [vmem:[#allocation4 + $0x78] sm:$0xff]
      %v5227 = vld [vmem:[#allocation4 + $0x80] sm:$0xff]
      %v5228 = vld [vmem:[#allocation4 + $0x90] sm:$0xff]
      %v5229 = vld [vmem:[#allocation4 + $0x98] sm:$0xff]
      %v5230 = vld [vmem:[#allocation4 + $0xa8] sm:$0xff]
      %v5231 = vld [vmem:[#allocation4 + $0xb0] sm:$0xff]
      %v5232 = vld [vmem:[#allocation4 + $0xc0] sm:$0xff]
      %v5233 = vld [vmem:[#allocation4 + $0xc8] sm:$0xff]
      %v5234 = vld [vmem:[#allocation4 + $0xd8] sm:$0xff]
      %v5235 = vld [vmem:[#allocation4 + $0xe0] sm:$0xff]
      %v5236 = vld [vmem:[#allocation4 + $0xf0] sm:$0xff]
      %v5237 = vld [vmem:[#allocation4 + $0xf8] sm:$0xff]
      %v5238 = vld [vmem:[#allocation4 + $0x108] sm:$0xff]
      %v5239 = vld [vmem:[#allocation4 + $0x110] sm:$0xff]
      %v5240 = vld [vmem:[#allocation4 + $0x120] sm:$0xff]
      %v5241 = vld [vmem:[#allocation4 + $0x128] sm:$0xff]
      %v5242 = vld [vmem:[#allocation4 + $0x138] sm:$0xff]
      %v5243 = vld [vmem:[#allocation4 + $0x140] sm:$0xff]
      %v5244 = vld [vmem:[#allocation4 + $0x150] sm:$0xff]
      %v5245 = vld [vmem:[#allocation4 + $0x158] sm:$0xff]
      %v5246 = vld [vmem:[#allocation4 + $0x168] sm:$0xff]
      %v5247 = vld [vmem:[#allocation4 + $0x170] sm:$0xff]
      %v5248 = vmax.f32 %v522, %v5216
      %v5249 = vmax.f32 %v523, %v5217
      %v5250 = vmax.f32 %v524, %v5218
      %v5251 = vmax.f32 %v525, %v5219
      %v5252 = vmax.f32 %v526, %v5220
      %v5253 = vmax.f32 %v527, %v5221
      %v5254 = vmax.f32 %v528, %v5222
      %v5255 = vmax.f32 %v529, %v5223
      %v5256 = vmax.f32 %v530, %v5224
      %v5257 = vmax.f32 %v531, %v5225
      %v5258 = vmax.f32 %v532, %v5226
      %v5259 = vmax.f32 %v533, %v5227
      %v5260 = vmax.f32 %v534, %v5228
      %v5261 = vmax.f32 %v535, %v5229
      %v5262 = vmax.f32 %v536, %v5230
      %v5263 = vmax.f32 %v537, %v5231
      %v5264 = vmax.f32 %v538, %v5232
      %v5265 = vmax.f32 %v539, %v5233
      %v5266 = vmax.f32 %v540, %v5234
      %v5267 = vmax.f32 %v541, %v5235
      %v5268 = vmax.f32 %v542, %v5236
      %v5269 = vmax.f32 %v543, %v5237
      %v5270 = vmax.f32 %v544, %v5238
      %v5271 = vmax.f32 %v545, %v5239
      %v5272 = vmax.f32 %v546, %v5240
      %v5273 = vmax.f32 %v547, %v5241
      %v5274 = vmax.f32 %v548, %v5242
      %v5275 = vmax.f32 %v549, %v5243
      %v5276 = vmax.f32 %v550, %v5244
      %v5277 = vmax.f32 %v551, %v5245
      %v5278 = vmax.f32 %v552, %v5246
      %v5279 = vmax.f32 %v553, %v5247
      %v5280 = vld [vmem:[#allocation4 + $0x1] sm:$0xff]
      %v5281 = vld [vmem:[#allocation4 + $0x9] sm:$0xff]
      %v5282 = vld [vmem:[#allocation4 + $0x19] sm:$0xff]
      %v5283 = vld [vmem:[#allocation4 + $0x21] sm:$0xff]
      %v5284 = vld [vmem:[#allocation4 + $0x31] sm:$0xff]
      %v5285 = vld [vmem:[#allocation4 + $0x39] sm:$0xff]
      %v5286 = vld [vmem:[#allocation4 + $0x49] sm:$0xff]
      %v5287 = vld [vmem:[#allocation4 + $0x51] sm:$0xff]
      %v5288 = vld [vmem:[#allocation4 + $0x61] sm:$0xff]
      %v5289 = vld [vmem:[#allocation4 + $0x69] sm:$0xff]
      %v5290 = vld [vmem:[#allocation4 + $0x79] sm:$0xff]
      %v5291 = vld [vmem:[#allocation4 + $0x81] sm:$0xff]
      %v5292 = vld [vmem:[#allocation4 + $0x91] sm:$0xff]
      %v5293 = vld [vmem:[#allocation4 + $0x99] sm:$0xff]
      %v5294 = vld [vmem:[#allocation4 + $0xa9] sm:$0xff]
      %v5295 = vld [vmem:[#allocation4 + $0xb1] sm:$0xff]
      %v5296 = vld [vmem:[#allocation4 + $0xc1] sm:$0xff]
      %v5297 = vld [vmem:[#allocation4 + $0xc9] sm:$0xff]
      %v5298 = vld [vmem:[#allocation4 + $0xd9] sm:$0xff]
      %v5299 = vld [vmem:[#allocation4 + $0xe1] sm:$0xff]
      %v5300 = vld [vmem:[#allocation4 + $0xf1] sm:$0xff]
      %v5301 = vld [vmem:[#allocation4 + $0xf9] sm:$0xff]
      %v5302 = vld [vmem:[#allocation4 + $0x109] sm:$0xff]
      %v5303 = vld [vmem:[#allocation4 + $0x111] sm:$0xff]
      %v5304 = vld [vmem:[#allocation4 + $0x121] sm:$0xff]
      %v5305 = vld [vmem:[#allocation4 + $0x129] sm:$0xff]
      %v5306 = vld [vmem:[#allocation4 + $0x139] sm:$0xff]
      %v5307 = vld [vmem:[#allocation4 + $0x141] sm:$0xff]
      %v5308 = vld [vmem:[#allocation4 + $0x151] sm:$0xff]
      %v5309 = vld [vmem:[#allocation4 + $0x159] sm:$0xff]
      %v5310 = vld [vmem:[#allocation4 + $0x169] sm:$0xff]
      %v5311 = vld [vmem:[#allocation4 + $0x171] sm:$0xff]
      %v5312 = vmax.f32 %v5248, %v5280
      %v5313 = vmax.f32 %v5249, %v5281
      %v5314 = vmax.f32 %v5250, %v5282
      %v5315 = vmax.f32 %v5251, %v5283
      %v5316 = vmax.f32 %v5252, %v5284
      %v5317 = vmax.f32 %v5253, %v5285
      %v5318 = vmax.f32 %v5254, %v5286
      %v5319 = vmax.f32 %v5255, %v5287
      %v5320 = vmax.f32 %v5256, %v5288
      %v5321 = vmax.f32 %v5257, %v5289
      %v5322 = vmax.f32 %v5258, %v5290
      %v5323 = vmax.f32 %v5259, %v5291
      %v5324 = vmax.f32 %v5260, %v5292
      %v5325 = vmax.f32 %v5261, %v5293
      %v5326 = vmax.f32 %v5262, %v5294
      %v5327 = vmax.f32 %v5263, %v5295
      %v5328 = vmax.f32 %v5264, %v5296
      %v5329 = vmax.f32 %v5265, %v5297
      %v5330 = vmax.f32 %v5266, %v5298
      %v5331 = vmax.f32 %v5267, %v5299
      %v5332 = vmax.f32 %v5268, %v5300
      %v5333 = vmax.f32 %v5269, %v5301
      %v5334 = vmax.f32 %v5270, %v5302
      %v5335 = vmax.f32 %v5271, %v5303
      %v5336 = vmax.f32 %v5272, %v5304
      %v5337 = vmax.f32 %v5273, %v5305
      %v5338 = vmax.f32 %v5274, %v5306
      %v5339 = vmax.f32 %v5275, %v5307
      %v5340 = vmax.f32 %v5276, %v5308
      %v5341 = vmax.f32 %v5277, %v5309
      %v5342 = vmax.f32 %v5278, %v5310
      %v5343 = vmax.f32 %v5279, %v5311
      %v5344 = vld [vmem:[#allocation4 + $0x2] sm:$0xff]
      %v5345 = vld [vmem:[#allocation4 + $0xa] sm:$0xff]
      %v5346 = vld [vmem:[#allocation4 + $0x1a] sm:$0xff]
      %v5347 = vld [vmem:[#allocation4 + $0x22] sm:$0xff]
      %v5348 = vld [vmem:[#allocation4 + $0x32] sm:$0xff]
      %v5349 = vld [vmem:[#allocation4 + $0x3a] sm:$0xff]
      %v5350 = vld [vmem:[#allocation4 + $0x4a] sm:$0xff]
      %v5351 = vld [vmem:[#allocation4 + $0x52] sm:$0xff]
      %v5352 = vld [vmem:[#allocation4 + $0x62] sm:$0xff]
      %v5353 = vld [vmem:[#allocation4 + $0x6a] sm:$0xff]
      %v5354 = vld [vmem:[#allocation4 + $0x7a] sm:$0xff]
      %v5355 = vld [vmem:[#allocation4 + $0x82] sm:$0xff]
      %v5356 = vld [vmem:[#allocation4 + $0x92] sm:$0xff]
      %v5357 = vld [vmem:[#allocation4 + $0x9a] sm:$0xff]
      %v5358 = vld [vmem:[#allocation4 + $0xaa] sm:$0xff]
      %v5359 = vld [vmem:[#allocation4 + $0xb2] sm:$0xff]
      %v5360 = vld [vmem:[#allocation4 + $0xc2] sm:$0xff]
      %v5361 = vld [vmem:[#allocation4 + $0xca] sm:$0xff]
      %v5362 = vld [vmem:[#allocation4 + $0xda] sm:$0xff]
      %v5363 = vld [vmem:[#allocation4 + $0xe2] sm:$0xff]
      %v5364 = vld [vmem:[#allocation4 + $0xf2] sm:$0xff]
      %v5365 = vld [vmem:[#allocation4 + $0xfa] sm:$0xff]
      %v5366 = vld [vmem:[#allocation4 + $0x10a] sm:$0xff]
      %v5367 = vld [vmem:[#allocation4 + $0x112] sm:$0xff]
      %v5368 = vld [vmem:[#allocation4 + $0x122] sm:$0xff]
      %v5369 = vld [vmem:[#allocation4 + $0x12a] sm:$0xff]
      %v5370 = vld [vmem:[#allocation4 + $0x13a] sm:$0xff]
      %v5371 = vld [vmem:[#allocation4 + $0x142] sm:$0xff]
      %v5372 = vld [vmem:[#allocation4 + $0x152] sm:$0xff]
      %v5373 = vld [vmem:[#allocation4 + $0x15a] sm:$0xff]
      %v5374 = vld [vmem:[#allocation4 + $0x16a] sm:$0xff]
      %v5375 = vld [vmem:[#allocation4 + $0x172] sm:$0xff]
      %v5376 = vmax.f32 %v5312, %v5344
      %v5377 = vmax.f32 %v5313, %v5345
      %v5378 = vmax.f32 %v5314, %v5346
      %v5379 = vmax.f32 %v5315, %v5347
      %v5380 = vmax.f32 %v5316, %v5348
      %v5381 = vmax.f32 %v5317, %v5349
      %v5382 = vmax.f32 %v5318, %v5350
      %v5383 = vmax.f32 %v5319, %v5351
      %v5384 = vmax.f32 %v5320, %v5352
      %v5385 = vmax.f32 %v5321, %v5353
      %v5386 = vmax.f32 %v5322, %v5354
      %v5387 = vmax.f32 %v5323, %v5355
      %v5388 = vmax.f32 %v5324, %v5356
      %v5389 = vmax.f32 %v5325, %v5357
      %v5390 = vmax.f32 %v5326, %v5358
      %v5391 = vmax.f32 %v5327, %v5359
      %v5392 = vmax.f32 %v5328, %v5360
      %v5393 = vmax.f32 %v5329, %v5361
      %v5394 = vmax.f32 %v5330, %v5362
      %v5395 = vmax.f32 %v5331, %v5363
      %v5396 = vmax.f32 %v5332, %v5364
      %v5397 = vmax.f32 %v5333, %v5365
      %v5398 = vmax.f32 %v5334, %v5366
      %v5399 = vmax.f32 %v5335, %v5367
      %v5400 = vmax.f32 %v5336, %v5368
      %v5401 = vmax.f32 %v5337, %v5369
      %v5402 = vmax.f32 %v5338, %v5370
      %v5403 = vmax.f32 %v5339, %v5371
      %v5404 = vmax.f32 %v5340, %v5372
      %v5405 = vmax.f32 %v5341, %v5373
      %v5406 = vmax.f32 %v5342, %v5374
      %v5407 = vmax.f32 %v5343, %v5375
      %v5408 = vld [vmem:[%s5183] sm:$0xff]
      %v5409 = vld [vmem:[%s5183 + $0x8] sm:$0xff]
      %v5410 = vld [vmem:[%s5183 + $0x18] sm:$0xff]
      %v5411 = vld [vmem:[%s5183 + $0x20] sm:$0xff]
      %v5412 = vld [vmem:[%s5183 + $0x30] sm:$0xff]
      %v5413 = vld [vmem:[%s5183 + $0x38] sm:$0xff]
      %v5414 = vld [vmem:[%s5183 + $0x48] sm:$0xff]
      %v5415 = vld [vmem:[%s5183 + $0x50] sm:$0xff]
      %v5416 = vld [vmem:[%s5183 + $0x60] sm:$0xff]
      %v5417 = vld [vmem:[%s5183 + $0x68] sm:$0xff]
      %v5418 = vld [vmem:[%s5183 + $0x78] sm:$0xff]
      %v5419 = vld [vmem:[%s5183 + $0x80] sm:$0xff]
      %v5420 = vld [vmem:[%s5183 + $0x90] sm:$0xff]
      %v5421 = vld [vmem:[%s5183 + $0x98] sm:$0xff]
      %v5422 = vld [vmem:[%s5183 + $0xa8] sm:$0xff]
      %v5423 = vld [vmem:[%s5183 + $0xb0] sm:$0xff]
      %v5424 = vld [vmem:[%s5183 + $0xc0] sm:$0xff]
      %v5425 = vld [vmem:[%s5183 + $0xc8] sm:$0xff]
      %v5426 = vld [vmem:[%s5183 + $0xd8] sm:$0xff]
      %v5427 = vld [vmem:[%s5183 + $0xe0] sm:$0xff]
      %v5428 = vld [vmem:[%s5183 + $0xf0] sm:$0xff]
      %v5429 = vld [vmem:[%s5183 + $0xf8] sm:$0xff]
      %v5430 = vld [vmem:[%s5183 + $0x108] sm:$0xff]
      %v5431 = vld [vmem:[%s5183 + $0x110] sm:$0xff]
      %v5432 = vld [vmem:[%s5183 + $0x120] sm:$0xff]
      %v5433 = vld [vmem:[%s5183 + $0x128] sm:$0xff]
      %v5434 = vld [vmem:[%s5183 + $0x138] sm:$0xff]
      %v5435 = vld [vmem:[%s5183 + $0x140] sm:$0xff]
      %v5436 = vld [vmem:[%s5183 + $0x150] sm:$0xff]
      %v5437 = vld [vmem:[%s5183 + $0x158] sm:$0xff]
      %v5438 = vld [vmem:[%s5183 + $0x168] sm:$0xff]
      %v5439 = vld [vmem:[%s5183 + $0x170] sm:$0xff]
      %v5440 = vmax.f32 %v5376, %v5408
      %v5441 = vmax.f32 %v5377, %v5409
      %v5442 = vmax.f32 %v5378, %v5410
      %v5443 = vmax.f32 %v5379, %v5411
      %v5444 = vmax.f32 %v5380, %v5412
      %v5445 = vmax.f32 %v5381, %v5413
      %v5446 = vmax.f32 %v5382, %v5414
      %v5447 = vmax.f32 %v5383, %v5415
      %v5448 = vmax.f32 %v5384, %v5416
      %v5449 = vmax.f32 %v5385, %v5417
      %v5450 = vmax.f32 %v5386, %v5418
      %v5451 = vmax.f32 %v5387, %v5419
      %v5452 = vmax.f32 %v5388, %v5420
      %v5453 = vmax.f32 %v5389, %v5421
      %v5454 = vmax.f32 %v5390, %v5422
      %v5455 = vmax.f32 %v5391, %v5423
      %v5456 = vmax.f32 %v5392, %v5424
      %v5457 = vmax.f32 %v5393, %v5425
      %v5458 = vmax.f32 %v5394, %v5426
      %v5459 = vmax.f32 %v5395, %v5427
      %v5460 = vmax.f32 %v5396, %v5428
      %v5461 = vmax.f32 %v5397, %v5429
      %v5462 = vmax.f32 %v5398, %v5430
      %v5463 = vmax.f32 %v5399, %v5431
      %v5464 = vmax.f32 %v5400, %v5432
      %v5465 = vmax.f32 %v5401, %v5433
      %v5466 = vmax.f32 %v5402, %v5434
      %v5467 = vmax.f32 %v5403, %v5435
      %v5468 = vmax.f32 %v5404, %v5436
      %v5469 = vmax.f32 %v5405, %v5437
      %v5470 = vmax.f32 %v5406, %v5438
      %v5471 = vmax.f32 %v5407, %v5439
      %v5472 = vld [vmem:[%s5183 + $0x2] sm:$0xff]
      %v5473 = vld [vmem:[%s5183 + $0xa] sm:$0xff]
      %v5474 = vld [vmem:[%s5183 + $0x1a] sm:$0xff]
      %v5475 = vld [vmem:[%s5183 + $0x22] sm:$0xff]
      %v5476 = vld [vmem:[%s5183 + $0x32] sm:$0xff]
      %v5477 = vld [vmem:[%s5183 + $0x3a] sm:$0xff]
      %v5478 = vld [vmem:[%s5183 + $0x4a] sm:$0xff]
      %v5479 = vld [vmem:[%s5183 + $0x52] sm:$0xff]
      %v5480 = vld [vmem:[%s5183 + $0x62] sm:$0xff]
      %v5481 = vld [vmem:[%s5183 + $0x6a] sm:$0xff]
      %v5482 = vld [vmem:[%s5183 + $0x7a] sm:$0xff]
      %v5483 = vld [vmem:[%s5183 + $0x82] sm:$0xff]
      %v5484 = vld [vmem:[%s5183 + $0x92] sm:$0xff]
      %v5485 = vld [vmem:[%s5183 + $0x9a] sm:$0xff]
      %v5486 = vld [vmem:[%s5183 + $0xaa] sm:$0xff]
      %v5487 = vld [vmem:[%s5183 + $0xb2] sm:$0xff]
      %v5488 = vld [vmem:[%s5183 + $0xc2] sm:$0xff]
      %v5489 = vld [vmem:[%s5183 + $0xca] sm:$0xff]
      %v5490 = vld [vmem:[%s5183 + $0xda] sm:$0xff]
      %v5491 = vld [vmem:[%s5183 + $0xe2] sm:$0xff]
      %v5492 = vld [vmem:[%s5183 + $0xf2] sm:$0xff]
      %v5493 = vld [vmem:[%s5183 + $0xfa] sm:$0xff]
      %v5494 = vld [vmem:[%s5183 + $0x10a] sm:$0xff]
      %v5495 = vld [vmem:[%s5183 + $0x112] sm:$0xff]
      %v5496 = vld [vmem:[%s5183 + $0x122] sm:$0xff]
      %v5497 = vld [vmem:[%s5183 + $0x12a] sm:$0xff]
      %v5498 = vld [vmem:[%s5183 + $0x13a] sm:$0xff]
      %v5499 = vld [vmem:[%s5183 + $0x142] sm:$0xff]
      %v5500 = vld [vmem:[%s5183 + $0x152] sm:$0xff]
      %v5501 = vld [vmem:[%s5183 + $0x15a] sm:$0xff]
      %v5502 = vld [vmem:[%s5183 + $0x16a] sm:$0xff]
      %v5503 = vld [vmem:[%s5183 + $0x172] sm:$0xff]
      %v5504 = vmax.f32 %v5440, %v5472
      %v5505 = vmax.f32 %v5441, %v5473
      %v5506 = vmax.f32 %v5442, %v5474
      %v5507 = vmax.f32 %v5443, %v5475
      %v5508 = vmax.f32 %v5444, %v5476
      %v5509 = vmax.f32 %v5445, %v5477
      %v5510 = vmax.f32 %v5446, %v5478
      %v5511 = vmax.f32 %v5447, %v5479
      %v5512 = vmax.f32 %v5448, %v5480
      %v5513 = vmax.f32 %v5449, %v5481
      %v5514 = vmax.f32 %v5450, %v5482
      %v5515 = vmax.f32 %v5451, %v5483
      %v5516 = vmax.f32 %v5452, %v5484
      %v5517 = vmax.f32 %v5453, %v5485
      %v5518 = vmax.f32 %v5454, %v5486
      %v5519 = vmax.f32 %v5455, %v5487
      %v5520 = vmax.f32 %v5456, %v5488
      %v5521 = vmax.f32 %v5457, %v5489
      %v5522 = vmax.f32 %v5458, %v5490
      %v5523 = vmax.f32 %v5459, %v5491
      %v5524 = vmax.f32 %v5460, %v5492
      %v5525 = vmax.f32 %v5461, %v5493
      %v5526 = vmax.f32 %v5462, %v5494
      %v5527 = vmax.f32 %v5463, %v5495
      %v5528 = vmax.f32 %v5464, %v5496
      %v5529 = vmax.f32 %v5465, %v5497
      %v5530 = vmax.f32 %v5466, %v5498
      %v5531 = vmax.f32 %v5467, %v5499
      %v5532 = vmax.f32 %v5468, %v5500
      %v5533 = vmax.f32 %v5469, %v5501
      %v5534 = vmax.f32 %v5470, %v5502
      %v5535 = vmax.f32 %v5471, %v5503
      %s5536 = scalar_lea.vmem [#allocation4], 48
      %v5537 = vld [vmem:[%s5536] sm:$0xff]
      %v5538 = vld [vmem:[%s5536 + $0x8] sm:$0xff]
      %v5539 = vld [vmem:[%s5536 + $0x18] sm:$0xff]
      %v5540 = vld [vmem:[%s5536 + $0x20] sm:$0xff]
      %v5541 = vld [vmem:[%s5536 + $0x30] sm:$0xff]
      %v5542 = vld [vmem:[%s5536 + $0x38] sm:$0xff]
      %v5543 = vld [vmem:[%s5536 + $0x48] sm:$0xff]
      %v5544 = vld [vmem:[%s5536 + $0x50] sm:$0xff]
      %v5545 = vld [vmem:[%s5536 + $0x60] sm:$0xff]
      %v5546 = vld [vmem:[%s5536 + $0x68] sm:$0xff]
      %v5547 = vld [vmem:[%s5536 + $0x78] sm:$0xff]
      %v5548 = vld [vmem:[%s5536 + $0x80] sm:$0xff]
      %v5549 = vld [vmem:[%s5536 + $0x90] sm:$0xff]
      %v5550 = vld [vmem:[%s5536 + $0x98] sm:$0xff]
      %v5551 = vld [vmem:[%s5536 + $0xa8] sm:$0xff]
      %v5552 = vld [vmem:[%s5536 + $0xb0] sm:$0xff]
      %v5553 = vld [vmem:[%s5536 + $0xc0] sm:$0xff]
      %v5554 = vld [vmem:[%s5536 + $0xc8] sm:$0xff]
      %v5555 = vld [vmem:[%s5536 + $0xd8] sm:$0xff]
      %v5556 = vld [vmem:[%s5536 + $0xe0] sm:$0xff]
      %v5557 = vld [vmem:[%s5536 + $0xf0] sm:$0xff]
      %v5558 = vld [vmem:[%s5536 + $0xf8] sm:$0xff]
      %v5559 = vld [vmem:[%s5536 + $0x108] sm:$0xff]
      %v5560 = vld [vmem:[%s5536 + $0x110] sm:$0xff]
      %v5561 = vld [vmem:[%s5536 + $0x120] sm:$0xff]
      %v5562 = vld [vmem:[%s5536 + $0x128] sm:$0xff]
      %v5563 = vld [vmem:[%s5536 + $0x138] sm:$0xff]
      %v5564 = vld [vmem:[%s5536 + $0x140] sm:$0xff]
      %v5565 = vld [vmem:[%s5536 + $0x150] sm:$0xff]
      %v5566 = vld [vmem:[%s5536 + $0x158] sm:$0xff]
      %v5567 = vld [vmem:[%s5536 + $0x168] sm:$0xff]
      %v5568 = vld [vmem:[%s5536 + $0x170] sm:$0xff]
      %v5569 = vmax.f32 %v5504, %v5537
      %v5570 = vmax.f32 %v5505, %v5538
      %v5571 = vmax.f32 %v5506, %v5539
      %v5572 = vmax.f32 %v5507, %v5540
      %v5573 = vmax.f32 %v5508, %v5541
      %v5574 = vmax.f32 %v5509, %v5542
      %v5575 = vmax.f32 %v5510, %v5543
      %v5576 = vmax.f32 %v5511, %v5544
      %v5577 = vmax.f32 %v5512, %v5545
      %v5578 = vmax.f32 %v5513, %v5546
      %v5579 = vmax.f32 %v5514, %v5547
      %v5580 = vmax.f32 %v5515, %v5548
      %v5581 = vmax.f32 %v5516, %v5549
      %v5582 = vmax.f32 %v5517, %v5550
      %v5583 = vmax.f32 %v5518, %v5551
      %v5584 = vmax.f32 %v5519, %v5552
      %v5585 = vmax.f32 %v5520, %v5553
      %v5586 = vmax.f32 %v5521, %v5554
      %v5587 = vmax.f32 %v5522, %v5555
      %v5588 = vmax.f32 %v5523, %v5556
      %v5589 = vmax.f32 %v5524, %v5557
      %v5590 = vmax.f32 %v5525, %v5558
      %v5591 = vmax.f32 %v5526, %v5559
      %v5592 = vmax.f32 %v5527, %v5560
      %v5593 = vmax.f32 %v5528, %v5561
      %v5594 = vmax.f32 %v5529, %v5562
      %v5595 = vmax.f32 %v5530, %v5563
      %v5596 = vmax.f32 %v5531, %v5564
      %v5597 = vmax.f32 %v5532, %v5565
      %v5598 = vmax.f32 %v5533, %v5566
      %v5599 = vmax.f32 %v5534, %v5567
      %v5600 = vmax.f32 %v5535, %v5568
      %v5601 = vld [vmem:[%s5536 + $0x1] sm:$0xff]
      %v5602 = vld [vmem:[%s5536 + $0x9] sm:$0xff]
      %v5603 = vld [vmem:[%s5536 + $0x19] sm:$0xff]
      %v5604 = vld [vmem:[%s5536 + $0x21] sm:$0xff]
      %v5605 = vld [vmem:[%s5536 + $0x31] sm:$0xff]
      %v5606 = vld [vmem:[%s5536 + $0x39] sm:$0xff]
      %v5607 = vld [vmem:[%s5536 + $0x49] sm:$0xff]
      %v5608 = vld [vmem:[%s5536 + $0x51] sm:$0xff]
      %v5609 = vld [vmem:[%s5536 + $0x61] sm:$0xff]
      %v5610 = vld [vmem:[%s5536 + $0x69] sm:$0xff]
      %v5611 = vld [vmem:[%s5536 + $0x79] sm:$0xff]
      %v5612 = vld [vmem:[%s5536 + $0x81] sm:$0xff]
      %v5613 = vld [vmem:[%s5536 + $0x91] sm:$0xff]
      %v5614 = vld [vmem:[%s5536 + $0x99] sm:$0xff]
      %v5615 = vld [vmem:[%s5536 + $0xa9] sm:$0xff]
      %v5616 = vld [vmem:[%s5536 + $0xb1] sm:$0xff]
      %v5617 = vld [vmem:[%s5536 + $0xc1] sm:$0xff]
      %v5618 = vld [vmem:[%s5536 + $0xc9] sm:$0xff]
      %v5619 = vld [vmem:[%s5536 + $0xd9] sm:$0xff]
      %v5620 = vld [vmem:[%s5536 + $0xe1] sm:$0xff]
      %v5621 = vld [vmem:[%s5536 + $0xf1] sm:$0xff]
      %v5622 = vld [vmem:[%s5536 + $0xf9] sm:$0xff]
      %v5623 = vld [vmem:[%s5536 + $0x109] sm:$0xff]
      %v5624 = vld [vmem:[%s5536 + $0x111] sm:$0xff]
      %v5625 = vld [vmem:[%s5536 + $0x121] sm:$0xff]
      %v5626 = vld [vmem:[%s5536 + $0x129] sm:$0xff]
      %v5627 = vld [vmem:[%s5536 + $0x139] sm:$0xff]
      %v5628 = vld [vmem:[%s5536 + $0x141] sm:$0xff]
      %v5629 = vld [vmem:[%s5536 + $0x151] sm:$0xff]
      %v5630 = vld [vmem:[%s5536 + $0x159] sm:$0xff]
      %v5631 = vld [vmem:[%s5536 + $0x169] sm:$0xff]
      %v5632 = vld [vmem:[%s5536 + $0x171] sm:$0xff]
      %v5633 = vmax.f32 %v5569, %v5601
      %v5634 = vmax.f32 %v5570, %v5602
      %v5635 = vmax.f32 %v5571, %v5603
      %v5636 = vmax.f32 %v5572, %v5604
      %v5637 = vmax.f32 %v5573, %v5605
      %v5638 = vmax.f32 %v5574, %v5606
      %v5639 = vmax.f32 %v5575, %v5607
      %v5640 = vmax.f32 %v5576, %v5608
      %v5641 = vmax.f32 %v5577, %v5609
      %v5642 = vmax.f32 %v5578, %v5610
      %v5643 = vmax.f32 %v5579, %v5611
      %v5644 = vmax.f32 %v5580, %v5612
      %v5645 = vmax.f32 %v5581, %v5613
      %v5646 = vmax.f32 %v5582, %v5614
      %v5647 = vmax.f32 %v5583, %v5615
      %v5648 = vmax.f32 %v5584, %v5616
      %v5649 = vmax.f32 %v5585, %v5617
      %v5650 = vmax.f32 %v5586, %v5618
      %v5651 = vmax.f32 %v5587, %v5619
      %v5652 = vmax.f32 %v5588, %v5620
      %v5653 = vmax.f32 %v5589, %v5621
      %v5654 = vmax.f32 %v5590, %v5622
      %v5655 = vmax.f32 %v5591, %v5623
      %v5656 = vmax.f32 %v5592, %v5624
      %v5657 = vmax.f32 %v5593, %v5625
      %v5658 = vmax.f32 %v5594, %v5626
      %v5659 = vmax.f32 %v5595, %v5627
      %v5660 = vmax.f32 %v5596, %v5628
      %v5661 = vmax.f32 %v5597, %v5629
      %v5662 = vmax.f32 %v5598, %v5630
      %v5663 = vmax.f32 %v5599, %v5631
      %v5664 = vmax.f32 %v5600, %v5632
      %v5665 = vld [vmem:[%s5536 + $0x2] sm:$0xff]
      %v5666 = vld [vmem:[%s5536 + $0xa] sm:$0xff]
      %v5667 = vld [vmem:[%s5536 + $0x1a] sm:$0xff]
      %v5668 = vld [vmem:[%s5536 + $0x22] sm:$0xff]
      %v5669 = vld [vmem:[%s5536 + $0x32] sm:$0xff]
      %v5670 = vld [vmem:[%s5536 + $0x3a] sm:$0xff]
      %v5671 = vld [vmem:[%s5536 + $0x4a] sm:$0xff]
      %v5672 = vld [vmem:[%s5536 + $0x52] sm:$0xff]
      %v5673 = vld [vmem:[%s5536 + $0x62] sm:$0xff]
      %v5674 = vld [vmem:[%s5536 + $0x6a] sm:$0xff]
      %v5675 = vld [vmem:[%s5536 + $0x7a] sm:$0xff]
      %v5676 = vld [vmem:[%s5536 + $0x82] sm:$0xff]
      %v5677 = vld [vmem:[%s5536 + $0x92] sm:$0xff]
      %v5678 = vld [vmem:[%s5536 + $0x9a] sm:$0xff]
      %v5679 = vld [vmem:[%s5536 + $0xaa] sm:$0xff]
      %v5680 = vld [vmem:[%s5536 + $0xb2] sm:$0xff]
      %v5681 = vld [vmem:[%s5536 + $0xc2] sm:$0xff]
      %v5682 = vld [vmem:[%s5536 + $0xca] sm:$0xff]
      %v5683 = vld [vmem:[%s5536 + $0xda] sm:$0xff]
      %v5684 = vld [vmem:[%s5536 + $0xe2] sm:$0xff]
      %v5685 = vld [vmem:[%s5536 + $0xf2] sm:$0xff]
      %v5686 = vld [vmem:[%s5536 + $0xfa] sm:$0xff]
      %v5687 = vld [vmem:[%s5536 + $0x10a] sm:$0xff]
      %v5688 = vld [vmem:[%s5536 + $0x112] sm:$0xff]
      %v5689 = vld [vmem:[%s5536 + $0x122] sm:$0xff]
      %v5690 = vld [vmem:[%s5536 + $0x12a] sm:$0xff]
      %v5691 = vld [vmem:[%s5536 + $0x13a] sm:$0xff]
      %v5692 = vld [vmem:[%s5536 + $0x142] sm:$0xff]
      %v5693 = vld [vmem:[%s5536 + $0x152] sm:$0xff]
      %v5694 = vld [vmem:[%s5536 + $0x15a] sm:$0xff]
      %v5695 = vld [vmem:[%s5536 + $0x16a] sm:$0xff]
      %v5696 = vld [vmem:[%s5536 + $0x172] sm:$0xff]
      %v5697 = vmax.f32 %v5633, %v5665
      %v5698 = vmax.f32 %v5634, %v5666
      %v5699 = vmax.f32 %v5635, %v5667
      %v5700 = vmax.f32 %v5636, %v5668
      %v5701 = vmax.f32 %v5637, %v5669
      %v5702 = vmax.f32 %v5638, %v5670
      %v5703 = vmax.f32 %v5639, %v5671
      %v5704 = vmax.f32 %v5640, %v5672
      %v5705 = vmax.f32 %v5641, %v5673
      %v5706 = vmax.f32 %v5642, %v5674
      %v5707 = vmax.f32 %v5643, %v5675
      %v5708 = vmax.f32 %v5644, %v5676
      %v5709 = vmax.f32 %v5645, %v5677
      %v5710 = vmax.f32 %v5646, %v5678
      %v5711 = vmax.f32 %v5647, %v5679
      %v5712 = vmax.f32 %v5648, %v5680
      %v5713 = vmax.f32 %v5649, %v5681
      %v5714 = vmax.f32 %v5650, %v5682
      %v5715 = vmax.f32 %v5651, %v5683
      %v5716 = vmax.f32 %v5652, %v5684
      %v5717 = vmax.f32 %v5653, %v5685
      %v5718 = vmax.f32 %v5654, %v5686
      %v5719 = vmax.f32 %v5655, %v5687
      %v5720 = vmax.f32 %v5656, %v5688
      %v5721 = vmax.f32 %v5657, %v5689
      %v5722 = vmax.f32 %v5658, %v5690
      %v5723 = vmax.f32 %v5659, %v5691
      %v5724 = vmax.f32 %v5660, %v5692
      %v5725 = vmax.f32 %v5661, %v5693
      %v5726 = vmax.f32 %v5662, %v5694
      %v5727 = vmax.f32 %v5663, %v5695
      %v5728 = vmax.f32 %v5664, %v5696
      %v5729 = vld [vmem:[%s13] sm:$0xff]
      %v5731 = vsel %vm555, %v5729, 0
      %v5734 = vsel %vm555, %v5697, 0
      %v5737 = vsel %vm555, %v5698, 0
      %v5740 = vsel %vm555, %v5699, 0
      %v5743 = vsel %vm555, %v5700, 0
      %v5746 = vsel %vm555, %v5701, 0
      %v5749 = vsel %vm555, %v5702, 0
      %v5752 = vsel %vm555, %v5703, 0
      %v5755 = vsel %vm555, %v5704, 0
      %v5758 = vsel %vm555, %v5705, 0
      %v5761 = vsel %vm555, %v5706, 0
      %v5764 = vsel %vm555, %v5707, 0
      %v5767 = vsel %vm555, %v5708, 0
      %v5770 = vsel %vm555, %v5709, 0
      %v5773 = vsel %vm555, %v5710, 0
      %v5776 = vsel %vm555, %v5711, 0
      %v5779 = vsel %vm555, %v5712, 0
      %v5782 = vsel %vm555, %v5713, 0
      %v5785 = vsel %vm555, %v5714, 0
      %v5788 = vsel %vm555, %v5715, 0
      %v5791 = vsel %vm555, %v5716, 0
      %v5794 = vsel %vm555, %v5717, 0
      %v5797 = vsel %vm555, %v5718, 0
      %v5800 = vsel %vm555, %v5719, 0
      %v5803 = vsel %vm555, %v5720, 0
      %v5806 = vsel %vm555, %v5721, 0
      %v5809 = vsel %vm555, %v5722, 0
      %v5812 = vsel %vm555, %v5723, 0
      %v5815 = vsel %vm555, %v5724, 0
      %v5818 = vsel %vm555, %v5725, 0
      %v5821 = vsel %vm555, %v5726, 0
      %v5824 = vsel %vm555, %v5727, 0
      %v5827 = vsel %vm555, %v5728, 0
      %5829 = vmatprep.subr.mxu0 0.0
      %5830 = vmatpush1.xpose.msra.mxu0 %v5779
      %5831 = vmatprep.subr.mxu0 0.0
      %5832 = vmatpush1.xpose.msra.mxu0 %v5776
      %5833 = vmatprep.subr.mxu0 0.0
      %5834 = vmatpush1.xpose.msra.mxu0 %v5773
      %5835 = vmatprep.subr.mxu0 0.0
      %5836 = vmatpush1.xpose.msra.mxu0 %v5770
      %5837 = vmatprep.subr.mxu0 0.0
      %5838 = vmatpush1.xpose.msra.mxu0 %v5767
      %5839 = vmatprep.subr.mxu0 0.0
      %5840 = vmatpush1.xpose.msra.mxu0 %v5764
      %5841 = vmatprep.subr.mxu0 0.0
      %5842 = vmatpush1.xpose.msra.mxu0 %v5761
      %5843 = vmatprep.subr.mxu0 0.0
      %5844 = vmatpush1.xpose.msra.mxu0 %v5758
      %5845 = vmatprep.subr.mxu0 0.0
      %5846 = vmatpush1.xpose.msra.mxu0 %v5755
      %5847 = vmatprep.subr.mxu0 0.0
      %5848 = vmatpush1.xpose.msra.mxu0 %v5752
      %5849 = vmatprep.subr.mxu0 0.0
      %5850 = vmatpush1.xpose.msra.mxu0 %v5749
      %5851 = vmatprep.subr.mxu0 0.0
      %5852 = vmatpush1.xpose.msra.mxu0 %v5746
      %5853 = vmatprep.subr.mxu0 0.0
      %5854 = vmatpush1.xpose.msra.mxu0 %v5743
      %5855 = vmatprep.subr.mxu0 0.0
      %5856 = vmatpush1.xpose.msra.mxu0 %v5740
      %5857 = vmatprep.subr.mxu0 0.0
      %5858 = vmatpush1.xpose.msra.mxu0 %v5737
      %5859 = vmatprep.subr.mxu0 0.0
      %5860 = vmatpush1.xpose.msra.mxu0 %v5734
      %5861 = vmatprep.subr.mxu0 0.0
      %5862 = vmatpush2.xpose.msra.mxu0 %v5827
      %5863 = vmatprep.subr.mxu0 0.0
      %5864 = vmatpush2.xpose.msra.mxu0 %v5824
      %5865 = vmatprep.subr.mxu0 0.0
      %5866 = vmatpush2.xpose.msra.mxu0 %v5821
      %5867 = vmatprep.subr.mxu0 0.0
      %5868 = vmatpush2.xpose.msra.mxu0 %v5818
      %5869 = vmatprep.subr.mxu0 0.0
      %5870 = vmatpush2.xpose.msra.mxu0 %v5815
      %5871 = vmatprep.subr.mxu0 0.0
      %5872 = vmatpush2.xpose.msra.mxu0 %v5812
      %5873 = vmatprep.subr.mxu0 0.0
      %5874 = vmatpush2.xpose.msra.mxu0 %v5809
      %5875 = vmatprep.subr.mxu0 0.0
      %5876 = vmatpush2.xpose.msra.mxu0 %v5806
      %5877 = vmatprep.subr.mxu0 0.0
      %5878 = vmatpush2.xpose.msra.mxu0 %v5803
      %5879 = vmatprep.subr.mxu0 0.0
      %5880 = vmatpush2.xpose.msra.mxu0 %v5800
      %5881 = vmatprep.subr.mxu0 0.0
      %5882 = vmatpush2.xpose.msra.mxu0 %v5797
      %5883 = vmatprep.subr.mxu0 0.0
      %5884 = vmatpush2.xpose.msra.mxu0 %v5794
      %5885 = vmatprep.subr.mxu0 0.0
      %5886 = vmatpush2.xpose.msra.mxu0 %v5791
      %5887 = vmatprep.subr.mxu0 0.0
      %5888 = vmatpush2.xpose.msra.mxu0 %v5788
      %5889 = vmatprep.subr.mxu0 0.0
      %5890 = vmatpush2.xpose.msra.mxu0 %v5785
      %5891 = vmatprep.subr.mxu0 0.0
      %5892 = vmatpush2.xpose.msra.mxu0 %v5782
      %5893 = vmatprep.mubr.f32.mxu0 0.0
      %5894 = vmatmul.mubr.f32.gmra.mxu0 %v5731
      %v5895 = vpop.f32.mrf.mxu0
      %v5896 = vadd.f32 0.0, %v5895
      %v5897 = vpop.f32.mrf.mxu0
      %v5898 = vadd.f32 0.0, %v5897
      %5899 = vdwg.mxu0
      %v5900 = vld [vmem:[%s14] sm:$0xff]
      %5902 = vset.pattern.permute.xlu0 0
      %5903 = vperm.xlu0 %5902, %v5900
      %v5904 = vpop.permute.xlu0 %5903
      %v5906 = vmul.f32 %v5896, %v5904
      %v5907 = vmul.f32 %v5898, %v5904
      %v5908 = vld [vmem:[%s15] sm:$0xff]
      %5910 = vset.pattern.permute.xlu0 0
      %5911 = vperm.xlu0 %5910, %v5908
      %v5912 = vpop.permute.xlu0 %5911
      %v5914 = vadd.f32 %v5906, %v5912
      %v5915 = vadd.f32 %v5907, %v5912
      %v5916 = vmax.f32 %v5914, 0.0
      %v5917 = vmax.f32 %v5915, 0.0
      %5918 = vst [vmem:[%s521 + $0x30] sm:$0xff] %v5916
      %5919 = vst [vmem:[%s521 + $0x38] sm:$0xff] %v5917
      %p5920 = scmp.lt.s32.totalorder %s27, 1
      %s5921 = scalar_select %p5920, %s27, 1
      %s5922 = smul.addr %s5921, 8
      %s5923 = smul.addr %s5922, 8
      %s5924 = scalar_lea.vmem %s16, %s5923
      // Predicated region
      $region85: #{inception1_forward.1} parent=83 // pred_check
        %p5925 = pneg %p386
      $region86: #{inception1_forward.1} parent=83 // pred_check_branch
        %5927 = sbr.rel (%p5925) target = $region88
      $region87: #{inception1_forward.1} parent=83 // pred_region
        _
      $region88: #{inception1_forward.1} parent=83 // pred_fallthru
        _
    $region84: #{inception1_forward.1} parent=5 // pred_fallthru
      _
    %p5928 = scmp.le.s32.totalorder 2, %s22
    // Predicated region
    $region89: #{inception1_forward.1} parent=5 // pred_check
      %p5929 = pneg %p5928
    $region90: #{inception1_forward.1} parent=5 // pred_check_branch
      %5931 = sbr.rel (%p5929) target = $region92
    $region91: #{inception1_forward.1} parent=5 // pred_region
      %s5932 = ssub.s32 %s22, 2
      // Predicated region
      $region93: #{inception1_forward.1} parent=91 // pred_check
        %p5933 = pneg %p392
      $region94: #{inception1_forward.1} parent=91 // pred_check_branch
        %5935 = sbr.rel (%p5933) target = $region96
      $region95: #{inception1_forward.1} parent=91 // pred_region
        %p5936 = scmp.lt.s32.totalorder %s28, 1
        %s5937 = scalar_select %p5936, %s28, 1
        %s5938 = smul.addr %s5937, 8
        %s5939 = smul.addr %s5938, 8
        %s5940 = scalar_lea.vmem %s16, %s5939
      $region96: #{inception1_forward.1} parent=91 // pred_fallthru
        _
    $region92: #{inception1_forward.1} parent=5 // pred_fallthru
      _
  $region6: #{inception1_forward.1} parent=0 // loop_footer
    %s26 = sadd.s32 1, %s22
  $region7: #{inception1_forward.1} parent=0 // loop_footer_branch
    %21 = sbr.rel target = $region3
  $region8: #{inception1_forward.1} parent=0 // loop_exit
    _

</llo_original>
